<compile_context>
chip_gen: v5e
topology: v5e:2x2
jax: 0.10.0
libtpu: 0.0.40
codegen_flags: <defaults>
</compile_context>

<pallas_src>
import functools

import jax
import jax.numpy as jnp
from jax import lax
from jax.experimental import pallas as pl
from jax.experimental.pallas import tpu as pltpu


# ----------------------------------------------------------------------------
# Fused kernel: hop 0 = MLP, hops 1..K = propagation, accumulation in VMEM.
# ----------------------------------------------------------------------------
def _dagnn_kernel(x_ref, w1_ref, w2_ref, s_ref, adj_ref, out_ref, zbuf_ref,
                  *adj_scratch, tm, n_rows, adj_resident):
    k = pl.program_id(0)            # hop: 0 = MLP (z0), 1..K = propagation
    i = pl.program_id(1)            # output row block
    row = pl.multiple_of(i * tm, tm)

    if adj_resident:
        adj_vmem, adj_sem = adj_scratch

        # One-time DMA of the whole bf16 adjacency HBM -> VMEM (single
        # buffered), overlapped with the hop-0 MLP sweep over the row blocks.
        @pl.when((k == 0) & (i == 0))
        def _start_adj_dma():
            pltpu.make_async_copy(adj_ref, adj_vmem, adj_sem).start()

        @pl.when((k == 1) & (i == 0))
        def _wait_adj_dma():
            pltpu.make_async_copy(adj_ref, adj_vmem, adj_sem).wait()

    def _epilogue(z_new, *, first_hop):
        # Retain score: VPU multiply + lane reduction (not a [., C] @ [C, 1]
        # MXU matmul).
        score = jax.nn.sigmoid(jnp.sum(z_new * s_ref[...], axis=-1, keepdims=True))
        term = score * z_new
        if first_hop:
            out_ref[pl.ds(row, tm), :] = term
        else:
            out_ref[pl.ds(row, tm), :] = out_ref[pl.ds(row, tm), :] + term
        dst = pl.multiple_of(lax.rem(k, 2) * n_rows + row, tm)
        zbuf_ref[pl.ds(dst, tm), :] = z_new.astype(zbuf_ref.dtype)

    @pl.when(k == 0)
    def _mlp_hop():
        # bf16 x bf16 matmuls with f32 accumulation (single-pass MXU).
        h = jnp.maximum(jnp.dot(x_ref[...], w1_ref[...],
                                preferred_element_type=jnp.float32), 0.0)
        z0 = jnp.maximum(jnp.dot(h.astype(jnp.bfloat16), w2_ref[...],
                                 preferred_element_type=jnp.float32), 0.0)
        _epilogue(z0, first_hop=True)

    @pl.when(k > 0)
    def _prop_hop():
        src = pl.multiple_of((1 - lax.rem(k, 2)) * n_rows, tm)
        z_prev = zbuf_ref[pl.ds(src, n_rows), :]            # [N, C] bf16, resident
        if adj_resident:
            adj_rows = adj_scratch[0][pl.ds(row, tm), :]    # slice resident adjacency
        else:
            adj_rows = adj_ref[...]                         # streamed full-width panel
        z_new = jnp.dot(adj_rows, z_prev, preferred_element_type=jnp.float32)
        _epilogue(z_new, first_hop=False)


# ----------------------------------------------------------------------------
# Wrapper
# ----------------------------------------------------------------------------
def _vmem_capacity_bytes():
    try:
        return int(pltpu.get_tpu_info().vmem_capacity_bytes)
    except Exception:
        return 64 * 1024 * 1024     # conservative fallback (v7x per-core VMEM)


def _largest_row_tile(n, limit):
    for cand in (2048, 1024, 512, 256, 128, 64, 32, 16, 8):
        if cand <= limit and cand <= n and n % cand == 0:
            return cand
    return n


def dagnn_forward(x, adj, w1, w2, s, *, K=10, block_rows=None, adj_resident=None):
    """DAGNN forward. x:[N,F], adj:[N,N] dense normalized adjacency, weights [in,out]."""
    N, F_in = x.shape
    hid = w1.shape[1]
    C = w2.shape[1]
    assert adj.shape == (N, N)
    orig_dtype = x.dtype

    # bf16 operands (f32 MXU accumulation): halves HBM/VMEM traffic of the
    # dominant adjacency operand and shrinks the resident weight footprint.
    x_bf = x.astype(jnp.bfloat16)
    w1_bf = w1.astype(jnp.bfloat16)
    w2_bf = w2.astype(jnp.bfloat16)
    s_row = jnp.reshape(s, (1, C)).astype(jnp.float32)
    adj_bf = adj.astype(jnp.bfloat16)

    vmem_cap = _vmem_capacity_bytes()
    # Residency budget: more aggressive on 128 MiB parts (v5e/v6e), a bit more
    # conservative on 64 MiB parts (v7x).
    budget = int(0.78 * vmem_cap) if vmem_cap >= (96 << 20) else int(0.70 * vmem_cap)

    # Small resident footprint (independent of adjacency handling):
    # z ping-pong (bf16) + out accumulator (f32, const-index, 2 pipeline bufs)
    # + weights / s (const-index, 2 bufs) + slack.
    base_bytes = (2 * N * C * 2 + 2 * N * C * 4
                  + 2 * (F_in * hid + hid * C) * 2 + 2 * C * 4
                  + (2 << 20))

    tm_res = block_rows if block_rows is not None else _largest_row_tile(N, 512)
    resident_bytes = N * N * 2 + base_bytes + 2 * tm_res * F_in * 2
    if adj_resident is None:
        adj_resident = resident_bytes <= budget
    adj_resident = bool(adj_resident) and K >= 1

    if adj_resident:
        tm = tm_res
    elif block_rows is not None:
        tm = block_rows
    else:
        # Streamed path: full-width contiguous row panels (tk = N), double
        # buffered by the BlockSpec pipeline.  Size tm so two panels fit.
        panel_budget = max(budget - base_bytes, 4 << 20)
        tm = _largest_row_tile(N, max(panel_budget // (4 * N), 8))

    assert N % tm == 0, "row tile must divide N (TODO(synk): pad ragged N)"
    assert tm % 8 == 0 or tm == N, "row tile must be a multiple of 8"
    nb = N // tm

    if adj_resident:
        # Raw HBM ref + one-time manual DMA into a single-buffered VMEM scratch.
        adj_spec = pl.BlockSpec(memory_space=pl.ANY)
        adj_scratch = [pltpu.VMEM((N, N), jnp.bfloat16),
                       pltpu.SemaphoreType.DMA(())]
        adj_bytes = N * N * 2
    else:
        # Full-width row panels; at hop 0 the panel index is pinned to block 0
        # so the adjacency is only streamed during hops 1..K.
        adj_spec = pl.BlockSpec((tm, N), lambda k, i: (i * jnp.minimum(k, 1), 0))
        adj_scratch = []
        adj_bytes = 2 * tm * N * 2

    est = adj_bytes + base_bytes + 2 * tm * F_in * 2
    # Leave ~10% headroom below physical VMEM for compiler-internal scratch.
    vmem_limit = int(min(max(int(1.2 * est), 32 << 20), int(0.9 * vmem_cap)))

    kernel = functools.partial(_dagnn_kernel, tm=tm, n_rows=N,
                               adj_resident=adj_resident)

    out = pl.pallas_call(
        kernel,
        out_shape=jax.ShapeDtypeStruct((N, C), jnp.float32),
        grid_spec=pltpu.PrefetchScalarGridSpec(
            num_scalar_prefetch=0,
            # (hop, row block).  Hop k+1 consumes every row of z_k, so neither
            # axis may be split across TensorCores within this call -> both
            # "arbitrary".  (TODO(synk): v7x second-core split, see header.)
            grid=(K + 1, nb),
            in_specs=[
                # x row blocks are only needed at hop 0; afterwards the index
                # is pinned so no re-DMA happens.
                pl.BlockSpec((tm, F_in), lambda k, i: (i * (1 - jnp.minimum(k, 1)), 0)),
                pl.BlockSpec((F_in, hid), lambda k, i: (0, 0)),   # resident, DMA'd once
                pl.BlockSpec((hid, C), lambda k, i: (0, 0)),
                pl.BlockSpec((1, C), lambda k, i: (0, 0)),
                adj_spec,
            ],
            out_specs=pl.BlockSpec((N, C), lambda k, i: (0, 0)),  # resident accumulator
            scratch_shapes=[pltpu.VMEM((2 * N, C), jnp.bfloat16)] + adj_scratch,
        ),
        compiler_params=pltpu.CompilerParams(
            dimension_semantics=("arbitrary", "arbitrary"),
            vmem_limit_bytes=vmem_limit,
        ),
    )(x_bf, w1_bf, w2_bf, s_row, adj_bf)
    return out.astype(orig_dtype)


# ----------------------------------------------------------------------------
# Pure-JAX references
# ----------------------------------------------------------------------------
def dagnn_reference(x, adj, w1, w2, s, *, K=10):
    """Full-f32 reference matching the PyTorch module in eval mode."""
    h = jnp.maximum(x @ w1, 0.0)
    z = jnp.maximum(h @ w2, 0.0)
    acc = jax.nn.sigmoid(z @ s) * z
    for _ in range(K):
        z = adj @ z
        acc = acc + jax.nn.sigmoid(z @ s) * z
    return acc


def dagnn_reference_mixed(x, adj, w1, w2, s, *, K=10):
    """Reference mimicking the kernel's mixed precision (bf16 operands, f32 accumulation)."""
    s_row = jnp.reshape(s, (1, -1)).astype(jnp.float32)
    x_bf = x.astype(jnp.bfloat16)
    w1_bf = w1.astype(jnp.bfloat16)
    w2_bf = w2.astype(jnp.bfloat16)
    adj_bf = adj.astype(jnp.bfloat16)
    h = jnp.maximum(jnp.dot(x_bf, w1_bf, preferred_element_type=jnp.float32), 0.0)
    z = jnp.maximum(jnp.dot(h.astype(jnp.bfloat16), w2_bf,
                            preferred_element_type=jnp.float32), 0.0)
    acc = jax.nn.sigmoid(jnp.sum(z * s_row, axis=-1, keepdims=True)) * z
    zb = z.astype(jnp.bfloat16)
    for _ in range(K):
        zf = jnp.dot(adj_bf, zb, preferred_element_type=jnp.float32)
        acc = acc + jax.nn.sigmoid(jnp.sum(zf * s_row, axis=-1, keepdims=True)) * zf
        zb = zf.astype(jnp.bfloat16)
    return acc


if __name__ == "__main__":
    # Small shapes consistent with the module: in_features=32, hids=[64],
    # out_features=16, K=10, bias=False.  N=256 exercises both tiled paths.
    N, F_IN, HID, F_OUT, K = 256, 32, 64, 16, 10

    key = jax.random.PRNGKey(0)
    k_x, k_a, k_w1, k_w2, k_s = jax.random.split(key, 5)

    x = jax.random.normal(k_x, (N, F_IN), dtype=jnp.float32)

    # Symmetrically-normalized dense adjacency with self loops (typical DAGNN input).
    a = (jax.random.uniform(k_a, (N, N)) < 0.05).astype(jnp.float32)
    a = jnp.maximum(a, a.T) + jnp.eye(N, dtype=jnp.float32)
    deg = jnp.sum(a, axis=1)
    d_inv_sqrt = 1.0 / jnp.sqrt(deg)
    adj = a * d_inv_sqrt[:, None] * d_inv_sqrt[None, :]

    # Deterministic parameter init (weights stored as [in, out], bias=False).
    w1 = jax.random.normal(k_w1, (F_IN, HID), dtype=jnp.float32) * (1.0 / jnp.sqrt(F_IN))
    w2 = jax.random.normal(k_w2, (HID, F_OUT), dtype=jnp.float32) * (1.0 / jnp.sqrt(HID))
    s = jax.random.normal(k_s, (F_OUT, 1), dtype=jnp.float32) * (1.0 / jnp.sqrt(F_OUT))

    ref_mixed = dagnn_reference_mixed(x, adj, w1, w2, s, K=K)
    ref_f32 = dagnn_reference(x, adj, w1, w2, s, K=K)

    # (a) auto: resident adjacency (single manual DMA), single row block.
    out_auto = jax.block_until_ready(dagnn_forward(x, adj, w1, w2, s, K=K))
    # (b) resident adjacency with multiple row blocks (in-kernel pl.ds slicing).
    out_res_tiled = jax.block_until_ready(
        dagnn_forward(x, adj, w1, w2, s, K=K, block_rows=64, adj_resident=True))
    # (c) forced streamed path: full-width row panels through the BlockSpec pipeline.
    out_streamed = jax.block_until_ready(
        dagnn_forward(x, adj, w1, w2, s, K=K, block_rows=128, adj_resident=False))

    for out in (out_auto, out_res_tiled, out_streamed):
        assert out.shape == (N, F_OUT)
        assert jnp.allclose(out, ref_mixed, atol=1e-2, rtol=1e-2), \
            "mismatch vs. mixed-precision reference"
        assert jnp.allclose(out, ref_f32, atol=1e-1, rtol=1e-1), \
            "gross mismatch vs. f32 reference"

    print("KERNEL_OK")
</pallas_src>

<mosaic_0001>
module attributes {stable_mosaic.version = 11 : i64} {
  func.func @_dagnn_kernel(%arg0: i32, %arg1: i32, %arg2: memref<256x32xbf16, #tpu.memory_space<vmem>>, %arg3: memref<32x64xbf16, #tpu.memory_space<vmem>>, %arg4: memref<64x16xbf16, #tpu.memory_space<vmem>>, %arg5: memref<1x16xf32, #tpu.memory_space<vmem>>, %arg6: memref<256x256xbf16, #tpu.memory_space<any>>, %arg7: memref<256x16xf32, #tpu.memory_space<vmem>>, %arg8: memref<512x16xbf16, #tpu.memory_space<vmem>>, %arg9: memref<256x256xbf16, #tpu.memory_space<vmem>>, %arg10: memref<!tpu.dma_semaphore, #tpu.memory_space<semaphore_mem>>) attributes {dimension_semantics = [#tpu.dimension_semantics<arbitrary>, #tpu.dimension_semantics<arbitrary>], iteration_bounds = array<i64: 11, 1>, scalar_prefetch = 0 : i64, scratch_operands = 3 : i64, tpu.core_type = #tpu.core_type<tc>, window_params = [{transform_indices = @transform_0, window_bounds = array<i64: 256, 32>}, {pipeline_mode = #tpu.pipeline_mode<synchronous>, transform_indices = @transform_1, window_bounds = array<i64: 32, 64>}, {pipeline_mode = #tpu.pipeline_mode<synchronous>, transform_indices = @transform_2, window_bounds = array<i64: 64, 16>}, {pipeline_mode = #tpu.pipeline_mode<synchronous>, transform_indices = @transform_3, window_bounds = array<i64: 1, 16>}, {}, {pipeline_mode = #tpu.pipeline_mode<synchronous>, transform_indices = @transform_5, window_bounds = array<i64: 256, 16>}]} {
    %c256_i32 = arith.constant 256 : i32
    %0 = arith.muli %arg1, %c256_i32 : i32
    %1 = tpu.assume_multiple %0, 256 : i32
    %c0_i32 = arith.constant 0 : i32
    %2 = arith.cmpi eq, %arg0, %c0_i32 : i32
    %c0_i32_0 = arith.constant 0 : i32
    %3 = arith.cmpi eq, %arg1, %c0_i32_0 : i32
    %4 = arith.andi %2, %3 : i1
    %5 = arith.extui %4 : i1 to i32
    %c0_i32_1 = arith.constant 0 : i32
    %6 = arith.cmpi ne, %5, %c0_i32_1 : i32
    scf.if %6 {
      tpu.enqueue_dma source(%arg6 : memref<256x256xbf16, #tpu.memory_space<any>>) target(%arg9 : memref<256x256xbf16, #tpu.memory_space<vmem>>) target_semaphore(%arg10 : memref<!tpu.dma_semaphore, #tpu.memory_space<semaphore_mem>>)
    } else {
    }
    %c1_i32 = arith.constant 1 : i32
    %7 = arith.cmpi eq, %arg0, %c1_i32 : i32
    %c0_i32_2 = arith.constant 0 : i32
    %8 = arith.cmpi eq, %arg1, %c0_i32_2 : i32
    %9 = arith.andi %7, %8 : i1
    %10 = arith.extui %9 : i1 to i32
    %c0_i32_3 = arith.constant 0 : i32
    %11 = arith.cmpi ne, %10, %c0_i32_3 : i32
    scf.if %11 {
      tpu.wait_dma2 semaphore(%arg10 : memref<!tpu.dma_semaphore, #tpu.memory_space<semaphore_mem>>) src(%arg6 : memref<256x256xbf16, #tpu.memory_space<any>>) dst(%arg9 : memref<256x256xbf16, #tpu.memory_space<vmem>>)
    } else {
    }
    %c0_i32_4 = arith.constant 0 : i32
    %12 = arith.cmpi eq, %arg0, %c0_i32_4 : i32
    %13 = arith.extui %12 : i1 to i32
    %c0_i32_5 = arith.constant 0 : i32
    %14 = arith.cmpi ne, %13, %c0_i32_5 : i32
    scf.if %14 {
      %c0 = arith.constant 0 : index
      %c0_8 = arith.constant 0 : index
      %18 = vector.load %arg2[%c0, %c0_8] : memref<256x32xbf16, #tpu.memory_space<vmem>>, vector<256x32xbf16>
      %c0_9 = arith.constant 0 : index
      %c0_10 = arith.constant 0 : index
      %19 = vector.load %arg3[%c0_9, %c0_10] : memref<32x64xbf16, #tpu.memory_space<vmem>>, vector<32x64xbf16>
      %cst = arith.constant dense<0.000000e+00> : vector<256x64xf32>
      %20 = tpu.matmul %18, %19, %cst {dimension_numbers = #tpu.dot_dimension_numbers<[1], [0], [0], [1], [0, 0, 1, 1], [], []>} : vector<256x32xbf16>, vector<32x64xbf16>, vector<256x64xf32> -> vector<256x64xf32>
      %cst_11 = arith.constant 0.000000e+00 : f32
      %21 = vector.broadcast %cst_11 : f32 to vector<256x64xf32>
      %22 = arith.maximumf %20, %21 : vector<256x64xf32>
      %23 = arith.truncf %22 : vector<256x64xf32> to vector<256x64xbf16>
      %c0_12 = arith.constant 0 : index
      %c0_13 = arith.constant 0 : index
      %24 = vector.load %arg4[%c0_12, %c0_13] : memref<64x16xbf16, #tpu.memory_space<vmem>>, vector<64x16xbf16>
      %cst_14 = arith.constant dense<0.000000e+00> : vector<256x16xf32>
      %25 = tpu.matmul %23, %24, %cst_14 {dimension_numbers = #tpu.dot_dimension_numbers<[1], [0], [0], [1], [0, 0, 1, 1], [], []>} : vector<256x64xbf16>, vector<64x16xbf16>, vector<256x16xf32> -> vector<256x16xf32>
      %cst_15 = arith.constant 0.000000e+00 : f32
      %26 = vector.broadcast %cst_15 : f32 to vector<256x16xf32>
      %27 = arith.maximumf %25, %26 : vector<256x16xf32>
      %c0_16 = arith.constant 0 : index
      %c0_17 = arith.constant 0 : index
      %28 = vector.load %arg5[%c0_16, %c0_17] : memref<1x16xf32, #tpu.memory_space<vmem>>, vector<1x16xf32>
      %29 = vector.broadcast %28 : vector<1x16xf32> to vector<256x16xf32>
      %30 = arith.mulf %27, %29 : vector<256x16xf32>
      %cst_18 = arith.constant dense<0.000000e+00> : vector<256xf32>
      %31 = vector.multi_reduction <add>, %30, %cst_18 [1] : vector<256x16xf32> to vector<256xf32>
      %32 = vector.shape_cast %31 : vector<256xf32> to vector<256x1xf32>
      %33 = arith.negf %32 : vector<256x1xf32>
      %34 = math.exp %33 : vector<256x1xf32>
      %cst_19 = arith.constant 1.000000e+00 : f32
      %35 = vector.broadcast %cst_19 : f32 to vector<256x1xf32>
      %36 = arith.addf %35, %34 : vector<256x1xf32>
      %37 = arith.divf %35, %36 : vector<256x1xf32>
      %38 = vector.broadcast %37 : vector<256x1xf32> to vector<256x16xf32>
      %39 = arith.mulf %38, %27 : vector<256x16xf32>
      %40 = arith.index_cast %1 : i32 to index
      %c0_20 = arith.constant 0 : index
      %41 = vector.load %arg7[%40, %c0_20] : memref<256x16xf32, #tpu.memory_space<vmem>>, vector<256x16xf32>
      tpu.vector_store %arg7[%40, %c0_20], %39 {strides = array<i32>} : memref<256x16xf32, #tpu.memory_space<vmem>>, vector<256x16xf32>,
      %c2_i32 = arith.constant 2 : i32
      %42 = arith.remsi %arg0, %c2_i32 : i32
      %c256_i32_21 = arith.constant 256 : i32
      %43 = arith.muli %42, %c256_i32_21 : i32
      %44 = arith.addi %43, %1 : i32
      %45 = tpu.assume_multiple %44, 256 : i32
      %46 = arith.truncf %27 : vector<256x16xf32> to vector<256x16xbf16>
      %47 = arith.index_cast %45 : i32 to index
      %c0_22 = arith.constant 0 : index
      %48 = vector.load %arg8[%47, %c0_22] : memref<512x16xbf16, #tpu.memory_space<vmem>>, vector<256x16xbf16>
      tpu.vector_store %arg8[%47, %c0_22], %46 {strides = array<i32>} : memref<512x16xbf16, #tpu.memory_space<vmem>>, vector<256x16xbf16>,
    } else {
    }
    %c0_i32_6 = arith.constant 0 : i32
    %15 = arith.cmpi sgt, %arg0, %c0_i32_6 : i32
    %16 = arith.extui %15 : i1 to i32
    %c0_i32_7 = arith.constant 0 : i32
    %17 = arith.cmpi ne, %16, %c0_i32_7 : i32
    scf.if %17 {
      %c2_i32 = arith.constant 2 : i32
      %18 = arith.remsi %arg0, %c2_i32 : i32
      %c1_i32_8 = arith.constant 1 : i32
      %19 = arith.subi %c1_i32_8, %18 : i32
      %c256_i32_9 = arith.constant 256 : i32
      %20 = arith.muli %19, %c256_i32_9 : i32
      %21 = tpu.assume_multiple %20, 256 : i32
      %22 = arith.index_cast %21 : i32 to index
      %c0 = arith.constant 0 : index
      %23 = vector.load %arg8[%22, %c0] : memref<512x16xbf16, #tpu.memory_space<vmem>>, vector<256x16xbf16>
      %24 = arith.index_cast %1 : i32 to index
      %c0_10 = arith.constant 0 : index
      %25 = vector.load %arg9[%24, %c0_10] : memref<256x256xbf16, #tpu.memory_space<vmem>>, vector<256x256xbf16>
      %cst = arith.constant dense<0.000000e+00> : vector<256x16xf32>
      %26 = tpu.matmul %25, %23, %cst {dimension_numbers = #tpu.dot_dimension_numbers<[1], [0], [0], [1], [0, 0, 1, 1], [], []>} : vector<256x256xbf16>, vector<256x16xbf16>, vector<256x16xf32> -> vector<256x16xf32>
      %c0_11 = arith.constant 0 : index
      %c0_12 = arith.constant 0 : index
      %27 = vector.load %arg5[%c0_11, %c0_12] : memref<1x16xf32, #tpu.memory_space<vmem>>, vector<1x16xf32>
      %28 = vector.broadcast %27 : vector<1x16xf32> to vector<256x16xf32>
      %29 = arith.mulf %26, %28 : vector<256x16xf32>
      %cst_13 = arith.constant dense<0.000000e+00> : vector<256xf32>
      %30 = vector.multi_reduction <add>, %29, %cst_13 [1] : vector<256x16xf32> to vector<256xf32>
      %31 = vector.shape_cast %30 : vector<256xf32> to vector<256x1xf32>
      %32 = arith.negf %31 : vector<256x1xf32>
      %33 = math.exp %32 : vector<256x1xf32>
      %cst_14 = arith.constant 1.000000e+00 : f32
      %34 = vector.broadcast %cst_14 : f32 to vector<256x1xf32>
      %35 = arith.addf %34, %33 : vector<256x1xf32>
      %36 = arith.divf %34, %35 : vector<256x1xf32>
      %37 = vector.broadcast %36 : vector<256x1xf32> to vector<256x16xf32>
      %38 = arith.mulf %37, %26 : vector<256x16xf32>
      %39 = arith.index_cast %1 : i32 to index
      %c0_15 = arith.constant 0 : index
      %40 = vector.load %arg7[%39, %c0_15] : memref<256x16xf32, #tpu.memory_space<vmem>>, vector<256x16xf32>
      %41 = arith.addf %40, %38 : vector<256x16xf32>
      %42 = arith.index_cast %1 : i32 to index
      %c0_16 = arith.constant 0 : index
      %43 = vector.load %arg7[%42, %c0_16] : memref<256x16xf32, #tpu.memory_space<vmem>>, vector<256x16xf32>
      tpu.vector_store %arg7[%42, %c0_16], %41 {strides = array<i32>} : memref<256x16xf32, #tpu.memory_space<vmem>>, vector<256x16xf32>,
      %c2_i32_17 = arith.constant 2 : i32
      %44 = arith.remsi %arg0, %c2_i32_17 : i32
      %c256_i32_18 = arith.constant 256 : i32
      %45 = arith.muli %44, %c256_i32_18 : i32
      %46 = arith.addi %45, %1 : i32
      %47 = tpu.assume_multiple %46, 256 : i32
      %48 = arith.truncf %26 : vector<256x16xf32> to vector<256x16xbf16>
      %49 = arith.index_cast %47 : i32 to index
      %c0_19 = arith.constant 0 : index
      %50 = vector.load %arg8[%49, %c0_19] : memref<512x16xbf16, #tpu.memory_space<vmem>>, vector<256x16xbf16>
      tpu.vector_store %arg8[%49, %c0_19], %48 {strides = array<i32>} : memref<512x16xbf16, #tpu.memory_space<vmem>>, vector<256x16xbf16>,
    } else {
    }
    return
  }
  func.func @transform_0(%arg0: i32, %arg1: i32) -> (i32, i32) {
    %c1_i32 = arith.constant 1 : i32
    %0 = arith.minsi %arg0, %c1_i32 : i32
    %c1_i32_0 = arith.constant 1 : i32
    %1 = arith.subi %c1_i32_0, %0 : i32
    %2 = arith.muli %arg1, %1 : i32
    %c0_i32 = arith.constant 0 : i32
    %c0_i32_1 = arith.constant 0 : i32
    return %2, %c0_i32 : i32, i32
  }
  func.func @transform_1(%arg0: i32, %arg1: i32) -> (i32, i32) {
    %c0_i32 = arith.constant 0 : i32
    %c0_i32_0 = arith.constant 0 : i32
    %c0_i32_1 = arith.constant 0 : i32
    return %c0_i32, %c0_i32_0 : i32, i32
  }
  func.func @transform_2(%arg0: i32, %arg1: i32) -> (i32, i32) {
    %c0_i32 = arith.constant 0 : i32
    %c0_i32_0 = arith.constant 0 : i32
    %c0_i32_1 = arith.constant 0 : i32
    return %c0_i32, %c0_i32_0 : i32, i32
  }
  func.func @transform_3(%arg0: i32, %arg1: i32) -> (i32, i32) {
    %c0_i32 = arith.constant 0 : i32
    %c0_i32_0 = arith.constant 0 : i32
    %c0_i32_1 = arith.constant 0 : i32
    return %c0_i32, %c0_i32_0 : i32, i32
  }
  func.func @transform_5(%arg0: i32, %arg1: i32) -> (i32, i32) {
    %c0_i32 = arith.constant 0 : i32
    %c0_i32_0 = arith.constant 0 : i32
    %c0_i32_1 = arith.constant 0 : i32
    return %c0_i32, %c0_i32_0 : i32, i32
  }
}

</mosaic_0001>

<llo_original>
// kernel: tpu_custom_call.1
$region0: #{tpu_custom_call.1}
  #allocation0 [shape = 'u32[]', space=smem, size = 0x4, offset = 0x4, fixed_abs, tag = 'smem constant byte address 0x4 - core index']
  #allocation1 [shape = 'u32[72,128]{1,0:T(1,128)}', space=vmem, size = 0x9000, scoped, tag = 'internal scratch']
  #allocation2 [shape = 'bf16[512,16]{1,0:T(8,128)(2,1)}', space=vmem, size = 0x20000, scoped, tag = 'scratch operand']
  #allocation3 [shape = 'bf16[256,256]{1,0:T(8,128)(2,1)}', space=vmem, size = 0x20000, scoped, tag = 'scratch operand']
  #allocation4 [shape = 's32[1]{0}', space=sflag, size = 0x4, scoped, tag = 'scratch operand']
  #allocation5 [shape = 's32[]', space=sflag, size = 0x4, offset = 0, fixed_abs, tag = 'sflag constant byte address 0x0 - dummy sync flag']
  #allocation6 [shape = 's32[]', space=sflag, size = 0x4, offset = 0, fixed_abs, tag = 'sflag constant byte address 0x0 - dummy sync flag']
  #allocation7 [shape = 'u32[]', space=smem, size = 0x4, offset = 0x44, fixed_abs, tag = 'smem constant byte address 0x44 - assertion arg 0']
  #allocation8 [shape = 'u32[]', space=smem, size = 0x4, offset = 0x48, fixed_abs, tag = 'smem constant byte address 0x48 - assertion arg 1']
  %s0 = inlined_call_operand.vmem [shape: bf16[256,32], index: 0, kind: input, shape index: {}]
  %s1 = inlined_call_operand.vmem [shape: bf16[32,64], index: 1, kind: input, shape index: {}]
  %s2 = inlined_call_operand.vmem [shape: bf16[64,16], index: 2, kind: input, shape index: {}]
  %s3 = inlined_call_operand.vmem [shape: f32[1,16], index: 3, kind: input, shape index: {}]
  %s4 = inlined_call_operand.hbm [shape: bf16[256,256], index: 4, kind: input, shape index: {}]
  %s5 = inlined_call_operand.vmem [shape: f32[256,16], index: 5, kind: output, shape index: {}]
  %s6 = sld [smem:[#allocation0]]
  $region69: #{tpu_custom_call.1} parent=0
    _
  %s8 = ssub.s32 1, %s6
  %s9 = scalar_select 0, %s8, %s6
  loop: start=0, step=1, limit=13
  $region2: #{tpu_custom_call.1} parent=0 // loop_pre_header
    _
  $region3: #{tpu_custom_call.1} parent=0 // loop_header
    %s11 = sphi 0, %s15
    %p12 = scmp.ge.s32.totalorder %s11, 13
    %s18 = sphi 0, %s30
    %s19 = sphi 0, %s26
    %s20 = sphi 0, %s18
    %s21 = sphi 0, %s19
    %s22 = sphi 0, %s20
    %s23 = sphi 0, %s21
    %s41 = sphi 0, %s43
    %s44 = sphi 0, %s41
    %s45 = sphi 0, %s44
    %s61 = sphi 0, %s45
    %s65 = sphi 0, %s65
    %s67 = sphi 0, %s65
    %s68 = sphi 0, %s67
    %s82 = sphi 0, %s68
    %s86 = sphi 0, %s86
    %s88 = sphi 0, %s86
    %s89 = sphi 0, %s88
    %s103 = sphi 0, %s89
    %s107 = sphi 0, %s107
    %s109 = sphi 0, %s107
    %s110 = sphi 0, %s109
    %s124 = sphi 0, %s110
    %s128 = sphi 0, %s128
    %s130 = sphi 0, %s128
    %s131 = sphi 0, %s130
    %s145 = sphi 0, %s131
  $region4: #{tpu_custom_call.1} parent=0 // loop_header_branch
    %14 = sbr.rel (%p12) target = $region8
  $region5: #{tpu_custom_call.1} parent=0 // loop_body
    %s16 = ssub.s32 %s11, 1
    %s17 = ssub.s32 %s11, 2
    %s24 = sadd.s32 1, %s19
    %p25 = scmp.ge.s32.totalorder %s24, 1
    %s26 = scalar_select %p25, 0, %s24
    %s27 = sadd.s32 1, %s18
    %s28 = scalar_select %p25, %s27, %s18
    %p29 = scmp.ge.s32.totalorder %s28, 11
    %s30 = scalar_select %p29, 0, %s28
    %p31 = scmp.lt.s32.totalorder %s18, 1
    %s32 = scalar_select %p31, %s18, 1
    %s33 = ssub.s32 1, %s32
    %s34 = smul.u32 %s19, %s33
    %p35 = scmp.lt.s32.totalorder %s30, 1
    %s36 = scalar_select %p35, %s30, 1
    %s37 = ssub.s32 1, %s36
    %s38 = smul.u32 %s26, %s37
    %s39 = ssub.s32 %s34, %s38
    %p40 = scmp.eq.s32.totalorder %s39, 0
    %s42 = sadd.s32 %s41, 1
    %s43 = scalar_select %p40, %s41, %s42
    %p46 = pneg %p40
    %p47 = scmp.eq.s32.totalorder %s11, 10
    %p48 = por %p46, %p47
    %p49 = scmp.ne.s32.totalorder %s41, %s44
    %p50 = scmp.eq.s32.totalorder %s11, 0
    %p51 = por %p49, %p50
    %p52 = scmp.ne.s32.totalorder %s41, %s44
    %p53 = scmp.eq.s32.totalorder %s16, 10
    %p54 = por %p52, %p53
    %p55 = scmp.ne.s32.totalorder %s44, %s45
    %p56 = scmp.eq.s32.totalorder %s16, 0
    %p57 = por %p55, %p56
    %p58 = scmp.ne.s32.totalorder %s44, %s45
    %p59 = scmp.eq.s32.totalorder %s17, 10
    %p60 = por %p58, %p59
    %p62 = scmp.ne.s32.totalorder %s45, %s61
    %p63 = scmp.eq.s32.totalorder %s17, 0
    %p64 = por %p62, %p63
    %s66 = sadd.s32 %s65, 1
    %p69 = scmp.eq.s32.totalorder %s11, 10
    %p70 = scmp.ne.s32.totalorder %s65, %s67
    %p71 = scmp.eq.s32.totalorder %s11, 0
    %p72 = por %p70, %p71
    %p73 = scmp.ne.s32.totalorder %s65, %s67
    %p74 = scmp.eq.s32.totalorder %s16, 10
    %p75 = por %p73, %p74
    %p76 = scmp.ne.s32.totalorder %s67, %s68
    %p77 = scmp.eq.s32.totalorder %s16, 0
    %p78 = por %p76, %p77
    %p79 = scmp.ne.s32.totalorder %s67, %s68
    %p80 = scmp.eq.s32.totalorder %s17, 10
    %p81 = por %p79, %p80
    %p83 = scmp.ne.s32.totalorder %s68, %s82
    %p84 = scmp.eq.s32.totalorder %s17, 0
    %p85 = por %p83, %p84
    %s87 = sadd.s32 %s86, 1
    %p90 = scmp.eq.s32.totalorder %s11, 10
    %p91 = scmp.ne.s32.totalorder %s86, %s88
    %p92 = scmp.eq.s32.totalorder %s11, 0
    %p93 = por %p91, %p92
    %p94 = scmp.ne.s32.totalorder %s86, %s88
    %p95 = scmp.eq.s32.totalorder %s16, 10
    %p96 = por %p94, %p95
    %p97 = scmp.ne.s32.totalorder %s88, %s89
    %p98 = scmp.eq.s32.totalorder %s16, 0
    %p99 = por %p97, %p98
    %p100 = scmp.ne.s32.totalorder %s88, %s89
    %p101 = scmp.eq.s32.totalorder %s17, 10
    %p102 = por %p100, %p101
    %p104 = scmp.ne.s32.totalorder %s89, %s103
    %p105 = scmp.eq.s32.totalorder %s17, 0
    %p106 = por %p104, %p105
    %s108 = sadd.s32 %s107, 1
    %p111 = scmp.eq.s32.totalorder %s11, 10
    %p112 = scmp.ne.s32.totalorder %s107, %s109
    %p113 = scmp.eq.s32.totalorder %s11, 0
    %p114 = por %p112, %p113
    %p115 = scmp.ne.s32.totalorder %s107, %s109
    %p116 = scmp.eq.s32.totalorder %s16, 10
    %p117 = por %p115, %p116
    %p118 = scmp.ne.s32.totalorder %s109, %s110
    %p119 = scmp.eq.s32.totalorder %s16, 0
    %p120 = por %p118, %p119
    %p121 = scmp.ne.s32.totalorder %s109, %s110
    %p122 = scmp.eq.s32.totalorder %s17, 10
    %p123 = por %p121, %p122
    %p125 = scmp.ne.s32.totalorder %s110, %s124
    %p126 = scmp.eq.s32.totalorder %s17, 0
    %p127 = por %p125, %p126
    %s129 = sadd.s32 %s128, 1
    %p132 = scmp.eq.s32.totalorder %s11, 10
    %p133 = scmp.ne.s32.totalorder %s128, %s130
    %p134 = scmp.eq.s32.totalorder %s11, 0
    %p135 = por %p133, %p134
    %p136 = scmp.ne.s32.totalorder %s128, %s130
    %p137 = scmp.eq.s32.totalorder %s16, 10
    %p138 = por %p136, %p137
    %p139 = scmp.ne.s32.totalorder %s130, %s131
    %p140 = scmp.eq.s32.totalorder %s16, 0
    %p141 = por %p139, %p140
    %p142 = scmp.ne.s32.totalorder %s130, %s131
    %p143 = scmp.eq.s32.totalorder %s17, 10
    %p144 = por %p142, %p143
    %p146 = scmp.ne.s32.totalorder %s131, %s145
    %p147 = scmp.eq.s32.totalorder %s17, 0
    %p148 = por %p146, %p147
    %p149 = scmp.le.s32.totalorder 1, %s11
    %p150 = scmp.lt.s32.totalorder %s11, 12
    %p151 = pnand %p149, %p150
    %p152 = pneg %p151
    // Predicated region
    $region9: #{tpu_custom_call.1} parent=5 // pred_check
      _
    $region10: #{tpu_custom_call.1} parent=5 // pred_check_branch
      %154 = sbr.rel (%p151) target = $region12
    $region11: #{tpu_custom_call.1} parent=5 // pred_region
      %s155 = ssub.s32 %s11, 1
      // Predicated region
      $region13: #{tpu_custom_call.1} parent=11 // pred_check
        %p156 = pneg %p78
      $region14: #{tpu_custom_call.1} parent=11 // pred_check_branch
        %158 = sbr.rel (%p156) target = $region16
      $region15: #{tpu_custom_call.1} parent=11 // pred_region
        _
      $region16: #{tpu_custom_call.1} parent=11 // pred_fallthru
        _
      // Predicated region
      $region17: #{tpu_custom_call.1} parent=11 // pred_check
        %p159 = pneg %p99
      $region18: #{tpu_custom_call.1} parent=11 // pred_check_branch
        %161 = sbr.rel (%p159) target = $region20
      $region19: #{tpu_custom_call.1} parent=11 // pred_region
        _
      $region20: #{tpu_custom_call.1} parent=11 // pred_fallthru
        _
      // Predicated region
      $region21: #{tpu_custom_call.1} parent=11 // pred_check
        %p162 = pneg %p120
      $region22: #{tpu_custom_call.1} parent=11 // pred_check_branch
        %164 = sbr.rel (%p162) target = $region24
      $region23: #{tpu_custom_call.1} parent=11 // pred_region
        _
      $region24: #{tpu_custom_call.1} parent=11 // pred_fallthru
        _
    $region12: #{tpu_custom_call.1} parent=5 // pred_fallthru
      _
    %p165 = scmp.lt.s32.totalorder %s11, 11
    // Predicated region
    $region25: #{tpu_custom_call.1} parent=5 // pred_check
      %p166 = pneg %p165
    $region26: #{tpu_custom_call.1} parent=5 // pred_check_branch
      %168 = sbr.rel (%p166) target = $region28
    $region27: #{tpu_custom_call.1} parent=5 // pred_region
      // Predicated region
      $region29: #{tpu_custom_call.1} parent=27 // pred_check
        %p169 = pneg %p51
      $region30: #{tpu_custom_call.1} parent=27 // pred_check_branch
        %171 = sbr.rel (%p169) target = $region32
      $region31: #{tpu_custom_call.1} parent=27 // pred_region
        %p172 = scmp.lt.s32.totalorder %s18, 1
        %s173 = scalar_select %p172, %s18, 1
        %s174 = ssub.s32 1, %s173
        %s175 = smul.u32 %s19, %s174
        %s176 = smul.u32 32, %s175
        %p177 = scmp.lt.s32.totalorder %s176, 31
        %s178 = scalar_select %p177, %s176, 31
        %s179 = smul.addr %s178, 4
        %s180 = scalar_lea.vmem %s0, %s179
        %p181 = scmp.lt.s32.totalorder %s18, 1
        %s182 = scalar_select %p181, %s18, 1
        %s183 = ssub.s32 1, %s182
        %s184 = smul.u32 %s19, %s183
        %s185 = smul.u32 32, %s184
      $region32: #{tpu_custom_call.1} parent=27 // pred_fallthru
        _
    $region28: #{tpu_custom_call.1} parent=5 // pred_fallthru
      _
    %p186 = scmp.le.s32.totalorder 1, %s11
    %p187 = scmp.lt.s32.totalorder %s11, 12
    %p188 = pnand %p186, %p187
    %p189 = pneg %p188
    // Predicated region
    $region33: #{tpu_custom_call.1} parent=5 // pred_check
      _
    $region34: #{tpu_custom_call.1} parent=5 // pred_check_branch
      %191 = sbr.rel (%p188) target = $region36
    $region35: #{tpu_custom_call.1} parent=5 // pred_region
      %s192 = ssub.s32 %s11, 1
      %p193 = scmp.lt.s32.totalorder %s20, 1
      %s194 = scalar_select %p193, %s20, 1
      %s195 = ssub.s32 1, %s194
      %s196 = smul.u32 %s21, %s195
      %s197 = smul.u32 32, %s196
      %p198 = scmp.lt.s32.totalorder %s197, 31
      %s199 = scalar_select %p198, %s197, 31
      %s200 = smul.addr %s199, 4
      %s201 = scalar_lea.vmem %s0, %s200
      %p202 = pneg %p57
      %p203 = pneg %p54
      %p204 = pneg %p78
      %p205 = pneg %p75
      %p206 = pneg %p99
      %p207 = pneg %p96
      %p208 = pneg %p120
      %p209 = pneg %p117
      %p210 = pneg %p141
      %p211 = pneg %p138
      %p212 = scmp.lt.s32.totalorder %s20, 1
      %s213 = scalar_select %p212, %s20, 1
      %s214 = ssub.s32 1, %s213
      %s215 = smul.u32 %s21, %s214
      %s216 = smul.u32 32, %s215
      %p217 = scmp.lt.s32.totalorder %s216, 31
      %s218 = scalar_select %p217, %s216, 31
      %s219 = smul.addr %s218, 4
      %s220 = scalar_lea.vmem %s0, %s219
      %p221 = scmp.lt.s32.totalorder %s20, 1
      %s222 = scalar_select %p221, %s20, 1
      %s223 = ssub.s32 1, %s222
      %s224 = smul.u32 %s21, %s223
      %s225 = smul.u32 32, %s224
      %s227 = smul.u32 %s21, 256
      %p228 = scmp.eq.s32.totalorder %s20, 0
      %p229 = scmp.eq.s32.totalorder %s21, 0
      %p230 = pnand %p228, %p229
      %p231 = pneg %p230
      // Predicated region
      $region37: #{tpu_custom_call.1} parent=35 // pred_check
        _
      $region38: #{tpu_custom_call.1} parent=35 // pred_check_branch
        %233 = sbr.rel (%p230) target = $region40
      $region39: #{tpu_custom_call.1} parent=35 // pred_region
        // Predicated region
        $region41: #{tpu_custom_call.1} parent=39 // pred_check
          _
        $region42: #{tpu_custom_call.1} parent=39 // pred_check_branch
          %235 = sbr.rel target = $region44
        $region43: #{tpu_custom_call.1} parent=39 // pred_region
          %236 = sst [smem:[#allocation7]] [#allocation6]
          %237 = sst [smem:[#allocation8]] [#allocation5]
        $region44: #{tpu_custom_call.1} parent=39 // pred_fallthru
          _
        %239 = shalt.err (0)
        %s241 = sshll.u32 %s4, 4
        %s242 = int_to_ptr.hbm [resolvable:$true] %s241
        %s243 = sshll.u32 [#allocation3], 4
        %s244 = int_to_ptr.vmem [resolvable:$true] %s243
        %246 = dma.hbm_to_vmem [thread:$0]  %s242, 4096, %s244, [#allocation4]
      $region40: #{tpu_custom_call.1} parent=35 // pred_fallthru
        _
      %p247 = scmp.eq.s32.totalorder %s20, 1
      %p248 = pnand %p247, %p229
      %p249 = pneg %p248
      // Predicated region
      $region45: #{tpu_custom_call.1} parent=35 // pred_check
        _
      $region46: #{tpu_custom_call.1} parent=35 // pred_check_branch
        %251 = sbr.rel (%p248) target = $region48
      $region47: #{tpu_custom_call.1} parent=35 // pred_region
        %s252 = smul.u32 4, 32
        %s253 = smul.u32 %s252, 2
        %s254 = sshll.u32 %s253, 4
        %255 = dma.done [#allocation4], %s254
      $region48: #{tpu_custom_call.1} parent=35 // pred_fallthru
        _
      // Predicated region
      $region49: #{tpu_custom_call.1} parent=35 // pred_check
        %p256 = pneg %p228
      $region50: #{tpu_custom_call.1} parent=35 // pred_check_branch
        %258 = sbr.rel (%p256) target = $region52
      $region51: #{tpu_custom_call.1} parent=35 // pred_region
        %v259 = vld [vmem:[%s220] sm:$0xf]
        %v260 = vld [vmem:[%s220 + $0x4] sm:$0xf]
        %v261 = vld [vmem:[%s220 + $0x8] sm:$0xf]
        %v262 = vld [vmem:[%s220 + $0xc] sm:$0xf]
        %v263 = vld [vmem:[%s220 + $0x10] sm:$0xf]
        %v264 = vld [vmem:[%s220 + $0x14] sm:$0xf]
        %v265 = vld [vmem:[%s220 + $0x18] sm:$0xf]
        %v266 = vld [vmem:[%s220 + $0x1c] sm:$0xf]
        %v267 = vld [vmem:[%s220 + $0x20] sm:$0xf]
        %v268 = vld [vmem:[%s220 + $0x24] sm:$0xf]
        %v269 = vld [vmem:[%s220 + $0x28] sm:$0xf]
        %v270 = vld [vmem:[%s220 + $0x2c] sm:$0xf]
        %v271 = vld [vmem:[%s220 + $0x30] sm:$0xf]
        %v272 = vld [vmem:[%s220 + $0x34] sm:$0xf]
        %v273 = vld [vmem:[%s220 + $0x38] sm:$0xf]
        %v274 = vld [vmem:[%s220 + $0x3c] sm:$0xf]
        %v275 = vld [vmem:[%s220 + $0x40] sm:$0xf]
        %v276 = vld [vmem:[%s220 + $0x44] sm:$0xf]
        %v277 = vld [vmem:[%s220 + $0x48] sm:$0xf]
        %v278 = vld [vmem:[%s220 + $0x4c] sm:$0xf]
        %v279 = vld [vmem:[%s220 + $0x50] sm:$0xf]
        %v280 = vld [vmem:[%s220 + $0x54] sm:$0xf]
        %v281 = vld [vmem:[%s220 + $0x58] sm:$0xf]
        %v282 = vld [vmem:[%s220 + $0x5c] sm:$0xf]
        %v283 = vld [vmem:[%s220 + $0x60] sm:$0xf]
        %v284 = vld [vmem:[%s220 + $0x64] sm:$0xf]
        %v285 = vld [vmem:[%s220 + $0x68] sm:$0xf]
        %v286 = vld [vmem:[%s220 + $0x6c] sm:$0xf]
        %v287 = vld [vmem:[%s220 + $0x70] sm:$0xf]
        %v288 = vld [vmem:[%s220 + $0x74] sm:$0xf]
        %v289 = vld [vmem:[%s220 + $0x78] sm:$0xf]
        %v290 = vld [vmem:[%s220 + $0x7c] sm:$0xf]
        %v291 = vld [vmem:[%s1] sm:$0xf]
        %v292 = vld [vmem:[%s1 + $0x4] sm:$0xf]
        %v293 = vld [vmem:[%s1 + $0x8] sm:$0xf]
        %v294 = vld [vmem:[%s1 + $0xc] sm:$0xf]
        %v327 = vunpack.c.l.b16 %v259
        %v328 = vunpack.c.l.b16 %v260
        %v329 = vunpack.c.l.b16 %v261
        %v330 = vunpack.c.l.b16 %v262
        %v331 = vunpack.c.l.b16 %v263
        %v332 = vunpack.c.l.b16 %v264
        %v333 = vunpack.c.l.b16 %v265
        %v334 = vunpack.c.l.b16 %v266
        %v335 = vunpack.c.l.b16 %v267
        %v336 = vunpack.c.l.b16 %v268
        %v337 = vunpack.c.l.b16 %v269
        %v338 = vunpack.c.l.b16 %v270
        %v339 = vunpack.c.l.b16 %v271
        %v340 = vunpack.c.l.b16 %v272
        %v341 = vunpack.c.l.b16 %v273
        %v342 = vunpack.c.l.b16 %v274
        %v343 = vunpack.c.l.b16 %v275
        %v344 = vunpack.c.l.b16 %v276
        %v345 = vunpack.c.l.b16 %v277
        %v346 = vunpack.c.l.b16 %v278
        %v347 = vunpack.c.l.b16 %v279
        %v348 = vunpack.c.l.b16 %v280
        %v349 = vunpack.c.l.b16 %v281
        %v350 = vunpack.c.l.b16 %v282
        %v351 = vunpack.c.l.b16 %v283
        %v352 = vunpack.c.l.b16 %v284
        %v353 = vunpack.c.l.b16 %v285
        %v354 = vunpack.c.l.b16 %v286
        %v355 = vunpack.c.l.b16 %v287
        %v356 = vunpack.c.l.b16 %v288
        %v357 = vunpack.c.l.b16 %v289
        %v358 = vunpack.c.l.b16 %v290
        %v359 = vpack.c.b16 %v328, %v327
        %v360 = vpack.c.b16 %v330, %v329
        %v361 = vpack.c.b16 %v332, %v331
        %v362 = vpack.c.b16 %v334, %v333
        %v363 = vpack.c.b16 %v336, %v335
        %v364 = vpack.c.b16 %v338, %v337
        %v365 = vpack.c.b16 %v340, %v339
        %v366 = vpack.c.b16 %v342, %v341
        %v367 = vpack.c.b16 %v344, %v343
        %v368 = vpack.c.b16 %v346, %v345
        %v369 = vpack.c.b16 %v348, %v347
        %v370 = vpack.c.b16 %v350, %v349
        %v371 = vpack.c.b16 %v352, %v351
        %v372 = vpack.c.b16 %v354, %v353
        %v373 = vpack.c.b16 %v356, %v355
        %v374 = vpack.c.b16 %v358, %v357
        %v379 = vunpack.c.l.b16 %v291
        %v380 = vunpack.c.l.b16 %v292
        %v381 = vunpack.c.l.b16 %v293
        %v382 = vunpack.c.l.b16 %v294
        %v383 = vpack.c.b16 %v380, %v379
        %v384 = vpack.c.b16 %v382, %v381
        %vm387 = vcmask 261120
        %v389 = vsel %vm387, %v359, 0
        %v392 = vsel %vm387, %v360, 0
        %v395 = vsel %vm387, %v361, 0
        %v398 = vsel %vm387, %v362, 0
        %v401 = vsel %vm387, %v363, 0
        %v404 = vsel %vm387, %v364, 0
        %v407 = vsel %vm387, %v365, 0
        %v410 = vsel %vm387, %v366, 0
        %v413 = vsel %vm387, %v367, 0
        %v416 = vsel %vm387, %v368, 0
        %v419 = vsel %vm387, %v369, 0
        %v422 = vsel %vm387, %v370, 0
        %v425 = vsel %vm387, %v371, 0
        %v428 = vsel %vm387, %v372, 0
        %v431 = vsel %vm387, %v373, 0
        %v434 = vsel %vm387, %v374, 0
        %436 = vmatpush.bf16.msra.mxu0 0
        %437 = vmatpush.bf16.msra.mxu0 0
        %438 = vmatpush.bf16.msra.mxu0 0
        %439 = vmatpush.bf16.msra.mxu0 0
        %440 = vmatpush.bf16.msra.mxu0 0
        %441 = vmatpush.bf16.msra.mxu0 0
        %442 = vmatpush.bf16.msra.mxu0 %v384
        %443 = vmatpush.bf16.msra.mxu0 %v383
        %444 = vmatmul.bf16.gmra.mxu0 %v389
        %v445 = vpop.f32.mrf.mxu0
        %v446 = vadd.f32 0.0, %v445
        %v447 = vpop.f32.mrf.mxu0
        %v448 = vadd.f32 0.0, %v447
        %449 = vmatmul.bf16.gmra.mxu0 %v392
        %v450 = vpop.f32.mrf.mxu0
        %v451 = vadd.f32 0.0, %v450
        %v452 = vpop.f32.mrf.mxu0
        %v453 = vadd.f32 0.0, %v452
        %454 = vmatmul.bf16.gmra.mxu0 %v395
        %v455 = vpop.f32.mrf.mxu0
        %v456 = vadd.f32 0.0, %v455
        %v457 = vpop.f32.mrf.mxu0
        %v458 = vadd.f32 0.0, %v457
        %459 = vmatmul.bf16.gmra.mxu0 %v398
        %v460 = vpop.f32.mrf.mxu0
        %v461 = vadd.f32 0.0, %v460
        %v462 = vpop.f32.mrf.mxu0
        %v463 = vadd.f32 0.0, %v462
        %464 = vmatmul.bf16.gmra.mxu0 %v401
        %v465 = vpop.f32.mrf.mxu0
        %v466 = vadd.f32 0.0, %v465
        %v467 = vpop.f32.mrf.mxu0
        %v468 = vadd.f32 0.0, %v467
        %469 = vmatmul.bf16.gmra.mxu0 %v404
        %v470 = vpop.f32.mrf.mxu0
        %v471 = vadd.f32 0.0, %v470
        %v472 = vpop.f32.mrf.mxu0
        %v473 = vadd.f32 0.0, %v472
        %474 = vmatmul.bf16.gmra.mxu0 %v407
        %v475 = vpop.f32.mrf.mxu0
        %v476 = vadd.f32 0.0, %v475
        %v477 = vpop.f32.mrf.mxu0
        %v478 = vadd.f32 0.0, %v477
        %479 = vmatmul.bf16.gmra.mxu0 %v410
        %v480 = vpop.f32.mrf.mxu0
        %v481 = vadd.f32 0.0, %v480
        %v482 = vpop.f32.mrf.mxu0
        %v483 = vadd.f32 0.0, %v482
        %484 = vmatmul.bf16.gmra.mxu0 %v413
        %v485 = vpop.f32.mrf.mxu0
        %v486 = vadd.f32 0.0, %v485
        %v487 = vpop.f32.mrf.mxu0
        %v488 = vadd.f32 0.0, %v487
        %489 = vmatmul.bf16.gmra.mxu0 %v416
        %v490 = vpop.f32.mrf.mxu0
        %v491 = vadd.f32 0.0, %v490
        %v492 = vpop.f32.mrf.mxu0
        %v493 = vadd.f32 0.0, %v492
        %494 = vmatmul.bf16.gmra.mxu0 %v419
        %v495 = vpop.f32.mrf.mxu0
        %v496 = vadd.f32 0.0, %v495
        %v497 = vpop.f32.mrf.mxu0
        %v498 = vadd.f32 0.0, %v497
        %499 = vmatmul.bf16.gmra.mxu0 %v422
        %v500 = vpop.f32.mrf.mxu0
        %v501 = vadd.f32 0.0, %v500
        %v502 = vpop.f32.mrf.mxu0
        %v503 = vadd.f32 0.0, %v502
        %504 = vmatmul.bf16.gmra.mxu0 %v425
        %v505 = vpop.f32.mrf.mxu0
        %v506 = vadd.f32 0.0, %v505
        %v507 = vpop.f32.mrf.mxu0
        %v508 = vadd.f32 0.0, %v507
        %509 = vmatmul.bf16.gmra.mxu0 %v428
        %v510 = vpop.f32.mrf.mxu0
        %v511 = vadd.f32 0.0, %v510
        %v512 = vpop.f32.mrf.mxu0
        %v513 = vadd.f32 0.0, %v512
        %514 = vmatmul.bf16.gmra.mxu0 %v431
        %v515 = vpop.f32.mrf.mxu0
        %v516 = vadd.f32 0.0, %v515
        %v517 = vpop.f32.mrf.mxu0
        %v518 = vadd.f32 0.0, %v517
        %519 = vmatmul.bf16.gmra.mxu0 %v434
        %v520 = vpop.f32.mrf.mxu0
        %v521 = vadd.f32 0.0, %v520
        %v522 = vpop.f32.mrf.mxu0
        %v523 = vadd.f32 0.0, %v522
        %524 = vdwg.mxu0
        %v525 = vmax.f32 %v446, 0.0
        %v526 = vmax.f32 %v448, 0.0
        %v527 = vmax.f32 %v451, 0.0
        %v528 = vmax.f32 %v453, 0.0
        %v529 = vmax.f32 %v456, 0.0
        %v530 = vmax.f32 %v458, 0.0
        %v531 = vmax.f32 %v461, 0.0
        %v532 = vmax.f32 %v463, 0.0
        %v533 = vmax.f32 %v466, 0.0
        %v534 = vmax.f32 %v468, 0.0
        %v535 = vmax.f32 %v471, 0.0
        %v536 = vmax.f32 %v473, 0.0
        %v537 = vmax.f32 %v476, 0.0
        %v538 = vmax.f32 %v478, 0.0
        %v539 = vmax.f32 %v481, 0.0
        %v540 = vmax.f32 %v483, 0.0
        %v541 = vmax.f32 %v486, 0.0
        %v542 = vmax.f32 %v488, 0.0
        %v543 = vmax.f32 %v491, 0.0
        %v544 = vmax.f32 %v493, 0.0
        %v545 = vmax.f32 %v496, 0.0
        %v546 = vmax.f32 %v498, 0.0
        %v547 = vmax.f32 %v501, 0.0
        %v548 = vmax.f32 %v503, 0.0
        %v549 = vmax.f32 %v506, 0.0
        %v550 = vmax.f32 %v508, 0.0
        %v551 = vmax.f32 %v511, 0.0
        %v552 = vmax.f32 %v513, 0.0
        %v553 = vmax.f32 %v516, 0.0
        %v554 = vmax.f32 %v518, 0.0
        %v555 = vmax.f32 %v521, 0.0
        %v556 = vmax.f32 %v523, 0.0
        %v557 = vpack.c.bf16 %v526, %v525
        %v558 = vpack.c.bf16 %v528, %v527
        %v559 = vpack.c.bf16 %v530, %v529
        %v560 = vpack.c.bf16 %v532, %v531
        %v561 = vpack.c.bf16 %v534, %v533
        %v562 = vpack.c.bf16 %v536, %v535
        %v563 = vpack.c.bf16 %v538, %v537
        %v564 = vpack.c.bf16 %v540, %v539
        %v565 = vpack.c.bf16 %v542, %v541
        %v566 = vpack.c.bf16 %v544, %v543
        %v567 = vpack.c.bf16 %v546, %v545
        %v568 = vpack.c.bf16 %v548, %v547
        %v569 = vpack.c.bf16 %v550, %v549
        %v570 = vpack.c.bf16 %v552, %v551
        %v571 = vpack.c.bf16 %v554, %v553
        %v572 = vpack.c.bf16 %v556, %v555
        %v573 = vld [vmem:[%s2] sm:$0xf]
        %v574 = vld [vmem:[%s2 + $0x4] sm:$0xf]
        %v575 = vld [vmem:[%s2 + $0x8] sm:$0xf]
        %v576 = vld [vmem:[%s2 + $0xc] sm:$0xf]
        %v577 = vld [vmem:[%s2 + $0x10] sm:$0xf]
        %v578 = vld [vmem:[%s2 + $0x14] sm:$0xf]
        %v579 = vld [vmem:[%s2 + $0x18] sm:$0xf]
        %v580 = vld [vmem:[%s2 + $0x1c] sm:$0xf]
        %v589 = vunpack.c.l.b16 %v573
        %v590 = vunpack.c.l.b16 %v574
        %v591 = vunpack.c.l.b16 %v575
        %v592 = vunpack.c.l.b16 %v576
        %v593 = vunpack.c.l.b16 %v577
        %v594 = vunpack.c.l.b16 %v578
        %v595 = vunpack.c.l.b16 %v579
        %v596 = vunpack.c.l.b16 %v580
        %v597 = vpack.c.b16 %v590, %v589
        %v598 = vpack.c.b16 %v592, %v591
        %v599 = vpack.c.b16 %v594, %v593
        %v600 = vpack.c.b16 %v596, %v595
        %vm605 = vcmask 523264
        %v607 = vsel %vm605, %v557, 0
        %v610 = vsel %vm605, %v558, 0
        %v613 = vsel %vm605, %v559, 0
        %v616 = vsel %vm605, %v560, 0
        %v619 = vsel %vm605, %v561, 0
        %v622 = vsel %vm605, %v562, 0
        %v625 = vsel %vm605, %v563, 0
        %v628 = vsel %vm605, %v564, 0
        %v631 = vsel %vm605, %v565, 0
        %v634 = vsel %vm605, %v566, 0
        %v637 = vsel %vm605, %v567, 0
        %v640 = vsel %vm605, %v568, 0
        %v643 = vsel %vm605, %v569, 0
        %v646 = vsel %vm605, %v570, 0
        %v649 = vsel %vm605, %v571, 0
        %v652 = vsel %vm605, %v572, 0
        %654 = vmatpush.bf16.msra.mxu0 0
        %655 = vmatpush.bf16.msra.mxu0 0
        %656 = vmatpush.bf16.msra.mxu0 0
        %657 = vmatpush.bf16.msra.mxu0 0
        %658 = vmatpush.bf16.msra.mxu0 %v600
        %659 = vmatpush.bf16.msra.mxu0 %v599
        %660 = vmatpush.bf16.msra.mxu0 %v598
        %661 = vmatpush.bf16.msra.mxu0 %v597
        %662 = vmatmul.bf16.gmra.mxu0 %v607
        %v663 = vpop.f32.mrf.mxu0
        %v664 = vadd.f32 0.0, %v663
        %v665 = vpop.f32.mrf.mxu0
        %v666 = vadd.f32 0.0, %v665
        %667 = vmatmul.bf16.gmra.mxu0 %v610
        %v668 = vpop.f32.mrf.mxu0
        %v669 = vadd.f32 0.0, %v668
        %v670 = vpop.f32.mrf.mxu0
        %v671 = vadd.f32 0.0, %v670
        %672 = vmatmul.bf16.gmra.mxu0 %v613
        %v673 = vpop.f32.mrf.mxu0
        %v674 = vadd.f32 0.0, %v673
        %v675 = vpop.f32.mrf.mxu0
        %v676 = vadd.f32 0.0, %v675
        %677 = vmatmul.bf16.gmra.mxu0 %v616
        %v678 = vpop.f32.mrf.mxu0
        %v679 = vadd.f32 0.0, %v678
        %v680 = vpop.f32.mrf.mxu0
        %v681 = vadd.f32 0.0, %v680
        %682 = vmatmul.bf16.gmra.mxu0 %v619
        %v683 = vpop.f32.mrf.mxu0
        %v684 = vadd.f32 0.0, %v683
        %v685 = vpop.f32.mrf.mxu0
        %v686 = vadd.f32 0.0, %v685
        %687 = vmatmul.bf16.gmra.mxu0 %v622
        %v688 = vpop.f32.mrf.mxu0
        %v689 = vadd.f32 0.0, %v688
        %v690 = vpop.f32.mrf.mxu0
        %v691 = vadd.f32 0.0, %v690
        %692 = vmatmul.bf16.gmra.mxu0 %v625
        %v693 = vpop.f32.mrf.mxu0
        %v694 = vadd.f32 0.0, %v693
        %v695 = vpop.f32.mrf.mxu0
        %v696 = vadd.f32 0.0, %v695
        %697 = vmatmul.bf16.gmra.mxu0 %v628
        %v698 = vpop.f32.mrf.mxu0
        %v699 = vadd.f32 0.0, %v698
        %v700 = vpop.f32.mrf.mxu0
        %v701 = vadd.f32 0.0, %v700
        %702 = vmatmul.bf16.gmra.mxu0 %v631
        %v703 = vpop.f32.mrf.mxu0
        %v704 = vadd.f32 0.0, %v703
        %v705 = vpop.f32.mrf.mxu0
        %v706 = vadd.f32 0.0, %v705
        %707 = vmatmul.bf16.gmra.mxu0 %v634
        %v708 = vpop.f32.mrf.mxu0
        %v709 = vadd.f32 0.0, %v708
        %v710 = vpop.f32.mrf.mxu0
        %v711 = vadd.f32 0.0, %v710
        %712 = vmatmul.bf16.gmra.mxu0 %v637
        %v713 = vpop.f32.mrf.mxu0
        %v714 = vadd.f32 0.0, %v713
        %v715 = vpop.f32.mrf.mxu0
        %v716 = vadd.f32 0.0, %v715
        %717 = vmatmul.bf16.gmra.mxu0 %v640
        %v718 = vpop.f32.mrf.mxu0
        %v719 = vadd.f32 0.0, %v718
        %v720 = vpop.f32.mrf.mxu0
        %v721 = vadd.f32 0.0, %v720
        %722 = vmatmul.bf16.gmra.mxu0 %v643
        %v723 = vpop.f32.mrf.mxu0
        %v724 = vadd.f32 0.0, %v723
        %v725 = vpop.f32.mrf.mxu0
        %v726 = vadd.f32 0.0, %v725
        %727 = vmatmul.bf16.gmra.mxu0 %v646
        %v728 = vpop.f32.mrf.mxu0
        %v729 = vadd.f32 0.0, %v728
        %v730 = vpop.f32.mrf.mxu0
        %v731 = vadd.f32 0.0, %v730
        %732 = vmatmul.bf16.gmra.mxu0 %v649
        %v733 = vpop.f32.mrf.mxu0
        %v734 = vadd.f32 0.0, %v733
        %v735 = vpop.f32.mrf.mxu0
        %v736 = vadd.f32 0.0, %v735
        %737 = vmatmul.bf16.gmra.mxu0 %v652
        %v738 = vpop.f32.mrf.mxu0
        %v739 = vadd.f32 0.0, %v738
        %v740 = vpop.f32.mrf.mxu0
        %v741 = vadd.f32 0.0, %v740
        %742 = vdwg.mxu0
        %v743 = vmax.f32 %v664, 0.0
        %v744 = vmax.f32 %v666, 0.0
        %v745 = vmax.f32 %v669, 0.0
        %v746 = vmax.f32 %v671, 0.0
        %v747 = vmax.f32 %v674, 0.0
        %v748 = vmax.f32 %v676, 0.0
        %v749 = vmax.f32 %v679, 0.0
        %v750 = vmax.f32 %v681, 0.0
        %v751 = vmax.f32 %v684, 0.0
        %v752 = vmax.f32 %v686, 0.0
        %v753 = vmax.f32 %v689, 0.0
        %v754 = vmax.f32 %v691, 0.0
        %v755 = vmax.f32 %v694, 0.0
        %v756 = vmax.f32 %v696, 0.0
        %v757 = vmax.f32 %v699, 0.0
        %v758 = vmax.f32 %v701, 0.0
        %v759 = vmax.f32 %v704, 0.0
        %v760 = vmax.f32 %v706, 0.0
        %v761 = vmax.f32 %v709, 0.0
        %v762 = vmax.f32 %v711, 0.0
        %v763 = vmax.f32 %v714, 0.0
        %v764 = vmax.f32 %v716, 0.0
        %v765 = vmax.f32 %v719, 0.0
        %v766 = vmax.f32 %v721, 0.0
        %v767 = vmax.f32 %v724, 0.0
        %v768 = vmax.f32 %v726, 0.0
        %v769 = vmax.f32 %v729, 0.0
        %v770 = vmax.f32 %v731, 0.0
        %v771 = vmax.f32 %v734, 0.0
        %v772 = vmax.f32 %v736, 0.0
        %v773 = vmax.f32 %v739, 0.0
        %v774 = vmax.f32 %v741, 0.0
        %v775 = vld [vmem:[%s3] sm:$0x1]
        %v777 = vperm.slane %v775, 0
        %v779 = vmul.f32 %v743, %v777
        %v780 = vmul.f32 %v744, %v777
        %v781 = vmul.f32 %v745, %v777
        %v782 = vmul.f32 %v746, %v777
        %v783 = vmul.f32 %v747, %v777
        %v784 = vmul.f32 %v748, %v777
        %v785 = vmul.f32 %v749, %v777
        %v786 = vmul.f32 %v750, %v777
        %v787 = vmul.f32 %v751, %v777
        %v788 = vmul.f32 %v752, %v777
        %v789 = vmul.f32 %v753, %v777
        %v790 = vmul.f32 %v754, %v777
        %v791 = vmul.f32 %v755, %v777
        %v792 = vmul.f32 %v756, %v777
        %v793 = vmul.f32 %v757, %v777
        %v794 = vmul.f32 %v758, %v777
        %v795 = vmul.f32 %v759, %v777
        %v796 = vmul.f32 %v760, %v777
        %v797 = vmul.f32 %v761, %v777
        %v798 = vmul.f32 %v762, %v777
        %v799 = vmul.f32 %v763, %v777
        %v800 = vmul.f32 %v764, %v777
        %v801 = vmul.f32 %v765, %v777
        %v802 = vmul.f32 %v766, %v777
        %v803 = vmul.f32 %v767, %v777
        %v804 = vmul.f32 %v768, %v777
        %v805 = vmul.f32 %v769, %v777
        %v806 = vmul.f32 %v770, %v777
        %v807 = vmul.f32 %v771, %v777
        %v808 = vmul.f32 %v772, %v777
        %v809 = vmul.f32 %v773, %v777
        %v810 = vmul.f32 %v774, %v777
        %vm811 = vcmask 130048
        %v812 = vsel %vm811, %v779, 0.0
        %813 = vadd.xlane.f32.xlu0 %v812
        %v814 = vpop.xlane.xlu0 %813
        %v815 = vsel %vm811, %v780, 0.0
        %816 = vadd.xlane.f32.xlu0 %v815
        %v817 = vpop.xlane.xlu0 %816
        %v818 = vsel %vm811, %v781, 0.0
        %819 = vadd.xlane.f32.xlu0 %v818
        %v820 = vpop.xlane.xlu0 %819
        %v821 = vsel %vm811, %v782, 0.0
        %822 = vadd.xlane.f32.xlu0 %v821
        %v823 = vpop.xlane.xlu0 %822
        %v824 = vsel %vm811, %v783, 0.0
        %825 = vadd.xlane.f32.xlu0 %v824
        %v826 = vpop.xlane.xlu0 %825
        %v827 = vsel %vm811, %v784, 0.0
        %828 = vadd.xlane.f32.xlu0 %v827
        %v829 = vpop.xlane.xlu0 %828
        %v830 = vsel %vm811, %v785, 0.0
        %831 = vadd.xlane.f32.xlu0 %v830
        %v832 = vpop.xlane.xlu0 %831
        %v833 = vsel %vm811, %v786, 0.0
        %834 = vadd.xlane.f32.xlu0 %v833
        %v835 = vpop.xlane.xlu0 %834
        %v836 = vsel %vm811, %v787, 0.0
        %837 = vadd.xlane.f32.xlu0 %v836
        %v838 = vpop.xlane.xlu0 %837
        %v839 = vsel %vm811, %v788, 0.0
        %840 = vadd.xlane.f32.xlu0 %v839
        %v841 = vpop.xlane.xlu0 %840
        %v842 = vsel %vm811, %v789, 0.0
        %843 = vadd.xlane.f32.xlu0 %v842
        %v844 = vpop.xlane.xlu0 %843
        %v845 = vsel %vm811, %v790, 0.0
        %846 = vadd.xlane.f32.xlu0 %v845
        %v847 = vpop.xlane.xlu0 %846
        %v848 = vsel %vm811, %v791, 0.0
        %849 = vadd.xlane.f32.xlu0 %v848
        %v850 = vpop.xlane.xlu0 %849
        %v851 = vsel %vm811, %v792, 0.0
        %852 = vadd.xlane.f32.xlu0 %v851
        %v853 = vpop.xlane.xlu0 %852
        %v854 = vsel %vm811, %v793, 0.0
        %855 = vadd.xlane.f32.xlu0 %v854
        %v856 = vpop.xlane.xlu0 %855
        %v857 = vsel %vm811, %v794, 0.0
        %858 = vadd.xlane.f32.xlu0 %v857
        %v859 = vpop.xlane.xlu0 %858
        %v860 = vsel %vm811, %v795, 0.0
        %861 = vadd.xlane.f32.xlu0 %v860
        %v862 = vpop.xlane.xlu0 %861
        %v863 = vsel %vm811, %v796, 0.0
        %864 = vadd.xlane.f32.xlu0 %v863
        %v865 = vpop.xlane.xlu0 %864
        %v866 = vsel %vm811, %v797, 0.0
        %867 = vadd.xlane.f32.xlu0 %v866
        %v868 = vpop.xlane.xlu0 %867
        %v869 = vsel %vm811, %v798, 0.0
        %870 = vadd.xlane.f32.xlu0 %v869
        %v871 = vpop.xlane.xlu0 %870
        %v872 = vsel %vm811, %v799, 0.0
        %873 = vadd.xlane.f32.xlu0 %v872
        %v874 = vpop.xlane.xlu0 %873
        %v875 = vsel %vm811, %v800, 0.0
        %876 = vadd.xlane.f32.xlu0 %v875
        %v877 = vpop.xlane.xlu0 %876
        %v878 = vsel %vm811, %v801, 0.0
        %879 = vadd.xlane.f32.xlu0 %v878
        %v880 = vpop.xlane.xlu0 %879
        %v881 = vsel %vm811, %v802, 0.0
        %882 = vadd.xlane.f32.xlu0 %v881
        %v883 = vpop.xlane.xlu0 %882
        %v884 = vsel %vm811, %v803, 0.0
        %885 = vadd.xlane.f32.xlu0 %v884
        %v886 = vpop.xlane.xlu0 %885
        %v887 = vsel %vm811, %v804, 0.0
        %888 = vadd.xlane.f32.xlu0 %v887
        %v889 = vpop.xlane.xlu0 %888
        %v890 = vsel %vm811, %v805, 0.0
        %891 = vadd.xlane.f32.xlu0 %v890
        %v892 = vpop.xlane.xlu0 %891
        %v893 = vsel %vm811, %v806, 0.0
        %894 = vadd.xlane.f32.xlu0 %v893
        %v895 = vpop.xlane.xlu0 %894
        %v896 = vsel %vm811, %v807, 0.0
        %897 = vadd.xlane.f32.xlu0 %v896
        %v898 = vpop.xlane.xlu0 %897
        %v899 = vsel %vm811, %v808, 0.0
        %900 = vadd.xlane.f32.xlu0 %v899
        %v901 = vpop.xlane.xlu0 %900
        %v902 = vsel %vm811, %v809, 0.0
        %903 = vadd.xlane.f32.xlu0 %v902
        %v904 = vpop.xlane.xlu0 %903
        %v905 = vsel %vm811, %v810, 0.0
        %906 = vadd.xlane.f32.xlu0 %v905
        %v907 = vpop.xlane.xlu0 %906
        %v908 = vxor.u32 %v814, 2147483648
        %v909 = vxor.u32 %v817, 2147483648
        %v910 = vxor.u32 %v820, 2147483648
        %v911 = vxor.u32 %v823, 2147483648
        %v912 = vxor.u32 %v826, 2147483648
        %v913 = vxor.u32 %v829, 2147483648
        %v914 = vxor.u32 %v832, 2147483648
        %v915 = vxor.u32 %v835, 2147483648
        %v916 = vxor.u32 %v838, 2147483648
        %v917 = vxor.u32 %v841, 2147483648
        %v918 = vxor.u32 %v844, 2147483648
        %v919 = vxor.u32 %v847, 2147483648
        %v920 = vxor.u32 %v850, 2147483648
        %v921 = vxor.u32 %v853, 2147483648
        %v922 = vxor.u32 %v856, 2147483648
        %v923 = vxor.u32 %v859, 2147483648
        %v924 = vxor.u32 %v862, 2147483648
        %v925 = vxor.u32 %v865, 2147483648
        %v926 = vxor.u32 %v868, 2147483648
        %v927 = vxor.u32 %v871, 2147483648
        %v928 = vxor.u32 %v874, 2147483648
        %v929 = vxor.u32 %v877, 2147483648
        %v930 = vxor.u32 %v880, 2147483648
        %v931 = vxor.u32 %v883, 2147483648
        %v932 = vxor.u32 %v886, 2147483648
        %v933 = vxor.u32 %v889, 2147483648
        %v934 = vxor.u32 %v892, 2147483648
        %v935 = vxor.u32 %v895, 2147483648
        %v936 = vxor.u32 %v898, 2147483648
        %v937 = vxor.u32 %v901, 2147483648
        %v938 = vxor.u32 %v904, 2147483648
        %v939 = vxor.u32 %v907, 2147483648
        %v940 = vmul.f32 %v908, 1.442695
        %v941 = vpow.pop %v940
        %v942 = vmul.f32 %v909, 1.442695
        %v943 = vpow.pop %v942
        %v944 = vmul.f32 %v910, 1.442695
        %v945 = vpow.pop %v944
        %v946 = vmul.f32 %v911, 1.442695
        %v947 = vpow.pop %v946
        %v948 = vmul.f32 %v912, 1.442695
        %v949 = vpow.pop %v948
        %v950 = vmul.f32 %v913, 1.442695
        %v951 = vpow.pop %v950
        %v952 = vmul.f32 %v914, 1.442695
        %v953 = vpow.pop %v952
        %v954 = vmul.f32 %v915, 1.442695
        %v955 = vpow.pop %v954
        %v956 = vmul.f32 %v916, 1.442695
        %v957 = vpow.pop %v956
        %v958 = vmul.f32 %v917, 1.442695
        %v959 = vpow.pop %v958
        %v960 = vmul.f32 %v918, 1.442695
        %v961 = vpow.pop %v960
        %v962 = vmul.f32 %v919, 1.442695
        %v963 = vpow.pop %v962
        %v964 = vmul.f32 %v920, 1.442695
        %v965 = vpow.pop %v964
        %v966 = vmul.f32 %v921, 1.442695
        %v967 = vpow.pop %v966
        %v968 = vmul.f32 %v922, 1.442695
        %v969 = vpow.pop %v968
        %v970 = vmul.f32 %v923, 1.442695
        %v971 = vpow.pop %v970
        %v972 = vmul.f32 %v924, 1.442695
        %v973 = vpow.pop %v972
        %v974 = vmul.f32 %v925, 1.442695
        %v975 = vpow.pop %v974
        %v976 = vmul.f32 %v926, 1.442695
        %v977 = vpow.pop %v976
        %v978 = vmul.f32 %v927, 1.442695
        %v979 = vpow.pop %v978
        %v980 = vmul.f32 %v928, 1.442695
        %v981 = vpow.pop %v980
        %v982 = vmul.f32 %v929, 1.442695
        %v983 = vpow.pop %v982
        %v984 = vmul.f32 %v930, 1.442695
        %v985 = vpow.pop %v984
        %v986 = vmul.f32 %v931, 1.442695
        %v987 = vpow.pop %v986
        %v988 = vmul.f32 %v932, 1.442695
        %v989 = vpow.pop %v988
        %v990 = vmul.f32 %v933, 1.442695
        %v991 = vpow.pop %v990
        %v992 = vmul.f32 %v934, 1.442695
        %v993 = vpow.pop %v992
        %v994 = vmul.f32 %v935, 1.442695
        %v995 = vpow.pop %v994
        %v996 = vmul.f32 %v936, 1.442695
        %v997 = vpow.pop %v996
        %v998 = vmul.f32 %v937, 1.442695
        %v999 = vpow.pop %v998
        %v1000 = vmul.f32 %v938, 1.442695
        %v1001 = vpow.pop %v1000
        %v1002 = vmul.f32 %v939, 1.442695
        %v1003 = vpow.pop %v1002
        %v1004 = vadd.f32 %v941, 1.0
        %v1005 = vadd.f32 %v943, 1.0
        %v1006 = vadd.f32 %v945, 1.0
        %v1007 = vadd.f32 %v947, 1.0
        %v1008 = vadd.f32 %v949, 1.0
        %v1009 = vadd.f32 %v951, 1.0
        %v1010 = vadd.f32 %v953, 1.0
        %v1011 = vadd.f32 %v955, 1.0
        %v1012 = vadd.f32 %v957, 1.0
        %v1013 = vadd.f32 %v959, 1.0
        %v1014 = vadd.f32 %v961, 1.0
        %v1015 = vadd.f32 %v963, 1.0
        %v1016 = vadd.f32 %v965, 1.0
        %v1017 = vadd.f32 %v967, 1.0
        %v1018 = vadd.f32 %v969, 1.0
        %v1019 = vadd.f32 %v971, 1.0
        %v1020 = vadd.f32 %v973, 1.0
        %v1021 = vadd.f32 %v975, 1.0
        %v1022 = vadd.f32 %v977, 1.0
        %v1023 = vadd.f32 %v979, 1.0
        %v1024 = vadd.f32 %v981, 1.0
        %v1025 = vadd.f32 %v983, 1.0
        %v1026 = vadd.f32 %v985, 1.0
        %v1027 = vadd.f32 %v987, 1.0
        %v1028 = vadd.f32 %v989, 1.0
        %v1029 = vadd.f32 %v991, 1.0
        %v1030 = vadd.f32 %v993, 1.0
        %v1031 = vadd.f32 %v995, 1.0
        %v1032 = vadd.f32 %v997, 1.0
        %v1033 = vadd.f32 %v999, 1.0
        %v1034 = vadd.f32 %v1001, 1.0
        %v1035 = vadd.f32 %v1003, 1.0
        %v1036 = vrcp.pop %v1004
        %v1037 = vmul.f32 %v1004, %v1036
        %v1038 = vsub.f32 1.0, %v1037
        %v1039 = vmul.f32 %v1036, %v1038
        %v1040 = vadd.f32 %v1036, %v1039
        %vm1041 = vweird.f32 %v1004
        %vm1042 = vweird.f32 %v1036
        %vm1043 = vmor %vm1041, %vm1042
        %v1044 = vsel %vm1043, %v1036, %v1040
        %v1045 = vand.u32 2147483647, %v1004
        %vm1046 = vcmp.eq.f32.partialorder %v1045, 8.507059e+37
        %v1047 = vand.u32 %v1004, 2147483648
        %v1048 = vor.u32 1.1754944e-38, %v1047
        %v1049 = vsel %vm1046, %v1048, %v1044
        %v1050 = vmul.f32 1.0, %v1049
        %v1051 = vrcp.pop %v1005
        %v1052 = vmul.f32 %v1005, %v1051
        %v1053 = vsub.f32 1.0, %v1052
        %v1054 = vmul.f32 %v1051, %v1053
        %v1055 = vadd.f32 %v1051, %v1054
        %vm1056 = vweird.f32 %v1005
        %vm1057 = vweird.f32 %v1051
        %vm1058 = vmor %vm1056, %vm1057
        %v1059 = vsel %vm1058, %v1051, %v1055
        %v1060 = vand.u32 2147483647, %v1005
        %vm1061 = vcmp.eq.f32.partialorder %v1060, 8.507059e+37
        %v1062 = vand.u32 %v1005, 2147483648
        %v1063 = vor.u32 1.1754944e-38, %v1062
        %v1064 = vsel %vm1061, %v1063, %v1059
        %v1065 = vmul.f32 1.0, %v1064
        %v1066 = vrcp.pop %v1006
        %v1067 = vmul.f32 %v1006, %v1066
        %v1068 = vsub.f32 1.0, %v1067
        %v1069 = vmul.f32 %v1066, %v1068
        %v1070 = vadd.f32 %v1066, %v1069
        %vm1071 = vweird.f32 %v1006
        %vm1072 = vweird.f32 %v1066
        %vm1073 = vmor %vm1071, %vm1072
        %v1074 = vsel %vm1073, %v1066, %v1070
        %v1075 = vand.u32 2147483647, %v1006
        %vm1076 = vcmp.eq.f32.partialorder %v1075, 8.507059e+37
        %v1077 = vand.u32 %v1006, 2147483648
        %v1078 = vor.u32 1.1754944e-38, %v1077
        %v1079 = vsel %vm1076, %v1078, %v1074
        %v1080 = vmul.f32 1.0, %v1079
        %v1081 = vrcp.pop %v1007
        %v1082 = vmul.f32 %v1007, %v1081
        %v1083 = vsub.f32 1.0, %v1082
        %v1084 = vmul.f32 %v1081, %v1083
        %v1085 = vadd.f32 %v1081, %v1084
        %vm1086 = vweird.f32 %v1007
        %vm1087 = vweird.f32 %v1081
        %vm1088 = vmor %vm1086, %vm1087
        %v1089 = vsel %vm1088, %v1081, %v1085
        %v1090 = vand.u32 2147483647, %v1007
        %vm1091 = vcmp.eq.f32.partialorder %v1090, 8.507059e+37
        %v1092 = vand.u32 %v1007, 2147483648
        %v1093 = vor.u32 1.1754944e-38, %v1092
        %v1094 = vsel %vm1091, %v1093, %v1089
        %v1095 = vmul.f32 1.0, %v1094
        %v1096 = vrcp.pop %v1008
        %v1097 = vmul.f32 %v1008, %v1096
        %v1098 = vsub.f32 1.0, %v1097
        %v1099 = vmul.f32 %v1096, %v1098
        %v1100 = vadd.f32 %v1096, %v1099
        %vm1101 = vweird.f32 %v1008
        %vm1102 = vweird.f32 %v1096
        %vm1103 = vmor %vm1101, %vm1102
        %v1104 = vsel %vm1103, %v1096, %v1100
        %v1105 = vand.u32 2147483647, %v1008
        %vm1106 = vcmp.eq.f32.partialorder %v1105, 8.507059e+37
        %v1107 = vand.u32 %v1008, 2147483648
        %v1108 = vor.u32 1.1754944e-38, %v1107
        %v1109 = vsel %vm1106, %v1108, %v1104
        %v1110 = vmul.f32 1.0, %v1109
        %v1111 = vrcp.pop %v1009
        %v1112 = vmul.f32 %v1009, %v1111
        %v1113 = vsub.f32 1.0, %v1112
        %v1114 = vmul.f32 %v1111, %v1113
        %v1115 = vadd.f32 %v1111, %v1114
        %vm1116 = vweird.f32 %v1009
        %vm1117 = vweird.f32 %v1111
        %vm1118 = vmor %vm1116, %vm1117
        %v1119 = vsel %vm1118, %v1111, %v1115
        %v1120 = vand.u32 2147483647, %v1009
        %vm1121 = vcmp.eq.f32.partialorder %v1120, 8.507059e+37
        %v1122 = vand.u32 %v1009, 2147483648
        %v1123 = vor.u32 1.1754944e-38, %v1122
        %v1124 = vsel %vm1121, %v1123, %v1119
        %v1125 = vmul.f32 1.0, %v1124
        %v1126 = vrcp.pop %v1010
        %v1127 = vmul.f32 %v1010, %v1126
        %v1128 = vsub.f32 1.0, %v1127
        %v1129 = vmul.f32 %v1126, %v1128
        %v1130 = vadd.f32 %v1126, %v1129
        %vm1131 = vweird.f32 %v1010
        %vm1132 = vweird.f32 %v1126
        %vm1133 = vmor %vm1131, %vm1132
        %v1134 = vsel %vm1133, %v1126, %v1130
        %v1135 = vand.u32 2147483647, %v1010
        %vm1136 = vcmp.eq.f32.partialorder %v1135, 8.507059e+37
        %v1137 = vand.u32 %v1010, 2147483648
        %v1138 = vor.u32 1.1754944e-38, %v1137
        %v1139 = vsel %vm1136, %v1138, %v1134
        %v1140 = vmul.f32 1.0, %v1139
        %v1141 = vrcp.pop %v1011
        %v1142 = vmul.f32 %v1011, %v1141
        %v1143 = vsub.f32 1.0, %v1142
        %v1144 = vmul.f32 %v1141, %v1143
        %v1145 = vadd.f32 %v1141, %v1144
        %vm1146 = vweird.f32 %v1011
        %vm1147 = vweird.f32 %v1141
        %vm1148 = vmor %vm1146, %vm1147
        %v1149 = vsel %vm1148, %v1141, %v1145
        %v1150 = vand.u32 2147483647, %v1011
        %vm1151 = vcmp.eq.f32.partialorder %v1150, 8.507059e+37
        %v1152 = vand.u32 %v1011, 2147483648
        %v1153 = vor.u32 1.1754944e-38, %v1152
        %v1154 = vsel %vm1151, %v1153, %v1149
        %v1155 = vmul.f32 1.0, %v1154
        %v1156 = vrcp.pop %v1012
        %v1157 = vmul.f32 %v1012, %v1156
        %v1158 = vsub.f32 1.0, %v1157
        %v1159 = vmul.f32 %v1156, %v1158
        %v1160 = vadd.f32 %v1156, %v1159
        %vm1161 = vweird.f32 %v1012
        %vm1162 = vweird.f32 %v1156
        %vm1163 = vmor %vm1161, %vm1162
        %v1164 = vsel %vm1163, %v1156, %v1160
        %v1165 = vand.u32 2147483647, %v1012
        %vm1166 = vcmp.eq.f32.partialorder %v1165, 8.507059e+37
        %v1167 = vand.u32 %v1012, 2147483648
        %v1168 = vor.u32 1.1754944e-38, %v1167
        %v1169 = vsel %vm1166, %v1168, %v1164
        %v1170 = vmul.f32 1.0, %v1169
        %v1171 = vrcp.pop %v1013
        %v1172 = vmul.f32 %v1013, %v1171
        %v1173 = vsub.f32 1.0, %v1172
        %v1174 = vmul.f32 %v1171, %v1173
        %v1175 = vadd.f32 %v1171, %v1174
        %vm1176 = vweird.f32 %v1013
        %vm1177 = vweird.f32 %v1171
        %vm1178 = vmor %vm1176, %vm1177
        %v1179 = vsel %vm1178, %v1171, %v1175
        %v1180 = vand.u32 2147483647, %v1013
        %vm1181 = vcmp.eq.f32.partialorder %v1180, 8.507059e+37
        %v1182 = vand.u32 %v1013, 2147483648
        %v1183 = vor.u32 1.1754944e-38, %v1182
        %v1184 = vsel %vm1181, %v1183, %v1179
        %v1185 = vmul.f32 1.0, %v1184
        %v1186 = vrcp.pop %v1014
        %v1187 = vmul.f32 %v1014, %v1186
        %v1188 = vsub.f32 1.0, %v1187
        %v1189 = vmul.f32 %v1186, %v1188
        %v1190 = vadd.f32 %v1186, %v1189
        %vm1191 = vweird.f32 %v1014
        %vm1192 = vweird.f32 %v1186
        %vm1193 = vmor %vm1191, %vm1192
        %v1194 = vsel %vm1193, %v1186, %v1190
        %v1195 = vand.u32 2147483647, %v1014
        %vm1196 = vcmp.eq.f32.partialorder %v1195, 8.507059e+37
        %v1197 = vand.u32 %v1014, 2147483648
        %v1198 = vor.u32 1.1754944e-38, %v1197
        %v1199 = vsel %vm1196, %v1198, %v1194
        %v1200 = vmul.f32 1.0, %v1199
        %v1201 = vrcp.pop %v1015
        %v1202 = vmul.f32 %v1015, %v1201
        %v1203 = vsub.f32 1.0, %v1202
        %v1204 = vmul.f32 %v1201, %v1203
        %v1205 = vadd.f32 %v1201, %v1204
        %vm1206 = vweird.f32 %v1015
        %vm1207 = vweird.f32 %v1201
        %vm1208 = vmor %vm1206, %vm1207
        %v1209 = vsel %vm1208, %v1201, %v1205
        %v1210 = vand.u32 2147483647, %v1015
        %vm1211 = vcmp.eq.f32.partialorder %v1210, 8.507059e+37
        %v1212 = vand.u32 %v1015, 2147483648
        %v1213 = vor.u32 1.1754944e-38, %v1212
        %v1214 = vsel %vm1211, %v1213, %v1209
        %v1215 = vmul.f32 1.0, %v1214
        %v1216 = vrcp.pop %v1016
        %v1217 = vmul.f32 %v1016, %v1216
        %v1218 = vsub.f32 1.0, %v1217
        %v1219 = vmul.f32 %v1216, %v1218
        %v1220 = vadd.f32 %v1216, %v1219
        %vm1221 = vweird.f32 %v1016
        %vm1222 = vweird.f32 %v1216
        %vm1223 = vmor %vm1221, %vm1222
        %v1224 = vsel %vm1223, %v1216, %v1220
        %v1225 = vand.u32 2147483647, %v1016
        %vm1226 = vcmp.eq.f32.partialorder %v1225, 8.507059e+37
        %v1227 = vand.u32 %v1016, 2147483648
        %v1228 = vor.u32 1.1754944e-38, %v1227
        %v1229 = vsel %vm1226, %v1228, %v1224
        %v1230 = vmul.f32 1.0, %v1229
        %v1231 = vrcp.pop %v1017
        %v1232 = vmul.f32 %v1017, %v1231
        %v1233 = vsub.f32 1.0, %v1232
        %v1234 = vmul.f32 %v1231, %v1233
        %v1235 = vadd.f32 %v1231, %v1234
        %vm1236 = vweird.f32 %v1017
        %vm1237 = vweird.f32 %v1231
        %vm1238 = vmor %vm1236, %vm1237
        %v1239 = vsel %vm1238, %v1231, %v1235
        %v1240 = vand.u32 2147483647, %v1017
        %vm1241 = vcmp.eq.f32.partialorder %v1240, 8.507059e+37
        %v1242 = vand.u32 %v1017, 2147483648
        %v1243 = vor.u32 1.1754944e-38, %v1242
        %v1244 = vsel %vm1241, %v1243, %v1239
        %v1245 = vmul.f32 1.0, %v1244
        %v1246 = vrcp.pop %v1018
        %v1247 = vmul.f32 %v1018, %v1246
        %v1248 = vsub.f32 1.0, %v1247
        %v1249 = vmul.f32 %v1246, %v1248
        %v1250 = vadd.f32 %v1246, %v1249
        %vm1251 = vweird.f32 %v1018
        %vm1252 = vweird.f32 %v1246
        %vm1253 = vmor %vm1251, %vm1252
        %v1254 = vsel %vm1253, %v1246, %v1250
        %v1255 = vand.u32 2147483647, %v1018
        %vm1256 = vcmp.eq.f32.partialorder %v1255, 8.507059e+37
        %v1257 = vand.u32 %v1018, 2147483648
        %v1258 = vor.u32 1.1754944e-38, %v1257
        %v1259 = vsel %vm1256, %v1258, %v1254
        %v1260 = vmul.f32 1.0, %v1259
        %v1261 = vrcp.pop %v1019
        %v1262 = vmul.f32 %v1019, %v1261
        %v1263 = vsub.f32 1.0, %v1262
        %v1264 = vmul.f32 %v1261, %v1263
        %v1265 = vadd.f32 %v1261, %v1264
        %vm1266 = vweird.f32 %v1019
        %vm1267 = vweird.f32 %v1261
        %vm1268 = vmor %vm1266, %vm1267
        %v1269 = vsel %vm1268, %v1261, %v1265
        %v1270 = vand.u32 2147483647, %v1019
        %vm1271 = vcmp.eq.f32.partialorder %v1270, 8.507059e+37
        %v1272 = vand.u32 %v1019, 2147483648
        %v1273 = vor.u32 1.1754944e-38, %v1272
        %v1274 = vsel %vm1271, %v1273, %v1269
        %v1275 = vmul.f32 1.0, %v1274
        %v1276 = vrcp.pop %v1020
        %v1277 = vmul.f32 %v1020, %v1276
        %v1278 = vsub.f32 1.0, %v1277
        %v1279 = vmul.f32 %v1276, %v1278
        %v1280 = vadd.f32 %v1276, %v1279
        %vm1281 = vweird.f32 %v1020
        %vm1282 = vweird.f32 %v1276
        %vm1283 = vmor %vm1281, %vm1282
        %v1284 = vsel %vm1283, %v1276, %v1280
        %v1285 = vand.u32 2147483647, %v1020
        %vm1286 = vcmp.eq.f32.partialorder %v1285, 8.507059e+37
        %v1287 = vand.u32 %v1020, 2147483648
        %v1288 = vor.u32 1.1754944e-38, %v1287
        %v1289 = vsel %vm1286, %v1288, %v1284
        %v1290 = vmul.f32 1.0, %v1289
        %v1291 = vrcp.pop %v1021
        %v1292 = vmul.f32 %v1021, %v1291
        %v1293 = vsub.f32 1.0, %v1292
        %v1294 = vmul.f32 %v1291, %v1293
        %v1295 = vadd.f32 %v1291, %v1294
        %vm1296 = vweird.f32 %v1021
        %vm1297 = vweird.f32 %v1291
        %vm1298 = vmor %vm1296, %vm1297
        %v1299 = vsel %vm1298, %v1291, %v1295
        %v1300 = vand.u32 2147483647, %v1021
        %vm1301 = vcmp.eq.f32.partialorder %v1300, 8.507059e+37
        %v1302 = vand.u32 %v1021, 2147483648
        %v1303 = vor.u32 1.1754944e-38, %v1302
        %v1304 = vsel %vm1301, %v1303, %v1299
        %v1305 = vmul.f32 1.0, %v1304
        %v1306 = vrcp.pop %v1022
        %v1307 = vmul.f32 %v1022, %v1306
        %v1308 = vsub.f32 1.0, %v1307
        %v1309 = vmul.f32 %v1306, %v1308
        %v1310 = vadd.f32 %v1306, %v1309
        %vm1311 = vweird.f32 %v1022
        %vm1312 = vweird.f32 %v1306
        %vm1313 = vmor %vm1311, %vm1312
        %v1314 = vsel %vm1313, %v1306, %v1310
        %v1315 = vand.u32 2147483647, %v1022
        %vm1316 = vcmp.eq.f32.partialorder %v1315, 8.507059e+37
        %v1317 = vand.u32 %v1022, 2147483648
        %v1318 = vor.u32 1.1754944e-38, %v1317
        %v1319 = vsel %vm1316, %v1318, %v1314
        %v1320 = vmul.f32 1.0, %v1319
        %v1321 = vrcp.pop %v1023
        %v1322 = vmul.f32 %v1023, %v1321
        %v1323 = vsub.f32 1.0, %v1322
        %v1324 = vmul.f32 %v1321, %v1323
        %v1325 = vadd.f32 %v1321, %v1324
        %vm1326 = vweird.f32 %v1023
        %vm1327 = vweird.f32 %v1321
        %vm1328 = vmor %vm1326, %vm1327
        %v1329 = vsel %vm1328, %v1321, %v1325
        %v1330 = vand.u32 2147483647, %v1023
        %vm1331 = vcmp.eq.f32.partialorder %v1330, 8.507059e+37
        %v1332 = vand.u32 %v1023, 2147483648
        %v1333 = vor.u32 1.1754944e-38, %v1332
        %v1334 = vsel %vm1331, %v1333, %v1329
        %v1335 = vmul.f32 1.0, %v1334
        %v1336 = vrcp.pop %v1024
        %v1337 = vmul.f32 %v1024, %v1336
        %v1338 = vsub.f32 1.0, %v1337
        %v1339 = vmul.f32 %v1336, %v1338
        %v1340 = vadd.f32 %v1336, %v1339
        %vm1341 = vweird.f32 %v1024
        %vm1342 = vweird.f32 %v1336
        %vm1343 = vmor %vm1341, %vm1342
        %v1344 = vsel %vm1343, %v1336, %v1340
        %v1345 = vand.u32 2147483647, %v1024
        %vm1346 = vcmp.eq.f32.partialorder %v1345, 8.507059e+37
        %v1347 = vand.u32 %v1024, 2147483648
        %v1348 = vor.u32 1.1754944e-38, %v1347
        %v1349 = vsel %vm1346, %v1348, %v1344
        %v1350 = vmul.f32 1.0, %v1349
        %v1351 = vrcp.pop %v1025
        %v1352 = vmul.f32 %v1025, %v1351
        %v1353 = vsub.f32 1.0, %v1352
        %v1354 = vmul.f32 %v1351, %v1353
        %v1355 = vadd.f32 %v1351, %v1354
        %vm1356 = vweird.f32 %v1025
        %vm1357 = vweird.f32 %v1351
        %vm1358 = vmor %vm1356, %vm1357
        %v1359 = vsel %vm1358, %v1351, %v1355
        %v1360 = vand.u32 2147483647, %v1025
        %vm1361 = vcmp.eq.f32.partialorder %v1360, 8.507059e+37
        %v1362 = vand.u32 %v1025, 2147483648
        %v1363 = vor.u32 1.1754944e-38, %v1362
        %v1364 = vsel %vm1361, %v1363, %v1359
        %v1365 = vmul.f32 1.0, %v1364
        %v1366 = vrcp.pop %v1026
        %v1367 = vmul.f32 %v1026, %v1366
        %v1368 = vsub.f32 1.0, %v1367
        %v1369 = vmul.f32 %v1366, %v1368
        %v1370 = vadd.f32 %v1366, %v1369
        %vm1371 = vweird.f32 %v1026
        %vm1372 = vweird.f32 %v1366
        %vm1373 = vmor %vm1371, %vm1372
        %v1374 = vsel %vm1373, %v1366, %v1370
        %v1375 = vand.u32 2147483647, %v1026
        %vm1376 = vcmp.eq.f32.partialorder %v1375, 8.507059e+37
        %v1377 = vand.u32 %v1026, 2147483648
        %v1378 = vor.u32 1.1754944e-38, %v1377
        %v1379 = vsel %vm1376, %v1378, %v1374
        %v1380 = vmul.f32 1.0, %v1379
        %v1381 = vrcp.pop %v1027
        %v1382 = vmul.f32 %v1027, %v1381
        %v1383 = vsub.f32 1.0, %v1382
        %v1384 = vmul.f32 %v1381, %v1383
        %v1385 = vadd.f32 %v1381, %v1384
        %vm1386 = vweird.f32 %v1027
        %vm1387 = vweird.f32 %v1381
        %vm1388 = vmor %vm1386, %vm1387
        %v1389 = vsel %vm1388, %v1381, %v1385
        %v1390 = vand.u32 2147483647, %v1027
        %vm1391 = vcmp.eq.f32.partialorder %v1390, 8.507059e+37
        %v1392 = vand.u32 %v1027, 2147483648
        %v1393 = vor.u32 1.1754944e-38, %v1392
        %v1394 = vsel %vm1391, %v1393, %v1389
        %v1395 = vmul.f32 1.0, %v1394
        %v1396 = vrcp.pop %v1028
        %v1397 = vmul.f32 %v1028, %v1396
        %v1398 = vsub.f32 1.0, %v1397
        %v1399 = vmul.f32 %v1396, %v1398
        %v1400 = vadd.f32 %v1396, %v1399
        %vm1401 = vweird.f32 %v1028
        %vm1402 = vweird.f32 %v1396
        %vm1403 = vmor %vm1401, %vm1402
        %v1404 = vsel %vm1403, %v1396, %v1400
        %v1405 = vand.u32 2147483647, %v1028
        %vm1406 = vcmp.eq.f32.partialorder %v1405, 8.507059e+37
        %v1407 = vand.u32 %v1028, 2147483648
        %v1408 = vor.u32 1.1754944e-38, %v1407
        %v1409 = vsel %vm1406, %v1408, %v1404
        %v1410 = vmul.f32 1.0, %v1409
        %v1411 = vrcp.pop %v1029
        %v1412 = vmul.f32 %v1029, %v1411
        %v1413 = vsub.f32 1.0, %v1412
        %v1414 = vmul.f32 %v1411, %v1413
        %v1415 = vadd.f32 %v1411, %v1414
        %vm1416 = vweird.f32 %v1029
        %vm1417 = vweird.f32 %v1411
        %vm1418 = vmor %vm1416, %vm1417
        %v1419 = vsel %vm1418, %v1411, %v1415
        %v1420 = vand.u32 2147483647, %v1029
        %vm1421 = vcmp.eq.f32.partialorder %v1420, 8.507059e+37
        %v1422 = vand.u32 %v1029, 2147483648
        %v1423 = vor.u32 1.1754944e-38, %v1422
        %v1424 = vsel %vm1421, %v1423, %v1419
        %v1425 = vmul.f32 1.0, %v1424
        %v1426 = vrcp.pop %v1030
        %v1427 = vmul.f32 %v1030, %v1426
        %v1428 = vsub.f32 1.0, %v1427
        %v1429 = vmul.f32 %v1426, %v1428
        %v1430 = vadd.f32 %v1426, %v1429
        %vm1431 = vweird.f32 %v1030
        %vm1432 = vweird.f32 %v1426
        %vm1433 = vmor %vm1431, %vm1432
        %v1434 = vsel %vm1433, %v1426, %v1430
        %v1435 = vand.u32 2147483647, %v1030
        %vm1436 = vcmp.eq.f32.partialorder %v1435, 8.507059e+37
        %v1437 = vand.u32 %v1030, 2147483648
        %v1438 = vor.u32 1.1754944e-38, %v1437
        %v1439 = vsel %vm1436, %v1438, %v1434
        %v1440 = vmul.f32 1.0, %v1439
        %v1441 = vrcp.pop %v1031
        %v1442 = vmul.f32 %v1031, %v1441
        %v1443 = vsub.f32 1.0, %v1442
        %v1444 = vmul.f32 %v1441, %v1443
        %v1445 = vadd.f32 %v1441, %v1444
        %vm1446 = vweird.f32 %v1031
        %vm1447 = vweird.f32 %v1441
        %vm1448 = vmor %vm1446, %vm1447
        %v1449 = vsel %vm1448, %v1441, %v1445
        %v1450 = vand.u32 2147483647, %v1031
        %vm1451 = vcmp.eq.f32.partialorder %v1450, 8.507059e+37
        %v1452 = vand.u32 %v1031, 2147483648
        %v1453 = vor.u32 1.1754944e-38, %v1452
        %v1454 = vsel %vm1451, %v1453, %v1449
        %v1455 = vmul.f32 1.0, %v1454
        %v1456 = vrcp.pop %v1032
        %v1457 = vmul.f32 %v1032, %v1456
        %v1458 = vsub.f32 1.0, %v1457
        %v1459 = vmul.f32 %v1456, %v1458
        %v1460 = vadd.f32 %v1456, %v1459
        %vm1461 = vweird.f32 %v1032
        %vm1462 = vweird.f32 %v1456
        %vm1463 = vmor %vm1461, %vm1462
        %v1464 = vsel %vm1463, %v1456, %v1460
        %v1465 = vand.u32 2147483647, %v1032
        %vm1466 = vcmp.eq.f32.partialorder %v1465, 8.507059e+37
        %v1467 = vand.u32 %v1032, 2147483648
        %v1468 = vor.u32 1.1754944e-38, %v1467
        %v1469 = vsel %vm1466, %v1468, %v1464
        %v1470 = vmul.f32 1.0, %v1469
        %v1471 = vrcp.pop %v1033
        %v1472 = vmul.f32 %v1033, %v1471
        %v1473 = vsub.f32 1.0, %v1472
        %v1474 = vmul.f32 %v1471, %v1473
        %v1475 = vadd.f32 %v1471, %v1474
        %vm1476 = vweird.f32 %v1033
        %vm1477 = vweird.f32 %v1471
        %vm1478 = vmor %vm1476, %vm1477
        %v1479 = vsel %vm1478, %v1471, %v1475
        %v1480 = vand.u32 2147483647, %v1033
        %vm1481 = vcmp.eq.f32.partialorder %v1480, 8.507059e+37
        %v1482 = vand.u32 %v1033, 2147483648
        %v1483 = vor.u32 1.1754944e-38, %v1482
        %v1484 = vsel %vm1481, %v1483, %v1479
        %v1485 = vmul.f32 1.0, %v1484
        %v1486 = vrcp.pop %v1034
        %v1487 = vmul.f32 %v1034, %v1486
        %v1488 = vsub.f32 1.0, %v1487
        %v1489 = vmul.f32 %v1486, %v1488
        %v1490 = vadd.f32 %v1486, %v1489
        %vm1491 = vweird.f32 %v1034
        %vm1492 = vweird.f32 %v1486
        %vm1493 = vmor %vm1491, %vm1492
        %v1494 = vsel %vm1493, %v1486, %v1490
        %v1495 = vand.u32 2147483647, %v1034
        %vm1496 = vcmp.eq.f32.partialorder %v1495, 8.507059e+37
        %v1497 = vand.u32 %v1034, 2147483648
        %v1498 = vor.u32 1.1754944e-38, %v1497
        %v1499 = vsel %vm1496, %v1498, %v1494
        %v1500 = vmul.f32 1.0, %v1499
        %v1501 = vrcp.pop %v1035
        %v1502 = vmul.f32 %v1035, %v1501
        %v1503 = vsub.f32 1.0, %v1502
        %v1504 = vmul.f32 %v1501, %v1503
        %v1505 = vadd.f32 %v1501, %v1504
        %vm1506 = vweird.f32 %v1035
        %vm1507 = vweird.f32 %v1501
        %vm1508 = vmor %vm1506, %vm1507
        %v1509 = vsel %vm1508, %v1501, %v1505
        %v1510 = vand.u32 2147483647, %v1035
        %vm1511 = vcmp.eq.f32.partialorder %v1510, 8.507059e+37
        %v1512 = vand.u32 %v1035, 2147483648
        %v1513 = vor.u32 1.1754944e-38, %v1512
        %v1514 = vsel %vm1511, %v1513, %v1509
        %v1515 = vmul.f32 1.0, %v1514
        %v1516 = vmul.f32 %v1050, %v743
        %v1517 = vmul.f32 %v1065, %v744
        %v1518 = vmul.f32 %v1080, %v745
        %v1519 = vmul.f32 %v1095, %v746
        %v1520 = vmul.f32 %v1110, %v747
        %v1521 = vmul.f32 %v1125, %v748
        %v1522 = vmul.f32 %v1140, %v749
        %v1523 = vmul.f32 %v1155, %v750
        %v1524 = vmul.f32 %v1170, %v751
        %v1525 = vmul.f32 %v1185, %v752
        %v1526 = vmul.f32 %v1200, %v753
        %v1527 = vmul.f32 %v1215, %v754
        %v1528 = vmul.f32 %v1230, %v755
        %v1529 = vmul.f32 %v1245, %v756
        %v1530 = vmul.f32 %v1260, %v757
        %v1531 = vmul.f32 %v1275, %v758
        %v1532 = vmul.f32 %v1290, %v759
        %v1533 = vmul.f32 %v1305, %v760
        %v1534 = vmul.f32 %v1320, %v761
        %v1535 = vmul.f32 %v1335, %v762
        %v1536 = vmul.f32 %v1350, %v763
        %v1537 = vmul.f32 %v1365, %v764
        %v1538 = vmul.f32 %v1380, %v765
        %v1539 = vmul.f32 %v1395, %v766
        %v1540 = vmul.f32 %v1410, %v767
        %v1541 = vmul.f32 %v1425, %v768
        %v1542 = vmul.f32 %v1440, %v769
        %v1543 = vmul.f32 %v1455, %v770
        %v1544 = vmul.f32 %v1470, %v771
        %v1545 = vmul.f32 %v1485, %v772
        %v1546 = vmul.f32 %v1500, %v773
        %v1547 = vmul.f32 %v1515, %v774
        %s1548 = scalar_lea.vmem %s5, %s227
        %1549 = vst.msk [vmem:[%s1548] sm:$0xff] %vm811, %v1516
        %1550 = vst.msk [vmem:[%s1548 + $0x8] sm:$0xff] %vm811, %v1517
        %1551 = vst.msk [vmem:[%s1548 + $0x10] sm:$0xff] %vm811, %v1518
        %1552 = vst.msk [vmem:[%s1548 + $0x18] sm:$0xff] %vm811, %v1519
        %1553 = vst.msk [vmem:[%s1548 + $0x20] sm:$0xff] %vm811, %v1520
        %1554 = vst.msk [vmem:[%s1548 + $0x28] sm:$0xff] %vm811, %v1521
        %1555 = vst.msk [vmem:[%s1548 + $0x30] sm:$0xff] %vm811, %v1522
        %1556 = vst.msk [vmem:[%s1548 + $0x38] sm:$0xff] %vm811, %v1523
        %1557 = vst.msk [vmem:[%s1548 + $0x40] sm:$0xff] %vm811, %v1524
        %1558 = vst.msk [vmem:[%s1548 + $0x48] sm:$0xff] %vm811, %v1525
        %1559 = vst.msk [vmem:[%s1548 + $0x50] sm:$0xff] %vm811, %v1526
        %1560 = vst.msk [vmem:[%s1548 + $0x58] sm:$0xff] %vm811, %v1527
        %1561 = vst.msk [vmem:[%s1548 + $0x60] sm:$0xff] %vm811, %v1528
        %1562 = vst.msk [vmem:[%s1548 + $0x68] sm:$0xff] %vm811, %v1529
        %1563 = vst.msk [vmem:[%s1548 + $0x70] sm:$0xff] %vm811, %v1530
        %1564 = vst.msk [vmem:[%s1548 + $0x78] sm:$0xff] %vm811, %v1531
        %1565 = vst.msk [vmem:[%s1548 + $0x80] sm:$0xff] %vm811, %v1532
        %1566 = vst.msk [vmem:[%s1548 + $0x88] sm:$0xff] %vm811, %v1533
        %1567 = vst.msk [vmem:[%s1548 + $0x90] sm:$0xff] %vm811, %v1534
        %1568 = vst.msk [vmem:[%s1548 + $0x98] sm:$0xff] %vm811, %v1535
        %1569 = vst.msk [vmem:[%s1548 + $0xa0] sm:$0xff] %vm811, %v1536
        %1570 = vst.msk [vmem:[%s1548 + $0xa8] sm:$0xff] %vm811, %v1537
        %1571 = vst.msk [vmem:[%s1548 + $0xb0] sm:$0xff] %vm811, %v1538
        %1572 = vst.msk [vmem:[%s1548 + $0xb8] sm:$0xff] %vm811, %v1539
        %1573 = vst.msk [vmem:[%s1548 + $0xc0] sm:$0xff] %vm811, %v1540
        %1574 = vst.msk [vmem:[%s1548 + $0xc8] sm:$0xff] %vm811, %v1541
        %1575 = vst.msk [vmem:[%s1548 + $0xd0] sm:$0xff] %vm811, %v1542
        %1576 = vst.msk [vmem:[%s1548 + $0xd8] sm:$0xff] %vm811, %v1543
        %1577 = vst.msk [vmem:[%s1548 + $0xe0] sm:$0xff] %vm811, %v1544
        %1578 = vst.msk [vmem:[%s1548 + $0xe8] sm:$0xff] %vm811, %v1545
        %1579 = vst.msk [vmem:[%s1548 + $0xf0] sm:$0xff] %vm811, %v1546
        %1580 = vst.msk [vmem:[%s1548 + $0xf8] sm:$0xff] %vm811, %v1547
        %p1581 = scmp.lt.s32.totalorder %s20, 0
        %s1582 = ssub.s32 0, %s20
        %s1583 = scalar_select %p1581, %s1582, %s20
        %s1584 = sand.u32 %s1583, 1
        %s1585 = ssub.s32 0, %s1584
        %s1586 = scalar_select %p1581, %s1585, %s1584
        %s1587 = smul.u32 %s1586, 256
        %s1588 = sadd.s32 %s1587, %s227
        %v1589 = vpack.c.bf16 %v743, %v743
        %v1590 = vpack.c.bf16 %v744, %v744
        %v1591 = vpack.c.bf16 %v745, %v745
        %v1592 = vpack.c.bf16 %v746, %v746
        %v1593 = vpack.c.bf16 %v747, %v747
        %v1594 = vpack.c.bf16 %v748, %v748
        %v1595 = vpack.c.bf16 %v749, %v749
        %v1596 = vpack.c.bf16 %v750, %v750
        %v1597 = vpack.c.bf16 %v751, %v751
        %v1598 = vpack.c.bf16 %v752, %v752
        %v1599 = vpack.c.bf16 %v753, %v753
        %v1600 = vpack.c.bf16 %v754, %v754
        %v1601 = vpack.c.bf16 %v755, %v755
        %v1602 = vpack.c.bf16 %v756, %v756
        %v1603 = vpack.c.bf16 %v757, %v757
        %v1604 = vpack.c.bf16 %v758, %v758
        %v1605 = vpack.c.bf16 %v759, %v759
        %v1606 = vpack.c.bf16 %v760, %v760
        %v1607 = vpack.c.bf16 %v761, %v761
        %v1608 = vpack.c.bf16 %v762, %v762
        %v1609 = vpack.c.bf16 %v763, %v763
        %v1610 = vpack.c.bf16 %v764, %v764
        %v1611 = vpack.c.bf16 %v765, %v765
        %v1612 = vpack.c.bf16 %v766, %v766
        %v1613 = vpack.c.bf16 %v767, %v767
        %v1614 = vpack.c.bf16 %v768, %v768
        %v1615 = vpack.c.bf16 %v769, %v769
        %v1616 = vpack.c.bf16 %v770, %v770
        %v1617 = vpack.c.bf16 %v771, %v771
        %v1618 = vpack.c.bf16 %v772, %v772
        %v1619 = vpack.c.bf16 %v773, %v773
        %v1620 = vpack.c.bf16 %v774, %v774
        %s1621 = sshra.s32 %s1588, 3
        %s1622 = sand.u32 %s1588, 7
        %s1623 = smul.addr %s1621, 4
        %s1624 = scalar_lea.vmem [#allocation2], %s1623
        %vm1625 = vcmask 125952
        %1626 = vst.msk [vmem:[%s1624] sm:$0xf] %vm1625, %v1589
        %1627 = vst.msk [vmem:[%s1624 + $0x4] sm:$0xf] %vm1625, %v1590
        %1628 = vst.msk [vmem:[%s1624 + $0x8] sm:$0xf] %vm1625, %v1591
        %1629 = vst.msk [vmem:[%s1624 + $0xc] sm:$0xf] %vm1625, %v1592
        %1630 = vst.msk [vmem:[%s1624 + $0x10] sm:$0xf] %vm1625, %v1593
        %1631 = vst.msk [vmem:[%s1624 + $0x14] sm:$0xf] %vm1625, %v1594
        %1632 = vst.msk [vmem:[%s1624 + $0x18] sm:$0xf] %vm1625, %v1595
        %1633 = vst.msk [vmem:[%s1624 + $0x1c] sm:$0xf] %vm1625, %v1596
        %1634 = vst.msk [vmem:[%s1624 + $0x20] sm:$0xf] %vm1625, %v1597
        %1635 = vst.msk [vmem:[%s1624 + $0x24] sm:$0xf] %vm1625, %v1598
        %1636 = vst.msk [vmem:[%s1624 + $0x28] sm:$0xf] %vm1625, %v1599
        %1637 = vst.msk [vmem:[%s1624 + $0x2c] sm:$0xf] %vm1625, %v1600
        %1638 = vst.msk [vmem:[%s1624 + $0x30] sm:$0xf] %vm1625, %v1601
        %1639 = vst.msk [vmem:[%s1624 + $0x34] sm:$0xf] %vm1625, %v1602
        %1640 = vst.msk [vmem:[%s1624 + $0x38] sm:$0xf] %vm1625, %v1603
        %1641 = vst.msk [vmem:[%s1624 + $0x3c] sm:$0xf] %vm1625, %v1604
        %1642 = vst.msk [vmem:[%s1624 + $0x40] sm:$0xf] %vm1625, %v1605
        %1643 = vst.msk [vmem:[%s1624 + $0x44] sm:$0xf] %vm1625, %v1606
        %1644 = vst.msk [vmem:[%s1624 + $0x48] sm:$0xf] %vm1625, %v1607
        %1645 = vst.msk [vmem:[%s1624 + $0x4c] sm:$0xf] %vm1625, %v1608
        %1646 = vst.msk [vmem:[%s1624 + $0x50] sm:$0xf] %vm1625, %v1609
        %1647 = vst.msk [vmem:[%s1624 + $0x54] sm:$0xf] %vm1625, %v1610
        %1648 = vst.msk [vmem:[%s1624 + $0x58] sm:$0xf] %vm1625, %v1611
        %1649 = vst.msk [vmem:[%s1624 + $0x5c] sm:$0xf] %vm1625, %v1612
        %1650 = vst.msk [vmem:[%s1624 + $0x60] sm:$0xf] %vm1625, %v1613
        %1651 = vst.msk [vmem:[%s1624 + $0x64] sm:$0xf] %vm1625, %v1614
        %1652 = vst.msk [vmem:[%s1624 + $0x68] sm:$0xf] %vm1625, %v1615
        %1653 = vst.msk [vmem:[%s1624 + $0x6c] sm:$0xf] %vm1625, %v1616
        %1654 = vst.msk [vmem:[%s1624 + $0x70] sm:$0xf] %vm1625, %v1617
        %1655 = vst.msk [vmem:[%s1624 + $0x74] sm:$0xf] %vm1625, %v1618
        %1656 = vst.msk [vmem:[%s1624 + $0x78] sm:$0xf] %vm1625, %v1619
        %1657 = vst.msk [vmem:[%s1624 + $0x7c] sm:$0xf] %vm1625, %v1620
      $region52: #{tpu_custom_call.1} parent=35 // pred_fallthru
        _
      %p1658 = scmp.gt.s32.totalorder %s20, 0
      // Predicated region
      $region53: #{tpu_custom_call.1} parent=35 // pred_check
        %p1659 = pneg %p1658
      $region54: #{tpu_custom_call.1} parent=35 // pred_check_branch
        %1661 = sbr.rel (%p1659) target = $region56
      $region55: #{tpu_custom_call.1} parent=35 // pred_region
        %p1662 = scmp.lt.s32.totalorder %s20, 0
        %s1663 = ssub.s32 0, %s20
        %s1664 = scalar_select %p1662, %s1663, %s20
        %s1665 = sand.u32 %s1664, 1
        %s1666 = ssub.s32 0, %s1665
        %s1667 = scalar_select %p1662, %s1666, %s1665
        %s1668 = ssub.s32 1, %s1667
        %s1669 = smul.u32 %s1668, 256
        %s1670 = sshra.s32 %s1669, 3
        %s1671 = sand.u32 %s1669, 7
        %s1672 = smul.addr %s1670, 4
        %s1673 = scalar_lea.vmem [#allocation2], %s1672
        %v1674 = vld [vmem:[%s1673] sm:$0xf]
        %v1675 = vld [vmem:[%s1673 + $0x4] sm:$0xf]
        %v1676 = vld [vmem:[%s1673 + $0x8] sm:$0xf]
        %v1677 = vld [vmem:[%s1673 + $0xc] sm:$0xf]
        %v1678 = vld [vmem:[%s1673 + $0x10] sm:$0xf]
        %v1679 = vld [vmem:[%s1673 + $0x14] sm:$0xf]
        %v1680 = vld [vmem:[%s1673 + $0x18] sm:$0xf]
        %v1681 = vld [vmem:[%s1673 + $0x1c] sm:$0xf]
        %v1682 = vld [vmem:[%s1673 + $0x20] sm:$0xf]
        %v1683 = vld [vmem:[%s1673 + $0x24] sm:$0xf]
        %v1684 = vld [vmem:[%s1673 + $0x28] sm:$0xf]
        %v1685 = vld [vmem:[%s1673 + $0x2c] sm:$0xf]
        %v1686 = vld [vmem:[%s1673 + $0x30] sm:$0xf]
        %v1687 = vld [vmem:[%s1673 + $0x34] sm:$0xf]
        %v1688 = vld [vmem:[%s1673 + $0x38] sm:$0xf]
        %v1689 = vld [vmem:[%s1673 + $0x3c] sm:$0xf]
        %v1690 = vld [vmem:[%s1673 + $0x40] sm:$0xf]
        %v1691 = vld [vmem:[%s1673 + $0x44] sm:$0xf]
        %v1692 = vld [vmem:[%s1673 + $0x48] sm:$0xf]
        %v1693 = vld [vmem:[%s1673 + $0x4c] sm:$0xf]
        %v1694 = vld [vmem:[%s1673 + $0x50] sm:$0xf]
        %v1695 = vld [vmem:[%s1673 + $0x54] sm:$0xf]
        %v1696 = vld [vmem:[%s1673 + $0x58] sm:$0xf]
        %v1697 = vld [vmem:[%s1673 + $0x5c] sm:$0xf]
        %v1698 = vld [vmem:[%s1673 + $0x60] sm:$0xf]
        %v1699 = vld [vmem:[%s1673 + $0x64] sm:$0xf]
        %v1700 = vld [vmem:[%s1673 + $0x68] sm:$0xf]
        %v1701 = vld [vmem:[%s1673 + $0x6c] sm:$0xf]
        %v1702 = vld [vmem:[%s1673 + $0x70] sm:$0xf]
        %v1703 = vld [vmem:[%s1673 + $0x74] sm:$0xf]
        %v1704 = vld [vmem:[%s1673 + $0x78] sm:$0xf]
        %v1705 = vld [vmem:[%s1673 + $0x7c] sm:$0xf]
        %s1706 = sshra.s32 %s227, 3
        %s1707 = sand.u32 %s227, 7
        %s1708 = smul.u32 %s1706, 2
        %s1709 = smul.addr %s1708, 4
        %s1710 = scalar_lea.vmem [#allocation3], %s1709
        %v1711 = vld [vmem:[%s1710] sm:$0xff]
        %v1712 = vld [vmem:[%s1710 + $0x8] sm:$0xff]
        %v1713 = vld [vmem:[%s1710 + $0x10] sm:$0xff]
        %v1714 = vld [vmem:[%s1710 + $0x18] sm:$0xff]
        %v1715 = vld [vmem:[%s1710 + $0x20] sm:$0xff]
        %v1716 = vld [vmem:[%s1710 + $0x28] sm:$0xff]
        %v1717 = vld [vmem:[%s1710 + $0x30] sm:$0xff]
        %v1718 = vld [vmem:[%s1710 + $0x38] sm:$0xff]
        %v1719 = vld [vmem:[%s1710 + $0x40] sm:$0xff]
        %v1720 = vld [vmem:[%s1710 + $0x48] sm:$0xff]
        %v1721 = vld [vmem:[%s1710 + $0x50] sm:$0xff]
        %v1722 = vld [vmem:[%s1710 + $0x58] sm:$0xff]
        %v1723 = vld [vmem:[%s1710 + $0x60] sm:$0xff]
        %v1724 = vld [vmem:[%s1710 + $0x68] sm:$0xff]
        %v1725 = vld [vmem:[%s1710 + $0x70] sm:$0xff]
        %v1726 = vld [vmem:[%s1710 + $0x78] sm:$0xff]
        %v1727 = vld [vmem:[%s1710 + $0x80] sm:$0xff]
        %v1728 = vld [vmem:[%s1710 + $0x88] sm:$0xff]
        %v1729 = vld [vmem:[%s1710 + $0x90] sm:$0xff]
        %v1730 = vld [vmem:[%s1710 + $0x98] sm:$0xff]
        %v1731 = vld [vmem:[%s1710 + $0xa0] sm:$0xff]
        %v1732 = vld [vmem:[%s1710 + $0xa8] sm:$0xff]
        %v1733 = vld [vmem:[%s1710 + $0xb0] sm:$0xff]
        %v1734 = vld [vmem:[%s1710 + $0xb8] sm:$0xff]
        %v1735 = vld [vmem:[%s1710 + $0xc0] sm:$0xff]
        %v1736 = vld [vmem:[%s1710 + $0xc8] sm:$0xff]
        %v1737 = vld [vmem:[%s1710 + $0xd0] sm:$0xff]
        %v1738 = vld [vmem:[%s1710 + $0xd8] sm:$0xff]
        %v1739 = vld [vmem:[%s1710 + $0xe0] sm:$0xff]
        %v1740 = vld [vmem:[%s1710 + $0xe8] sm:$0xff]
        %v1741 = vld [vmem:[%s1710 + $0xf0] sm:$0xff]
        %v1742 = vld [vmem:[%s1710 + $0xf8] sm:$0xff]
        %v1775 = vunpack.c.l.b16 %v1711
        %v1776 = vunpack.c.h.b16 %v1711
        %v1777 = vunpack.c.l.b16 %v1712
        %v1778 = vunpack.c.h.b16 %v1712
        %v1779 = vunpack.c.l.b16 %v1713
        %v1780 = vunpack.c.h.b16 %v1713
        %v1781 = vunpack.c.l.b16 %v1714
        %v1782 = vunpack.c.h.b16 %v1714
        %v1783 = vunpack.c.l.b16 %v1715
        %v1784 = vunpack.c.h.b16 %v1715
        %v1785 = vunpack.c.l.b16 %v1716
        %v1786 = vunpack.c.h.b16 %v1716
        %v1787 = vunpack.c.l.b16 %v1717
        %v1788 = vunpack.c.h.b16 %v1717
        %v1789 = vunpack.c.l.b16 %v1718
        %v1790 = vunpack.c.h.b16 %v1718
        %v1791 = vunpack.c.l.b16 %v1719
        %v1792 = vunpack.c.h.b16 %v1719
        %v1793 = vunpack.c.l.b16 %v1720
        %v1794 = vunpack.c.h.b16 %v1720
        %v1795 = vunpack.c.l.b16 %v1721
        %v1796 = vunpack.c.h.b16 %v1721
        %v1797 = vunpack.c.l.b16 %v1722
        %v1798 = vunpack.c.h.b16 %v1722
        %v1799 = vunpack.c.l.b16 %v1723
        %v1800 = vunpack.c.h.b16 %v1723
        %v1801 = vunpack.c.l.b16 %v1724
        %v1802 = vunpack.c.h.b16 %v1724
        %v1803 = vunpack.c.l.b16 %v1725
        %v1804 = vunpack.c.h.b16 %v1725
        %v1805 = vunpack.c.l.b16 %v1726
        %v1806 = vunpack.c.h.b16 %v1726
        %v1807 = vunpack.c.l.b16 %v1727
        %v1808 = vunpack.c.h.b16 %v1727
        %v1809 = vunpack.c.l.b16 %v1728
        %v1810 = vunpack.c.h.b16 %v1728
        %v1811 = vunpack.c.l.b16 %v1729
        %v1812 = vunpack.c.h.b16 %v1729
        %v1813 = vunpack.c.l.b16 %v1730
        %v1814 = vunpack.c.h.b16 %v1730
        %v1815 = vunpack.c.l.b16 %v1731
        %v1816 = vunpack.c.h.b16 %v1731
        %v1817 = vunpack.c.l.b16 %v1732
        %v1818 = vunpack.c.h.b16 %v1732
        %v1819 = vunpack.c.l.b16 %v1733
        %v1820 = vunpack.c.h.b16 %v1733
        %v1821 = vunpack.c.l.b16 %v1734
        %v1822 = vunpack.c.h.b16 %v1734
        %v1823 = vunpack.c.l.b16 %v1735
        %v1824 = vunpack.c.h.b16 %v1735
        %v1825 = vunpack.c.l.b16 %v1736
        %v1826 = vunpack.c.h.b16 %v1736
        %v1827 = vunpack.c.l.b16 %v1737
        %v1828 = vunpack.c.h.b16 %v1737
        %v1829 = vunpack.c.l.b16 %v1738
        %v1830 = vunpack.c.h.b16 %v1738
        %v1831 = vunpack.c.l.b16 %v1739
        %v1832 = vunpack.c.h.b16 %v1739
        %v1833 = vunpack.c.l.b16 %v1740
        %v1834 = vunpack.c.h.b16 %v1740
        %v1835 = vunpack.c.l.b16 %v1741
        %v1836 = vunpack.c.h.b16 %v1741
        %v1837 = vunpack.c.l.b16 %v1742
        %v1838 = vunpack.c.h.b16 %v1742
        %v1839 = vpack.c.b16 %v1777, %v1775
        %v1840 = vpack.c.b16 %v1778, %v1776
        %v1841 = vpack.c.b16 %v1781, %v1779
        %v1842 = vpack.c.b16 %v1782, %v1780
        %v1843 = vpack.c.b16 %v1785, %v1783
        %v1844 = vpack.c.b16 %v1786, %v1784
        %v1845 = vpack.c.b16 %v1789, %v1787
        %v1846 = vpack.c.b16 %v1790, %v1788
        %v1847 = vpack.c.b16 %v1793, %v1791
        %v1848 = vpack.c.b16 %v1794, %v1792
        %v1849 = vpack.c.b16 %v1797, %v1795
        %v1850 = vpack.c.b16 %v1798, %v1796
        %v1851 = vpack.c.b16 %v1801, %v1799
        %v1852 = vpack.c.b16 %v1802, %v1800
        %v1853 = vpack.c.b16 %v1805, %v1803
        %v1854 = vpack.c.b16 %v1806, %v1804
        %v1855 = vpack.c.b16 %v1809, %v1807
        %v1856 = vpack.c.b16 %v1810, %v1808
        %v1857 = vpack.c.b16 %v1813, %v1811
        %v1858 = vpack.c.b16 %v1814, %v1812
        %v1859 = vpack.c.b16 %v1817, %v1815
        %v1860 = vpack.c.b16 %v1818, %v1816
        %v1861 = vpack.c.b16 %v1821, %v1819
        %v1862 = vpack.c.b16 %v1822, %v1820
        %v1863 = vpack.c.b16 %v1825, %v1823
        %v1864 = vpack.c.b16 %v1826, %v1824
        %v1865 = vpack.c.b16 %v1829, %v1827
        %v1866 = vpack.c.b16 %v1830, %v1828
        %v1867 = vpack.c.b16 %v1833, %v1831
        %v1868 = vpack.c.b16 %v1834, %v1832
        %v1869 = vpack.c.b16 %v1837, %v1835
        %v1870 = vpack.c.b16 %v1838, %v1836
        %v1935 = vunpack.c.l.b16 %v1674
        %v1936 = vunpack.c.l.b16 %v1675
        %v1937 = vunpack.c.l.b16 %v1676
        %v1938 = vunpack.c.l.b16 %v1677
        %v1939 = vunpack.c.l.b16 %v1678
        %v1940 = vunpack.c.l.b16 %v1679
        %v1941 = vunpack.c.l.b16 %v1680
        %v1942 = vunpack.c.l.b16 %v1681
        %v1943 = vunpack.c.l.b16 %v1682
        %v1944 = vunpack.c.l.b16 %v1683
        %v1945 = vunpack.c.l.b16 %v1684
        %v1946 = vunpack.c.l.b16 %v1685
        %v1947 = vunpack.c.l.b16 %v1686
        %v1948 = vunpack.c.l.b16 %v1687
        %v1949 = vunpack.c.l.b16 %v1688
        %v1950 = vunpack.c.l.b16 %v1689
        %v1951 = vunpack.c.l.b16 %v1690
        %v1952 = vunpack.c.l.b16 %v1691
        %v1953 = vunpack.c.l.b16 %v1692
        %v1954 = vunpack.c.l.b16 %v1693
        %v1955 = vunpack.c.l.b16 %v1694
        %v1956 = vunpack.c.l.b16 %v1695
        %v1957 = vunpack.c.l.b16 %v1696
        %v1958 = vunpack.c.l.b16 %v1697
        %v1959 = vunpack.c.l.b16 %v1698
        %v1960 = vunpack.c.l.b16 %v1699
        %v1961 = vunpack.c.l.b16 %v1700
        %v1962 = vunpack.c.l.b16 %v1701
        %v1963 = vunpack.c.l.b16 %v1702
        %v1964 = vunpack.c.l.b16 %v1703
        %v1965 = vunpack.c.l.b16 %v1704
        %v1966 = vunpack.c.l.b16 %v1705
        %v1967 = vpack.c.b16 %v1936, %v1935
        %v1968 = vpack.c.b16 %v1938, %v1937
        %v1969 = vpack.c.b16 %v1940, %v1939
        %v1970 = vpack.c.b16 %v1942, %v1941
        %v1971 = vpack.c.b16 %v1944, %v1943
        %v1972 = vpack.c.b16 %v1946, %v1945
        %v1973 = vpack.c.b16 %v1948, %v1947
        %v1974 = vpack.c.b16 %v1950, %v1949
        %v1975 = vpack.c.b16 %v1952, %v1951
        %v1976 = vpack.c.b16 %v1954, %v1953
        %v1977 = vpack.c.b16 %v1956, %v1955
        %v1978 = vpack.c.b16 %v1958, %v1957
        %v1979 = vpack.c.b16 %v1960, %v1959
        %v1980 = vpack.c.b16 %v1962, %v1961
        %v1981 = vpack.c.b16 %v1964, %v1963
        %v1982 = vpack.c.b16 %v1966, %v1965
        %1999 = vmatpush.bf16.msra.mxu0 %v1974
        %2000 = vmatpush.bf16.msra.mxu0 %v1973
        %2001 = vmatpush.bf16.msra.mxu0 %v1972
        %2002 = vmatpush.bf16.msra.mxu0 %v1971
        %2003 = vmatpush.bf16.msra.mxu0 %v1970
        %2004 = vmatpush.bf16.msra.mxu0 %v1969
        %2005 = vmatpush.bf16.msra.mxu0 %v1968
        %2006 = vmatpush.bf16.msra.mxu0 %v1967
        %2007 = vmatmul.bf16.gmra.mxu0 %v1839
        %v2008 = vpop.f32.mrf.mxu0
        %v2009 = vadd.f32 0.0, %v2008
        %v2010 = vpop.f32.mrf.mxu0
        %v2011 = vadd.f32 0.0, %v2010
        %2012 = vmatmul.bf16.gmra.mxu0 %v1841
        %v2013 = vpop.f32.mrf.mxu0
        %v2014 = vadd.f32 0.0, %v2013
        %v2015 = vpop.f32.mrf.mxu0
        %v2016 = vadd.f32 0.0, %v2015
        %2017 = vmatmul.bf16.gmra.mxu0 %v1843
        %v2018 = vpop.f32.mrf.mxu0
        %v2019 = vadd.f32 0.0, %v2018
        %v2020 = vpop.f32.mrf.mxu0
        %v2021 = vadd.f32 0.0, %v2020
        %2022 = vmatmul.bf16.gmra.mxu0 %v1845
        %v2023 = vpop.f32.mrf.mxu0
        %v2024 = vadd.f32 0.0, %v2023
        %v2025 = vpop.f32.mrf.mxu0
        %v2026 = vadd.f32 0.0, %v2025
        %2027 = vmatmul.bf16.gmra.mxu0 %v1847
        %v2028 = vpop.f32.mrf.mxu0
        %v2029 = vadd.f32 0.0, %v2028
        %v2030 = vpop.f32.mrf.mxu0
        %v2031 = vadd.f32 0.0, %v2030
        %2032 = vmatmul.bf16.gmra.mxu0 %v1849
        %v2033 = vpop.f32.mrf.mxu0
        %v2034 = vadd.f32 0.0, %v2033
        %v2035 = vpop.f32.mrf.mxu0
        %v2036 = vadd.f32 0.0, %v2035
        %2037 = vmatmul.bf16.gmra.mxu0 %v1851
        %v2038 = vpop.f32.mrf.mxu0
        %v2039 = vadd.f32 0.0, %v2038
        %v2040 = vpop.f32.mrf.mxu0
        %v2041 = vadd.f32 0.0, %v2040
        %2042 = vmatmul.bf16.gmra.mxu0 %v1853
        %v2043 = vpop.f32.mrf.mxu0
        %v2044 = vadd.f32 0.0, %v2043
        %v2045 = vpop.f32.mrf.mxu0
        %v2046 = vadd.f32 0.0, %v2045
        %2047 = vmatmul.bf16.gmra.mxu0 %v1855
        %v2048 = vpop.f32.mrf.mxu0
        %v2049 = vadd.f32 0.0, %v2048
        %v2050 = vpop.f32.mrf.mxu0
        %v2051 = vadd.f32 0.0, %v2050
        %2052 = vmatmul.bf16.gmra.mxu0 %v1857
        %v2053 = vpop.f32.mrf.mxu0
        %v2054 = vadd.f32 0.0, %v2053
        %v2055 = vpop.f32.mrf.mxu0
        %v2056 = vadd.f32 0.0, %v2055
        %2057 = vmatmul.bf16.gmra.mxu0 %v1859
        %v2058 = vpop.f32.mrf.mxu0
        %v2059 = vadd.f32 0.0, %v2058
        %v2060 = vpop.f32.mrf.mxu0
        %v2061 = vadd.f32 0.0, %v2060
        %2062 = vmatmul.bf16.gmra.mxu0 %v1861
        %v2063 = vpop.f32.mrf.mxu0
        %v2064 = vadd.f32 0.0, %v2063
        %v2065 = vpop.f32.mrf.mxu0
        %v2066 = vadd.f32 0.0, %v2065
        %2067 = vmatmul.bf16.gmra.mxu0 %v1863
        %v2068 = vpop.f32.mrf.mxu0
        %v2069 = vadd.f32 0.0, %v2068
        %v2070 = vpop.f32.mrf.mxu0
        %v2071 = vadd.f32 0.0, %v2070
        %2072 = vmatmul.bf16.gmra.mxu0 %v1865
        %v2073 = vpop.f32.mrf.mxu0
        %v2074 = vadd.f32 0.0, %v2073
        %v2075 = vpop.f32.mrf.mxu0
        %v2076 = vadd.f32 0.0, %v2075
        %2077 = vmatmul.bf16.gmra.mxu0 %v1867
        %v2078 = vpop.f32.mrf.mxu0
        %v2079 = vadd.f32 0.0, %v2078
        %v2080 = vpop.f32.mrf.mxu0
        %v2081 = vadd.f32 0.0, %v2080
        %2082 = vmatmul.bf16.gmra.mxu0 %v1869
        %v2083 = vpop.f32.mrf.mxu0
        %v2084 = vadd.f32 0.0, %v2083
        %v2085 = vpop.f32.mrf.mxu0
        %v2086 = vadd.f32 0.0, %v2085
        %2087 = vdwg.mxu0
        %2088 = vmatpush.bf16.msra.mxu0 %v1982
        %2089 = vmatpush.bf16.msra.mxu0 %v1981
        %2090 = vmatpush.bf16.msra.mxu0 %v1980
        %2091 = vmatpush.bf16.msra.mxu0 %v1979
        %2092 = vmatpush.bf16.msra.mxu0 %v1978
        %2093 = vmatpush.bf16.msra.mxu0 %v1977
        %2094 = vmatpush.bf16.msra.mxu0 %v1976
        %2095 = vmatpush.bf16.msra.mxu0 %v1975
        %2096 = vmatmul.bf16.gmra.mxu0 %v1840
        %v2097 = vpop.f32.mrf.mxu0
        %v2098 = vadd.f32 %v2009, %v2097
        %v2099 = vpop.f32.mrf.mxu0
        %v2100 = vadd.f32 %v2011, %v2099
        %2101 = vmatmul.bf16.gmra.mxu0 %v1842
        %v2102 = vpop.f32.mrf.mxu0
        %v2103 = vadd.f32 %v2014, %v2102
        %v2104 = vpop.f32.mrf.mxu0
        %v2105 = vadd.f32 %v2016, %v2104
        %2106 = vmatmul.bf16.gmra.mxu0 %v1844
        %v2107 = vpop.f32.mrf.mxu0
        %v2108 = vadd.f32 %v2019, %v2107
        %v2109 = vpop.f32.mrf.mxu0
        %v2110 = vadd.f32 %v2021, %v2109
        %2111 = vmatmul.bf16.gmra.mxu0 %v1846
        %v2112 = vpop.f32.mrf.mxu0
        %v2113 = vadd.f32 %v2024, %v2112
        %v2114 = vpop.f32.mrf.mxu0
        %v2115 = vadd.f32 %v2026, %v2114
        %2116 = vmatmul.bf16.gmra.mxu0 %v1848
        %v2117 = vpop.f32.mrf.mxu0
        %v2118 = vadd.f32 %v2029, %v2117
        %v2119 = vpop.f32.mrf.mxu0
        %v2120 = vadd.f32 %v2031, %v2119
        %2121 = vmatmul.bf16.gmra.mxu0 %v1850
        %v2122 = vpop.f32.mrf.mxu0
        %v2123 = vadd.f32 %v2034, %v2122
        %v2124 = vpop.f32.mrf.mxu0
        %v2125 = vadd.f32 %v2036, %v2124
        %2126 = vmatmul.bf16.gmra.mxu0 %v1852
        %v2127 = vpop.f32.mrf.mxu0
        %v2128 = vadd.f32 %v2039, %v2127
        %v2129 = vpop.f32.mrf.mxu0
        %v2130 = vadd.f32 %v2041, %v2129
        %2131 = vmatmul.bf16.gmra.mxu0 %v1854
        %v2132 = vpop.f32.mrf.mxu0
        %v2133 = vadd.f32 %v2044, %v2132
        %v2134 = vpop.f32.mrf.mxu0
        %v2135 = vadd.f32 %v2046, %v2134
        %2136 = vmatmul.bf16.gmra.mxu0 %v1856
        %v2137 = vpop.f32.mrf.mxu0
        %v2138 = vadd.f32 %v2049, %v2137
        %v2139 = vpop.f32.mrf.mxu0
        %v2140 = vadd.f32 %v2051, %v2139
        %2141 = vmatmul.bf16.gmra.mxu0 %v1858
        %v2142 = vpop.f32.mrf.mxu0
        %v2143 = vadd.f32 %v2054, %v2142
        %v2144 = vpop.f32.mrf.mxu0
        %v2145 = vadd.f32 %v2056, %v2144
        %2146 = vmatmul.bf16.gmra.mxu0 %v1860
        %v2147 = vpop.f32.mrf.mxu0
        %v2148 = vadd.f32 %v2059, %v2147
        %v2149 = vpop.f32.mrf.mxu0
        %v2150 = vadd.f32 %v2061, %v2149
        %2151 = vmatmul.bf16.gmra.mxu0 %v1862
        %v2152 = vpop.f32.mrf.mxu0
        %v2153 = vadd.f32 %v2064, %v2152
        %v2154 = vpop.f32.mrf.mxu0
        %v2155 = vadd.f32 %v2066, %v2154
        %2156 = vmatmul.bf16.gmra.mxu0 %v1864
        %v2157 = vpop.f32.mrf.mxu0
        %v2158 = vadd.f32 %v2069, %v2157
        %v2159 = vpop.f32.mrf.mxu0
        %v2160 = vadd.f32 %v2071, %v2159
        %2161 = vmatmul.bf16.gmra.mxu0 %v1866
        %v2162 = vpop.f32.mrf.mxu0
        %v2163 = vadd.f32 %v2074, %v2162
        %v2164 = vpop.f32.mrf.mxu0
        %v2165 = vadd.f32 %v2076, %v2164
        %2166 = vmatmul.bf16.gmra.mxu0 %v1868
        %v2167 = vpop.f32.mrf.mxu0
        %v2168 = vadd.f32 %v2079, %v2167
        %v2169 = vpop.f32.mrf.mxu0
        %v2170 = vadd.f32 %v2081, %v2169
        %2171 = vmatmul.bf16.gmra.mxu0 %v1870
        %v2172 = vpop.f32.mrf.mxu0
        %v2173 = vadd.f32 %v2084, %v2172
        %v2174 = vpop.f32.mrf.mxu0
        %v2175 = vadd.f32 %v2086, %v2174
        %2176 = vdwg.mxu0
        %v2177 = vld [vmem:[%s3] sm:$0x1]
        %v2179 = vperm.slane %v2177, 0
        %v2181 = vmul.f32 %v2098, %v2179
        %v2182 = vmul.f32 %v2100, %v2179
        %v2183 = vmul.f32 %v2103, %v2179
        %v2184 = vmul.f32 %v2105, %v2179
        %v2185 = vmul.f32 %v2108, %v2179
        %v2186 = vmul.f32 %v2110, %v2179
        %v2187 = vmul.f32 %v2113, %v2179
        %v2188 = vmul.f32 %v2115, %v2179
        %v2189 = vmul.f32 %v2118, %v2179
        %v2190 = vmul.f32 %v2120, %v2179
        %v2191 = vmul.f32 %v2123, %v2179
        %v2192 = vmul.f32 %v2125, %v2179
        %v2193 = vmul.f32 %v2128, %v2179
        %v2194 = vmul.f32 %v2130, %v2179
        %v2195 = vmul.f32 %v2133, %v2179
        %v2196 = vmul.f32 %v2135, %v2179
        %v2197 = vmul.f32 %v2138, %v2179
        %v2198 = vmul.f32 %v2140, %v2179
        %v2199 = vmul.f32 %v2143, %v2179
        %v2200 = vmul.f32 %v2145, %v2179
        %v2201 = vmul.f32 %v2148, %v2179
        %v2202 = vmul.f32 %v2150, %v2179
        %v2203 = vmul.f32 %v2153, %v2179
        %v2204 = vmul.f32 %v2155, %v2179
        %v2205 = vmul.f32 %v2158, %v2179
        %v2206 = vmul.f32 %v2160, %v2179
        %v2207 = vmul.f32 %v2163, %v2179
        %v2208 = vmul.f32 %v2165, %v2179
        %v2209 = vmul.f32 %v2168, %v2179
        %v2210 = vmul.f32 %v2170, %v2179
        %v2211 = vmul.f32 %v2173, %v2179
        %v2212 = vmul.f32 %v2175, %v2179
        %vm2213 = vcmask 130048
        %v2214 = vsel %vm2213, %v2181, 0.0
        %2215 = vadd.xlane.f32.xlu0 %v2214
        %v2216 = vpop.xlane.xlu0 %2215
        %v2217 = vsel %vm2213, %v2182, 0.0
        %2218 = vadd.xlane.f32.xlu0 %v2217
        %v2219 = vpop.xlane.xlu0 %2218
        %v2220 = vsel %vm2213, %v2183, 0.0
        %2221 = vadd.xlane.f32.xlu0 %v2220
        %v2222 = vpop.xlane.xlu0 %2221
        %v2223 = vsel %vm2213, %v2184, 0.0
        %2224 = vadd.xlane.f32.xlu0 %v2223
        %v2225 = vpop.xlane.xlu0 %2224
        %v2226 = vsel %vm2213, %v2185, 0.0
        %2227 = vadd.xlane.f32.xlu0 %v2226
        %v2228 = vpop.xlane.xlu0 %2227
        %v2229 = vsel %vm2213, %v2186, 0.0
        %2230 = vadd.xlane.f32.xlu0 %v2229
        %v2231 = vpop.xlane.xlu0 %2230
        %v2232 = vsel %vm2213, %v2187, 0.0
        %2233 = vadd.xlane.f32.xlu0 %v2232
        %v2234 = vpop.xlane.xlu0 %2233
        %v2235 = vsel %vm2213, %v2188, 0.0
        %2236 = vadd.xlane.f32.xlu0 %v2235
        %v2237 = vpop.xlane.xlu0 %2236
        %v2238 = vsel %vm2213, %v2189, 0.0
        %2239 = vadd.xlane.f32.xlu0 %v2238
        %v2240 = vpop.xlane.xlu0 %2239
        %v2241 = vsel %vm2213, %v2190, 0.0
        %2242 = vadd.xlane.f32.xlu0 %v2241
        %v2243 = vpop.xlane.xlu0 %2242
        %v2244 = vsel %vm2213, %v2191, 0.0
        %2245 = vadd.xlane.f32.xlu0 %v2244
        %v2246 = vpop.xlane.xlu0 %2245
        %v2247 = vsel %vm2213, %v2192, 0.0
        %2248 = vadd.xlane.f32.xlu0 %v2247
        %v2249 = vpop.xlane.xlu0 %2248
        %v2250 = vsel %vm2213, %v2193, 0.0
        %2251 = vadd.xlane.f32.xlu0 %v2250
        %v2252 = vpop.xlane.xlu0 %2251
        %v2253 = vsel %vm2213, %v2194, 0.0
        %2254 = vadd.xlane.f32.xlu0 %v2253
        %v2255 = vpop.xlane.xlu0 %2254
        %v2256 = vsel %vm2213, %v2195, 0.0
        %2257 = vadd.xlane.f32.xlu0 %v2256
        %v2258 = vpop.xlane.xlu0 %2257
        %v2259 = vsel %vm2213, %v2196, 0.0
        %2260 = vadd.xlane.f32.xlu0 %v2259
        %v2261 = vpop.xlane.xlu0 %2260
        %v2262 = vsel %vm2213, %v2197, 0.0
        %2263 = vadd.xlane.f32.xlu0 %v2262
        %v2264 = vpop.xlane.xlu0 %2263
        %v2265 = vsel %vm2213, %v2198, 0.0
        %2266 = vadd.xlane.f32.xlu0 %v2265
        %v2267 = vpop.xlane.xlu0 %2266
        %v2268 = vsel %vm2213, %v2199, 0.0
        %2269 = vadd.xlane.f32.xlu0 %v2268
        %v2270 = vpop.xlane.xlu0 %2269
        %v2271 = vsel %vm2213, %v2200, 0.0
        %2272 = vadd.xlane.f32.xlu0 %v2271
        %v2273 = vpop.xlane.xlu0 %2272
        %v2274 = vsel %vm2213, %v2201, 0.0
        %2275 = vadd.xlane.f32.xlu0 %v2274
        %v2276 = vpop.xlane.xlu0 %2275
        %v2277 = vsel %vm2213, %v2202, 0.0
        %2278 = vadd.xlane.f32.xlu0 %v2277
        %v2279 = vpop.xlane.xlu0 %2278
        %v2280 = vsel %vm2213, %v2203, 0.0
        %2281 = vadd.xlane.f32.xlu0 %v2280
        %v2282 = vpop.xlane.xlu0 %2281
        %v2283 = vsel %vm2213, %v2204, 0.0
        %2284 = vadd.xlane.f32.xlu0 %v2283
        %v2285 = vpop.xlane.xlu0 %2284
        %v2286 = vsel %vm2213, %v2205, 0.0
        %2287 = vadd.xlane.f32.xlu0 %v2286
        %v2288 = vpop.xlane.xlu0 %2287
        %v2289 = vsel %vm2213, %v2206, 0.0
        %2290 = vadd.xlane.f32.xlu0 %v2289
        %v2291 = vpop.xlane.xlu0 %2290
        %v2292 = vsel %vm2213, %v2207, 0.0
        %2293 = vadd.xlane.f32.xlu0 %v2292
        %v2294 = vpop.xlane.xlu0 %2293
        %v2295 = vsel %vm2213, %v2208, 0.0
        %2296 = vadd.xlane.f32.xlu0 %v2295
        %v2297 = vpop.xlane.xlu0 %2296
        %v2298 = vsel %vm2213, %v2209, 0.0
        %2299 = vadd.xlane.f32.xlu0 %v2298
        %v2300 = vpop.xlane.xlu0 %2299
        %v2301 = vsel %vm2213, %v2210, 0.0
        %2302 = vadd.xlane.f32.xlu0 %v2301
        %v2303 = vpop.xlane.xlu0 %2302
        %v2304 = vsel %vm2213, %v2211, 0.0
        %2305 = vadd.xlane.f32.xlu0 %v2304
        %v2306 = vpop.xlane.xlu0 %2305
        %v2307 = vsel %vm2213, %v2212, 0.0
        %2308 = vadd.xlane.f32.xlu0 %v2307
        %v2309 = vpop.xlane.xlu0 %2308
        %v2310 = vxor.u32 %v2216, 2147483648
        %v2311 = vxor.u32 %v2219, 2147483648
        %v2312 = vxor.u32 %v2222, 2147483648
        %v2313 = vxor.u32 %v2225, 2147483648
        %v2314 = vxor.u32 %v2228, 2147483648
        %v2315 = vxor.u32 %v2231, 2147483648
        %v2316 = vxor.u32 %v2234, 2147483648
        %v2317 = vxor.u32 %v2237, 2147483648
        %v2318 = vxor.u32 %v2240, 2147483648
        %v2319 = vxor.u32 %v2243, 2147483648
        %v2320 = vxor.u32 %v2246, 2147483648
        %v2321 = vxor.u32 %v2249, 2147483648
        %v2322 = vxor.u32 %v2252, 2147483648
        %v2323 = vxor.u32 %v2255, 2147483648
        %v2324 = vxor.u32 %v2258, 2147483648
        %v2325 = vxor.u32 %v2261, 2147483648
        %v2326 = vxor.u32 %v2264, 2147483648
        %v2327 = vxor.u32 %v2267, 2147483648
        %v2328 = vxor.u32 %v2270, 2147483648
        %v2329 = vxor.u32 %v2273, 2147483648
        %v2330 = vxor.u32 %v2276, 2147483648
        %v2331 = vxor.u32 %v2279, 2147483648
        %v2332 = vxor.u32 %v2282, 2147483648
        %v2333 = vxor.u32 %v2285, 2147483648
        %v2334 = vxor.u32 %v2288, 2147483648
        %v2335 = vxor.u32 %v2291, 2147483648
        %v2336 = vxor.u32 %v2294, 2147483648
        %v2337 = vxor.u32 %v2297, 2147483648
        %v2338 = vxor.u32 %v2300, 2147483648
        %v2339 = vxor.u32 %v2303, 2147483648
        %v2340 = vxor.u32 %v2306, 2147483648
        %v2341 = vxor.u32 %v2309, 2147483648
        %v2342 = vmul.f32 %v2310, 1.442695
        %v2343 = vpow.pop %v2342
        %v2344 = vmul.f32 %v2311, 1.442695
        %v2345 = vpow.pop %v2344
        %v2346 = vmul.f32 %v2312, 1.442695
        %v2347 = vpow.pop %v2346
        %v2348 = vmul.f32 %v2313, 1.442695
        %v2349 = vpow.pop %v2348
        %v2350 = vmul.f32 %v2314, 1.442695
        %v2351 = vpow.pop %v2350
        %v2352 = vmul.f32 %v2315, 1.442695
        %v2353 = vpow.pop %v2352
        %v2354 = vmul.f32 %v2316, 1.442695
        %v2355 = vpow.pop %v2354
        %v2356 = vmul.f32 %v2317, 1.442695
        %v2357 = vpow.pop %v2356
        %v2358 = vmul.f32 %v2318, 1.442695
        %v2359 = vpow.pop %v2358
        %v2360 = vmul.f32 %v2319, 1.442695
        %v2361 = vpow.pop %v2360
        %v2362 = vmul.f32 %v2320, 1.442695
        %v2363 = vpow.pop %v2362
        %v2364 = vmul.f32 %v2321, 1.442695
        %v2365 = vpow.pop %v2364
        %v2366 = vmul.f32 %v2322, 1.442695
        %v2367 = vpow.pop %v2366
        %v2368 = vmul.f32 %v2323, 1.442695
        %v2369 = vpow.pop %v2368
        %v2370 = vmul.f32 %v2324, 1.442695
        %v2371 = vpow.pop %v2370
        %v2372 = vmul.f32 %v2325, 1.442695
        %v2373 = vpow.pop %v2372
        %v2374 = vmul.f32 %v2326, 1.442695
        %v2375 = vpow.pop %v2374
        %v2376 = vmul.f32 %v2327, 1.442695
        %v2377 = vpow.pop %v2376
        %v2378 = vmul.f32 %v2328, 1.442695
        %v2379 = vpow.pop %v2378
        %v2380 = vmul.f32 %v2329, 1.442695
        %v2381 = vpow.pop %v2380
        %v2382 = vmul.f32 %v2330, 1.442695
        %v2383 = vpow.pop %v2382
        %v2384 = vmul.f32 %v2331, 1.442695
        %v2385 = vpow.pop %v2384
        %v2386 = vmul.f32 %v2332, 1.442695
        %v2387 = vpow.pop %v2386
        %v2388 = vmul.f32 %v2333, 1.442695
        %v2389 = vpow.pop %v2388
        %v2390 = vmul.f32 %v2334, 1.442695
        %v2391 = vpow.pop %v2390
        %v2392 = vmul.f32 %v2335, 1.442695
        %v2393 = vpow.pop %v2392
        %v2394 = vmul.f32 %v2336, 1.442695
        %v2395 = vpow.pop %v2394
        %v2396 = vmul.f32 %v2337, 1.442695
        %v2397 = vpow.pop %v2396
        %v2398 = vmul.f32 %v2338, 1.442695
        %v2399 = vpow.pop %v2398
        %v2400 = vmul.f32 %v2339, 1.442695
        %v2401 = vpow.pop %v2400
        %v2402 = vmul.f32 %v2340, 1.442695
        %v2403 = vpow.pop %v2402
        %v2404 = vmul.f32 %v2341, 1.442695
        %v2405 = vpow.pop %v2404
        %v2406 = vadd.f32 %v2343, 1.0
        %v2407 = vadd.f32 %v2345, 1.0
        %v2408 = vadd.f32 %v2347, 1.0
        %v2409 = vadd.f32 %v2349, 1.0
        %v2410 = vadd.f32 %v2351, 1.0
        %v2411 = vadd.f32 %v2353, 1.0
        %v2412 = vadd.f32 %v2355, 1.0
        %v2413 = vadd.f32 %v2357, 1.0
        %v2414 = vadd.f32 %v2359, 1.0
        %v2415 = vadd.f32 %v2361, 1.0
        %v2416 = vadd.f32 %v2363, 1.0
        %v2417 = vadd.f32 %v2365, 1.0
        %v2418 = vadd.f32 %v2367, 1.0
        %v2419 = vadd.f32 %v2369, 1.0
        %v2420 = vadd.f32 %v2371, 1.0
        %v2421 = vadd.f32 %v2373, 1.0
        %v2422 = vadd.f32 %v2375, 1.0
        %v2423 = vadd.f32 %v2377, 1.0
        %v2424 = vadd.f32 %v2379, 1.0
        %v2425 = vadd.f32 %v2381, 1.0
        %v2426 = vadd.f32 %v2383, 1.0
        %v2427 = vadd.f32 %v2385, 1.0
        %v2428 = vadd.f32 %v2387, 1.0
        %v2429 = vadd.f32 %v2389, 1.0
        %v2430 = vadd.f32 %v2391, 1.0
        %v2431 = vadd.f32 %v2393, 1.0
        %v2432 = vadd.f32 %v2395, 1.0
        %v2433 = vadd.f32 %v2397, 1.0
        %v2434 = vadd.f32 %v2399, 1.0
        %v2435 = vadd.f32 %v2401, 1.0
        %v2436 = vadd.f32 %v2403, 1.0
        %v2437 = vadd.f32 %v2405, 1.0
        %v2438 = vrcp.pop %v2406
        %v2439 = vmul.f32 %v2406, %v2438
        %v2440 = vsub.f32 1.0, %v2439
        %v2441 = vmul.f32 %v2438, %v2440
        %v2442 = vadd.f32 %v2438, %v2441
        %vm2443 = vweird.f32 %v2406
        %vm2444 = vweird.f32 %v2438
        %vm2445 = vmor %vm2443, %vm2444
        %v2446 = vsel %vm2445, %v2438, %v2442
        %v2447 = vand.u32 2147483647, %v2406
        %vm2448 = vcmp.eq.f32.partialorder %v2447, 8.507059e+37
        %v2449 = vand.u32 %v2406, 2147483648
        %v2450 = vor.u32 1.1754944e-38, %v2449
        %v2451 = vsel %vm2448, %v2450, %v2446
        %v2452 = vmul.f32 1.0, %v2451
        %v2453 = vrcp.pop %v2407
        %v2454 = vmul.f32 %v2407, %v2453
        %v2455 = vsub.f32 1.0, %v2454
        %v2456 = vmul.f32 %v2453, %v2455
        %v2457 = vadd.f32 %v2453, %v2456
        %vm2458 = vweird.f32 %v2407
        %vm2459 = vweird.f32 %v2453
        %vm2460 = vmor %vm2458, %vm2459
        %v2461 = vsel %vm2460, %v2453, %v2457
        %v2462 = vand.u32 2147483647, %v2407
        %vm2463 = vcmp.eq.f32.partialorder %v2462, 8.507059e+37
        %v2464 = vand.u32 %v2407, 2147483648
        %v2465 = vor.u32 1.1754944e-38, %v2464
        %v2466 = vsel %vm2463, %v2465, %v2461
        %v2467 = vmul.f32 1.0, %v2466
        %v2468 = vrcp.pop %v2408
        %v2469 = vmul.f32 %v2408, %v2468
        %v2470 = vsub.f32 1.0, %v2469
        %v2471 = vmul.f32 %v2468, %v2470
        %v2472 = vadd.f32 %v2468, %v2471
        %vm2473 = vweird.f32 %v2408
        %vm2474 = vweird.f32 %v2468
        %vm2475 = vmor %vm2473, %vm2474
        %v2476 = vsel %vm2475, %v2468, %v2472
        %v2477 = vand.u32 2147483647, %v2408
        %vm2478 = vcmp.eq.f32.partialorder %v2477, 8.507059e+37
        %v2479 = vand.u32 %v2408, 2147483648
        %v2480 = vor.u32 1.1754944e-38, %v2479
        %v2481 = vsel %vm2478, %v2480, %v2476
        %v2482 = vmul.f32 1.0, %v2481
        %v2483 = vrcp.pop %v2409
        %v2484 = vmul.f32 %v2409, %v2483
        %v2485 = vsub.f32 1.0, %v2484
        %v2486 = vmul.f32 %v2483, %v2485
        %v2487 = vadd.f32 %v2483, %v2486
        %vm2488 = vweird.f32 %v2409
        %vm2489 = vweird.f32 %v2483
        %vm2490 = vmor %vm2488, %vm2489
        %v2491 = vsel %vm2490, %v2483, %v2487
        %v2492 = vand.u32 2147483647, %v2409
        %vm2493 = vcmp.eq.f32.partialorder %v2492, 8.507059e+37
        %v2494 = vand.u32 %v2409, 2147483648
        %v2495 = vor.u32 1.1754944e-38, %v2494
        %v2496 = vsel %vm2493, %v2495, %v2491
        %v2497 = vmul.f32 1.0, %v2496
        %v2498 = vrcp.pop %v2410
        %v2499 = vmul.f32 %v2410, %v2498
        %v2500 = vsub.f32 1.0, %v2499
        %v2501 = vmul.f32 %v2498, %v2500
        %v2502 = vadd.f32 %v2498, %v2501
        %vm2503 = vweird.f32 %v2410
        %vm2504 = vweird.f32 %v2498
        %vm2505 = vmor %vm2503, %vm2504
        %v2506 = vsel %vm2505, %v2498, %v2502
        %v2507 = vand.u32 2147483647, %v2410
        %vm2508 = vcmp.eq.f32.partialorder %v2507, 8.507059e+37
        %v2509 = vand.u32 %v2410, 2147483648
        %v2510 = vor.u32 1.1754944e-38, %v2509
        %v2511 = vsel %vm2508, %v2510, %v2506
        %v2512 = vmul.f32 1.0, %v2511
        %v2513 = vrcp.pop %v2411
        %v2514 = vmul.f32 %v2411, %v2513
        %v2515 = vsub.f32 1.0, %v2514
        %v2516 = vmul.f32 %v2513, %v2515
        %v2517 = vadd.f32 %v2513, %v2516
        %vm2518 = vweird.f32 %v2411
        %vm2519 = vweird.f32 %v2513
        %vm2520 = vmor %vm2518, %vm2519
        %v2521 = vsel %vm2520, %v2513, %v2517
        %v2522 = vand.u32 2147483647, %v2411
        %vm2523 = vcmp.eq.f32.partialorder %v2522, 8.507059e+37
        %v2524 = vand.u32 %v2411, 2147483648
        %v2525 = vor.u32 1.1754944e-38, %v2524
        %v2526 = vsel %vm2523, %v2525, %v2521
        %v2527 = vmul.f32 1.0, %v2526
        %v2528 = vrcp.pop %v2412
        %v2529 = vmul.f32 %v2412, %v2528
        %v2530 = vsub.f32 1.0, %v2529
        %v2531 = vmul.f32 %v2528, %v2530
        %v2532 = vadd.f32 %v2528, %v2531
        %vm2533 = vweird.f32 %v2412
        %vm2534 = vweird.f32 %v2528
        %vm2535 = vmor %vm2533, %vm2534
        %v2536 = vsel %vm2535, %v2528, %v2532
        %v2537 = vand.u32 2147483647, %v2412
        %vm2538 = vcmp.eq.f32.partialorder %v2537, 8.507059e+37
        %v2539 = vand.u32 %v2412, 2147483648
        %v2540 = vor.u32 1.1754944e-38, %v2539
        %v2541 = vsel %vm2538, %v2540, %v2536
        %v2542 = vmul.f32 1.0, %v2541
        %v2543 = vrcp.pop %v2413
        %v2544 = vmul.f32 %v2413, %v2543
        %v2545 = vsub.f32 1.0, %v2544
        %v2546 = vmul.f32 %v2543, %v2545
        %v2547 = vadd.f32 %v2543, %v2546
        %vm2548 = vweird.f32 %v2413
        %vm2549 = vweird.f32 %v2543
        %vm2550 = vmor %vm2548, %vm2549
        %v2551 = vsel %vm2550, %v2543, %v2547
        %v2552 = vand.u32 2147483647, %v2413
        %vm2553 = vcmp.eq.f32.partialorder %v2552, 8.507059e+37
        %v2554 = vand.u32 %v2413, 2147483648
        %v2555 = vor.u32 1.1754944e-38, %v2554
        %v2556 = vsel %vm2553, %v2555, %v2551
        %v2557 = vmul.f32 1.0, %v2556
        %v2558 = vrcp.pop %v2414
        %v2559 = vmul.f32 %v2414, %v2558
        %v2560 = vsub.f32 1.0, %v2559
        %v2561 = vmul.f32 %v2558, %v2560
        %v2562 = vadd.f32 %v2558, %v2561
        %vm2563 = vweird.f32 %v2414
        %vm2564 = vweird.f32 %v2558
        %vm2565 = vmor %vm2563, %vm2564
        %v2566 = vsel %vm2565, %v2558, %v2562
        %v2567 = vand.u32 2147483647, %v2414
        %vm2568 = vcmp.eq.f32.partialorder %v2567, 8.507059e+37
        %v2569 = vand.u32 %v2414, 2147483648
        %v2570 = vor.u32 1.1754944e-38, %v2569
        %v2571 = vsel %vm2568, %v2570, %v2566
        %v2572 = vmul.f32 1.0, %v2571
        %v2573 = vrcp.pop %v2415
        %v2574 = vmul.f32 %v2415, %v2573
        %v2575 = vsub.f32 1.0, %v2574
        %v2576 = vmul.f32 %v2573, %v2575
        %v2577 = vadd.f32 %v2573, %v2576
        %vm2578 = vweird.f32 %v2415
        %vm2579 = vweird.f32 %v2573
        %vm2580 = vmor %vm2578, %vm2579
        %v2581 = vsel %vm2580, %v2573, %v2577
        %v2582 = vand.u32 2147483647, %v2415
        %vm2583 = vcmp.eq.f32.partialorder %v2582, 8.507059e+37
        %v2584 = vand.u32 %v2415, 2147483648
        %v2585 = vor.u32 1.1754944e-38, %v2584
        %v2586 = vsel %vm2583, %v2585, %v2581
        %v2587 = vmul.f32 1.0, %v2586
        %v2588 = vrcp.pop %v2416
        %v2589 = vmul.f32 %v2416, %v2588
        %v2590 = vsub.f32 1.0, %v2589
        %v2591 = vmul.f32 %v2588, %v2590
        %v2592 = vadd.f32 %v2588, %v2591
        %vm2593 = vweird.f32 %v2416
        %vm2594 = vweird.f32 %v2588
        %vm2595 = vmor %vm2593, %vm2594
        %v2596 = vsel %vm2595, %v2588, %v2592
        %v2597 = vand.u32 2147483647, %v2416
        %vm2598 = vcmp.eq.f32.partialorder %v2597, 8.507059e+37
        %v2599 = vand.u32 %v2416, 2147483648
        %v2600 = vor.u32 1.1754944e-38, %v2599
        %v2601 = vsel %vm2598, %v2600, %v2596
        %v2602 = vmul.f32 1.0, %v2601
        %v2603 = vrcp.pop %v2417
        %v2604 = vmul.f32 %v2417, %v2603
        %v2605 = vsub.f32 1.0, %v2604
        %v2606 = vmul.f32 %v2603, %v2605
        %v2607 = vadd.f32 %v2603, %v2606
        %vm2608 = vweird.f32 %v2417
        %vm2609 = vweird.f32 %v2603
        %vm2610 = vmor %vm2608, %vm2609
        %v2611 = vsel %vm2610, %v2603, %v2607
        %v2612 = vand.u32 2147483647, %v2417
        %vm2613 = vcmp.eq.f32.partialorder %v2612, 8.507059e+37
        %v2614 = vand.u32 %v2417, 2147483648
        %v2615 = vor.u32 1.1754944e-38, %v2614
        %v2616 = vsel %vm2613, %v2615, %v2611
        %v2617 = vmul.f32 1.0, %v2616
        %v2618 = vrcp.pop %v2418
        %v2619 = vmul.f32 %v2418, %v2618
        %v2620 = vsub.f32 1.0, %v2619
        %v2621 = vmul.f32 %v2618, %v2620
        %v2622 = vadd.f32 %v2618, %v2621
        %vm2623 = vweird.f32 %v2418
        %vm2624 = vweird.f32 %v2618
        %vm2625 = vmor %vm2623, %vm2624
        %v2626 = vsel %vm2625, %v2618, %v2622
        %v2627 = vand.u32 2147483647, %v2418
        %vm2628 = vcmp.eq.f32.partialorder %v2627, 8.507059e+37
        %v2629 = vand.u32 %v2418, 2147483648
        %v2630 = vor.u32 1.1754944e-38, %v2629
        %v2631 = vsel %vm2628, %v2630, %v2626
        %v2632 = vmul.f32 1.0, %v2631
        %v2633 = vrcp.pop %v2419
        %v2634 = vmul.f32 %v2419, %v2633
        %v2635 = vsub.f32 1.0, %v2634
        %v2636 = vmul.f32 %v2633, %v2635
        %v2637 = vadd.f32 %v2633, %v2636
        %vm2638 = vweird.f32 %v2419
        %vm2639 = vweird.f32 %v2633
        %vm2640 = vmor %vm2638, %vm2639
        %v2641 = vsel %vm2640, %v2633, %v2637
        %v2642 = vand.u32 2147483647, %v2419
        %vm2643 = vcmp.eq.f32.partialorder %v2642, 8.507059e+37
        %v2644 = vand.u32 %v2419, 2147483648
        %v2645 = vor.u32 1.1754944e-38, %v2644
        %v2646 = vsel %vm2643, %v2645, %v2641
        %v2647 = vmul.f32 1.0, %v2646
        %v2648 = vrcp.pop %v2420
        %v2649 = vmul.f32 %v2420, %v2648
        %v2650 = vsub.f32 1.0, %v2649
        %v2651 = vmul.f32 %v2648, %v2650
        %v2652 = vadd.f32 %v2648, %v2651
        %vm2653 = vweird.f32 %v2420
        %vm2654 = vweird.f32 %v2648
        %vm2655 = vmor %vm2653, %vm2654
        %v2656 = vsel %vm2655, %v2648, %v2652
        %v2657 = vand.u32 2147483647, %v2420
        %vm2658 = vcmp.eq.f32.partialorder %v2657, 8.507059e+37
        %v2659 = vand.u32 %v2420, 2147483648
        %v2660 = vor.u32 1.1754944e-38, %v2659
        %v2661 = vsel %vm2658, %v2660, %v2656
        %v2662 = vmul.f32 1.0, %v2661
        %v2663 = vrcp.pop %v2421
        %v2664 = vmul.f32 %v2421, %v2663
        %v2665 = vsub.f32 1.0, %v2664
        %v2666 = vmul.f32 %v2663, %v2665
        %v2667 = vadd.f32 %v2663, %v2666
        %vm2668 = vweird.f32 %v2421
        %vm2669 = vweird.f32 %v2663
        %vm2670 = vmor %vm2668, %vm2669
        %v2671 = vsel %vm2670, %v2663, %v2667
        %v2672 = vand.u32 2147483647, %v2421
        %vm2673 = vcmp.eq.f32.partialorder %v2672, 8.507059e+37
        %v2674 = vand.u32 %v2421, 2147483648
        %v2675 = vor.u32 1.1754944e-38, %v2674
        %v2676 = vsel %vm2673, %v2675, %v2671
        %v2677 = vmul.f32 1.0, %v2676
        %v2678 = vrcp.pop %v2422
        %v2679 = vmul.f32 %v2422, %v2678
        %v2680 = vsub.f32 1.0, %v2679
        %v2681 = vmul.f32 %v2678, %v2680
        %v2682 = vadd.f32 %v2678, %v2681
        %vm2683 = vweird.f32 %v2422
        %vm2684 = vweird.f32 %v2678
        %vm2685 = vmor %vm2683, %vm2684
        %v2686 = vsel %vm2685, %v2678, %v2682
        %v2687 = vand.u32 2147483647, %v2422
        %vm2688 = vcmp.eq.f32.partialorder %v2687, 8.507059e+37
        %v2689 = vand.u32 %v2422, 2147483648
        %v2690 = vor.u32 1.1754944e-38, %v2689
        %v2691 = vsel %vm2688, %v2690, %v2686
        %v2692 = vmul.f32 1.0, %v2691
        %v2693 = vrcp.pop %v2423
        %v2694 = vmul.f32 %v2423, %v2693
        %v2695 = vsub.f32 1.0, %v2694
        %v2696 = vmul.f32 %v2693, %v2695
        %v2697 = vadd.f32 %v2693, %v2696
        %vm2698 = vweird.f32 %v2423
        %vm2699 = vweird.f32 %v2693
        %vm2700 = vmor %vm2698, %vm2699
        %v2701 = vsel %vm2700, %v2693, %v2697
        %v2702 = vand.u32 2147483647, %v2423
        %vm2703 = vcmp.eq.f32.partialorder %v2702, 8.507059e+37
        %v2704 = vand.u32 %v2423, 2147483648
        %v2705 = vor.u32 1.1754944e-38, %v2704
        %v2706 = vsel %vm2703, %v2705, %v2701
        %v2707 = vmul.f32 1.0, %v2706
        %v2708 = vrcp.pop %v2424
        %v2709 = vmul.f32 %v2424, %v2708
        %v2710 = vsub.f32 1.0, %v2709
        %v2711 = vmul.f32 %v2708, %v2710
        %v2712 = vadd.f32 %v2708, %v2711
        %vm2713 = vweird.f32 %v2424
        %vm2714 = vweird.f32 %v2708
        %vm2715 = vmor %vm2713, %vm2714
        %v2716 = vsel %vm2715, %v2708, %v2712
        %v2717 = vand.u32 2147483647, %v2424
        %vm2718 = vcmp.eq.f32.partialorder %v2717, 8.507059e+37
        %v2719 = vand.u32 %v2424, 2147483648
        %v2720 = vor.u32 1.1754944e-38, %v2719
        %v2721 = vsel %vm2718, %v2720, %v2716
        %v2722 = vmul.f32 1.0, %v2721
        %v2723 = vrcp.pop %v2425
        %v2724 = vmul.f32 %v2425, %v2723
        %v2725 = vsub.f32 1.0, %v2724
        %v2726 = vmul.f32 %v2723, %v2725
        %v2727 = vadd.f32 %v2723, %v2726
        %vm2728 = vweird.f32 %v2425
        %vm2729 = vweird.f32 %v2723
        %vm2730 = vmor %vm2728, %vm2729
        %v2731 = vsel %vm2730, %v2723, %v2727
        %v2732 = vand.u32 2147483647, %v2425
        %vm2733 = vcmp.eq.f32.partialorder %v2732, 8.507059e+37
        %v2734 = vand.u32 %v2425, 2147483648
        %v2735 = vor.u32 1.1754944e-38, %v2734
        %v2736 = vsel %vm2733, %v2735, %v2731
        %v2737 = vmul.f32 1.0, %v2736
        %v2738 = vrcp.pop %v2426
        %v2739 = vmul.f32 %v2426, %v2738
        %v2740 = vsub.f32 1.0, %v2739
        %v2741 = vmul.f32 %v2738, %v2740
        %v2742 = vadd.f32 %v2738, %v2741
        %vm2743 = vweird.f32 %v2426
        %vm2744 = vweird.f32 %v2738
        %vm2745 = vmor %vm2743, %vm2744
        %v2746 = vsel %vm2745, %v2738, %v2742
        %v2747 = vand.u32 2147483647, %v2426
        %vm2748 = vcmp.eq.f32.partialorder %v2747, 8.507059e+37
        %v2749 = vand.u32 %v2426, 2147483648
        %v2750 = vor.u32 1.1754944e-38, %v2749
        %v2751 = vsel %vm2748, %v2750, %v2746
        %v2752 = vmul.f32 1.0, %v2751
        %v2753 = vrcp.pop %v2427
        %v2754 = vmul.f32 %v2427, %v2753
        %v2755 = vsub.f32 1.0, %v2754
        %v2756 = vmul.f32 %v2753, %v2755
        %v2757 = vadd.f32 %v2753, %v2756
        %vm2758 = vweird.f32 %v2427
        %vm2759 = vweird.f32 %v2753
        %vm2760 = vmor %vm2758, %vm2759
        %v2761 = vsel %vm2760, %v2753, %v2757
        %v2762 = vand.u32 2147483647, %v2427
        %vm2763 = vcmp.eq.f32.partialorder %v2762, 8.507059e+37
        %v2764 = vand.u32 %v2427, 2147483648
        %v2765 = vor.u32 1.1754944e-38, %v2764
        %v2766 = vsel %vm2763, %v2765, %v2761
        %v2767 = vmul.f32 1.0, %v2766
        %v2768 = vrcp.pop %v2428
        %v2769 = vmul.f32 %v2428, %v2768
        %v2770 = vsub.f32 1.0, %v2769
        %v2771 = vmul.f32 %v2768, %v2770
        %v2772 = vadd.f32 %v2768, %v2771
        %vm2773 = vweird.f32 %v2428
        %vm2774 = vweird.f32 %v2768
        %vm2775 = vmor %vm2773, %vm2774
        %v2776 = vsel %vm2775, %v2768, %v2772
        %v2777 = vand.u32 2147483647, %v2428
        %vm2778 = vcmp.eq.f32.partialorder %v2777, 8.507059e+37
        %v2779 = vand.u32 %v2428, 2147483648
        %v2780 = vor.u32 1.1754944e-38, %v2779
        %v2781 = vsel %vm2778, %v2780, %v2776
        %v2782 = vmul.f32 1.0, %v2781
        %v2783 = vrcp.pop %v2429
        %v2784 = vmul.f32 %v2429, %v2783
        %v2785 = vsub.f32 1.0, %v2784
        %v2786 = vmul.f32 %v2783, %v2785
        %v2787 = vadd.f32 %v2783, %v2786
        %vm2788 = vweird.f32 %v2429
        %vm2789 = vweird.f32 %v2783
        %vm2790 = vmor %vm2788, %vm2789
        %v2791 = vsel %vm2790, %v2783, %v2787
        %v2792 = vand.u32 2147483647, %v2429
        %vm2793 = vcmp.eq.f32.partialorder %v2792, 8.507059e+37
        %v2794 = vand.u32 %v2429, 2147483648
        %v2795 = vor.u32 1.1754944e-38, %v2794
        %v2796 = vsel %vm2793, %v2795, %v2791
        %v2797 = vmul.f32 1.0, %v2796
        %v2798 = vrcp.pop %v2430
        %v2799 = vmul.f32 %v2430, %v2798
        %v2800 = vsub.f32 1.0, %v2799
        %v2801 = vmul.f32 %v2798, %v2800
        %v2802 = vadd.f32 %v2798, %v2801
        %vm2803 = vweird.f32 %v2430
        %vm2804 = vweird.f32 %v2798
        %vm2805 = vmor %vm2803, %vm2804
        %v2806 = vsel %vm2805, %v2798, %v2802
        %v2807 = vand.u32 2147483647, %v2430
        %vm2808 = vcmp.eq.f32.partialorder %v2807, 8.507059e+37
        %v2809 = vand.u32 %v2430, 2147483648
        %v2810 = vor.u32 1.1754944e-38, %v2809
        %v2811 = vsel %vm2808, %v2810, %v2806
        %v2812 = vmul.f32 1.0, %v2811
        %v2813 = vrcp.pop %v2431
        %v2814 = vmul.f32 %v2431, %v2813
        %v2815 = vsub.f32 1.0, %v2814
        %v2816 = vmul.f32 %v2813, %v2815
        %v2817 = vadd.f32 %v2813, %v2816
        %vm2818 = vweird.f32 %v2431
        %vm2819 = vweird.f32 %v2813
        %vm2820 = vmor %vm2818, %vm2819
        %v2821 = vsel %vm2820, %v2813, %v2817
        %v2822 = vand.u32 2147483647, %v2431
        %vm2823 = vcmp.eq.f32.partialorder %v2822, 8.507059e+37
        %v2824 = vand.u32 %v2431, 2147483648
        %v2825 = vor.u32 1.1754944e-38, %v2824
        %v2826 = vsel %vm2823, %v2825, %v2821
        %v2827 = vmul.f32 1.0, %v2826
        %v2828 = vrcp.pop %v2432
        %v2829 = vmul.f32 %v2432, %v2828
        %v2830 = vsub.f32 1.0, %v2829
        %v2831 = vmul.f32 %v2828, %v2830
        %v2832 = vadd.f32 %v2828, %v2831
        %vm2833 = vweird.f32 %v2432
        %vm2834 = vweird.f32 %v2828
        %vm2835 = vmor %vm2833, %vm2834
        %v2836 = vsel %vm2835, %v2828, %v2832
        %v2837 = vand.u32 2147483647, %v2432
        %vm2838 = vcmp.eq.f32.partialorder %v2837, 8.507059e+37
        %v2839 = vand.u32 %v2432, 2147483648
        %v2840 = vor.u32 1.1754944e-38, %v2839
        %v2841 = vsel %vm2838, %v2840, %v2836
        %v2842 = vmul.f32 1.0, %v2841
        %v2843 = vrcp.pop %v2433
        %v2844 = vmul.f32 %v2433, %v2843
        %v2845 = vsub.f32 1.0, %v2844
        %v2846 = vmul.f32 %v2843, %v2845
        %v2847 = vadd.f32 %v2843, %v2846
        %vm2848 = vweird.f32 %v2433
        %vm2849 = vweird.f32 %v2843
        %vm2850 = vmor %vm2848, %vm2849
        %v2851 = vsel %vm2850, %v2843, %v2847
        %v2852 = vand.u32 2147483647, %v2433
        %vm2853 = vcmp.eq.f32.partialorder %v2852, 8.507059e+37
        %v2854 = vand.u32 %v2433, 2147483648
        %v2855 = vor.u32 1.1754944e-38, %v2854
        %v2856 = vsel %vm2853, %v2855, %v2851
        %v2857 = vmul.f32 1.0, %v2856
        %v2858 = vrcp.pop %v2434
        %v2859 = vmul.f32 %v2434, %v2858
        %v2860 = vsub.f32 1.0, %v2859
        %v2861 = vmul.f32 %v2858, %v2860
        %v2862 = vadd.f32 %v2858, %v2861
        %vm2863 = vweird.f32 %v2434
        %vm2864 = vweird.f32 %v2858
        %vm2865 = vmor %vm2863, %vm2864
        %v2866 = vsel %vm2865, %v2858, %v2862
        %v2867 = vand.u32 2147483647, %v2434
        %vm2868 = vcmp.eq.f32.partialorder %v2867, 8.507059e+37
        %v2869 = vand.u32 %v2434, 2147483648
        %v2870 = vor.u32 1.1754944e-38, %v2869
        %v2871 = vsel %vm2868, %v2870, %v2866
        %v2872 = vmul.f32 1.0, %v2871
        %v2873 = vrcp.pop %v2435
        %v2874 = vmul.f32 %v2435, %v2873
        %v2875 = vsub.f32 1.0, %v2874
        %v2876 = vmul.f32 %v2873, %v2875
        %v2877 = vadd.f32 %v2873, %v2876
        %vm2878 = vweird.f32 %v2435
        %vm2879 = vweird.f32 %v2873
        %vm2880 = vmor %vm2878, %vm2879
        %v2881 = vsel %vm2880, %v2873, %v2877
        %v2882 = vand.u32 2147483647, %v2435
        %vm2883 = vcmp.eq.f32.partialorder %v2882, 8.507059e+37
        %v2884 = vand.u32 %v2435, 2147483648
        %v2885 = vor.u32 1.1754944e-38, %v2884
        %v2886 = vsel %vm2883, %v2885, %v2881
        %v2887 = vmul.f32 1.0, %v2886
        %v2888 = vrcp.pop %v2436
        %v2889 = vmul.f32 %v2436, %v2888
        %v2890 = vsub.f32 1.0, %v2889
        %v2891 = vmul.f32 %v2888, %v2890
        %v2892 = vadd.f32 %v2888, %v2891
        %vm2893 = vweird.f32 %v2436
        %vm2894 = vweird.f32 %v2888
        %vm2895 = vmor %vm2893, %vm2894
        %v2896 = vsel %vm2895, %v2888, %v2892
        %v2897 = vand.u32 2147483647, %v2436
        %vm2898 = vcmp.eq.f32.partialorder %v2897, 8.507059e+37
        %v2899 = vand.u32 %v2436, 2147483648
        %v2900 = vor.u32 1.1754944e-38, %v2899
        %v2901 = vsel %vm2898, %v2900, %v2896
        %v2902 = vmul.f32 1.0, %v2901
        %v2903 = vrcp.pop %v2437
        %v2904 = vmul.f32 %v2437, %v2903
        %v2905 = vsub.f32 1.0, %v2904
        %v2906 = vmul.f32 %v2903, %v2905
        %v2907 = vadd.f32 %v2903, %v2906
        %vm2908 = vweird.f32 %v2437
        %vm2909 = vweird.f32 %v2903
        %vm2910 = vmor %vm2908, %vm2909
        %v2911 = vsel %vm2910, %v2903, %v2907
        %v2912 = vand.u32 2147483647, %v2437
        %vm2913 = vcmp.eq.f32.partialorder %v2912, 8.507059e+37
        %v2914 = vand.u32 %v2437, 2147483648
        %v2915 = vor.u32 1.1754944e-38, %v2914
        %v2916 = vsel %vm2913, %v2915, %v2911
        %v2917 = vmul.f32 1.0, %v2916
        %v2918 = vmul.f32 %v2452, %v2098
        %v2919 = vmul.f32 %v2467, %v2100
        %v2920 = vmul.f32 %v2482, %v2103
        %v2921 = vmul.f32 %v2497, %v2105
        %v2922 = vmul.f32 %v2512, %v2108
        %v2923 = vmul.f32 %v2527, %v2110
        %v2924 = vmul.f32 %v2542, %v2113
        %v2925 = vmul.f32 %v2557, %v2115
        %v2926 = vmul.f32 %v2572, %v2118
        %v2927 = vmul.f32 %v2587, %v2120
        %v2928 = vmul.f32 %v2602, %v2123
        %v2929 = vmul.f32 %v2617, %v2125
        %v2930 = vmul.f32 %v2632, %v2128
        %v2931 = vmul.f32 %v2647, %v2130
        %v2932 = vmul.f32 %v2662, %v2133
        %v2933 = vmul.f32 %v2677, %v2135
        %v2934 = vmul.f32 %v2692, %v2138
        %v2935 = vmul.f32 %v2707, %v2140
        %v2936 = vmul.f32 %v2722, %v2143
        %v2937 = vmul.f32 %v2737, %v2145
        %v2938 = vmul.f32 %v2752, %v2148
        %v2939 = vmul.f32 %v2767, %v2150
        %v2940 = vmul.f32 %v2782, %v2153
        %v2941 = vmul.f32 %v2797, %v2155
        %v2942 = vmul.f32 %v2812, %v2158
        %v2943 = vmul.f32 %v2827, %v2160
        %v2944 = vmul.f32 %v2842, %v2163
        %v2945 = vmul.f32 %v2857, %v2165
        %v2946 = vmul.f32 %v2872, %v2168
        %v2947 = vmul.f32 %v2887, %v2170
        %v2948 = vmul.f32 %v2902, %v2173
        %v2949 = vmul.f32 %v2917, %v2175
        %s2950 = scalar_lea.vmem %s5, %s227
        %v2951 = vld [vmem:[%s2950] sm:$0xff]
        %v2952 = vld [vmem:[%s2950 + $0x8] sm:$0xff]
        %v2953 = vld [vmem:[%s2950 + $0x10] sm:$0xff]
        %v2954 = vld [vmem:[%s2950 + $0x18] sm:$0xff]
        %v2955 = vld [vmem:[%s2950 + $0x20] sm:$0xff]
        %v2956 = vld [vmem:[%s2950 + $0x28] sm:$0xff]
        %v2957 = vld [vmem:[%s2950 + $0x30] sm:$0xff]
        %v2958 = vld [vmem:[%s2950 + $0x38] sm:$0xff]
        %v2959 = vld [vmem:[%s2950 + $0x40] sm:$0xff]
        %v2960 = vld [vmem:[%s2950 + $0x48] sm:$0xff]
        %v2961 = vld [vmem:[%s2950 + $0x50] sm:$0xff]
        %v2962 = vld [vmem:[%s2950 + $0x58] sm:$0xff]
        %v2963 = vld [vmem:[%s2950 + $0x60] sm:$0xff]
        %v2964 = vld [vmem:[%s2950 + $0x68] sm:$0xff]
        %v2965 = vld [vmem:[%s2950 + $0x70] sm:$0xff]
        %v2966 = vld [vmem:[%s2950 + $0x78] sm:$0xff]
        %v2967 = vld [vmem:[%s2950 + $0x80] sm:$0xff]
        %v2968 = vld [vmem:[%s2950 + $0x88] sm:$0xff]
        %v2969 = vld [vmem:[%s2950 + $0x90] sm:$0xff]
        %v2970 = vld [vmem:[%s2950 + $0x98] sm:$0xff]
        %v2971 = vld [vmem:[%s2950 + $0xa0] sm:$0xff]
        %v2972 = vld [vmem:[%s2950 + $0xa8] sm:$0xff]
        %v2973 = vld [vmem:[%s2950 + $0xb0] sm:$0xff]
        %v2974 = vld [vmem:[%s2950 + $0xb8] sm:$0xff]
        %v2975 = vld [vmem:[%s2950 + $0xc0] sm:$0xff]
        %v2976 = vld [vmem:[%s2950 + $0xc8] sm:$0xff]
        %v2977 = vld [vmem:[%s2950 + $0xd0] sm:$0xff]
        %v2978 = vld [vmem:[%s2950 + $0xd8] sm:$0xff]
        %v2979 = vld [vmem:[%s2950 + $0xe0] sm:$0xff]
        %v2980 = vld [vmem:[%s2950 + $0xe8] sm:$0xff]
        %v2981 = vld [vmem:[%s2950 + $0xf0] sm:$0xff]
        %v2982 = vld [vmem:[%s2950 + $0xf8] sm:$0xff]
        %v2983 = vadd.f32 %v2951, %v2918
        %v2984 = vadd.f32 %v2952, %v2919
        %v2985 = vadd.f32 %v2953, %v2920
        %v2986 = vadd.f32 %v2954, %v2921
        %v2987 = vadd.f32 %v2955, %v2922
        %v2988 = vadd.f32 %v2956, %v2923
        %v2989 = vadd.f32 %v2957, %v2924
        %v2990 = vadd.f32 %v2958, %v2925
        %v2991 = vadd.f32 %v2959, %v2926
        %v2992 = vadd.f32 %v2960, %v2927
        %v2993 = vadd.f32 %v2961, %v2928
        %v2994 = vadd.f32 %v2962, %v2929
        %v2995 = vadd.f32 %v2963, %v2930
        %v2996 = vadd.f32 %v2964, %v2931
        %v2997 = vadd.f32 %v2965, %v2932
        %v2998 = vadd.f32 %v2966, %v2933
        %v2999 = vadd.f32 %v2967, %v2934
        %v3000 = vadd.f32 %v2968, %v2935
        %v3001 = vadd.f32 %v2969, %v2936
        %v3002 = vadd.f32 %v2970, %v2937
        %v3003 = vadd.f32 %v2971, %v2938
        %v3004 = vadd.f32 %v2972, %v2939
        %v3005 = vadd.f32 %v2973, %v2940
        %v3006 = vadd.f32 %v2974, %v2941
        %v3007 = vadd.f32 %v2975, %v2942
        %v3008 = vadd.f32 %v2976, %v2943
        %v3009 = vadd.f32 %v2977, %v2944
        %v3010 = vadd.f32 %v2978, %v2945
        %v3011 = vadd.f32 %v2979, %v2946
        %v3012 = vadd.f32 %v2980, %v2947
        %v3013 = vadd.f32 %v2981, %v2948
        %v3014 = vadd.f32 %v2982, %v2949
        %3015 = vst.msk [vmem:[%s2950] sm:$0xff] %vm2213, %v2983
        %3016 = vst.msk [vmem:[%s2950 + $0x8] sm:$0xff] %vm2213, %v2984
        %3017 = vst.msk [vmem:[%s2950 + $0x10] sm:$0xff] %vm2213, %v2985
        %3018 = vst.msk [vmem:[%s2950 + $0x18] sm:$0xff] %vm2213, %v2986
        %3019 = vst.msk [vmem:[%s2950 + $0x20] sm:$0xff] %vm2213, %v2987
        %3020 = vst.msk [vmem:[%s2950 + $0x28] sm:$0xff] %vm2213, %v2988
        %3021 = vst.msk [vmem:[%s2950 + $0x30] sm:$0xff] %vm2213, %v2989
        %3022 = vst.msk [vmem:[%s2950 + $0x38] sm:$0xff] %vm2213, %v2990
        %3023 = vst.msk [vmem:[%s2950 + $0x40] sm:$0xff] %vm2213, %v2991
        %3024 = vst.msk [vmem:[%s2950 + $0x48] sm:$0xff] %vm2213, %v2992
        %3025 = vst.msk [vmem:[%s2950 + $0x50] sm:$0xff] %vm2213, %v2993
        %3026 = vst.msk [vmem:[%s2950 + $0x58] sm:$0xff] %vm2213, %v2994
        %3027 = vst.msk [vmem:[%s2950 + $0x60] sm:$0xff] %vm2213, %v2995
        %3028 = vst.msk [vmem:[%s2950 + $0x68] sm:$0xff] %vm2213, %v2996
        %3029 = vst.msk [vmem:[%s2950 + $0x70] sm:$0xff] %vm2213, %v2997
        %3030 = vst.msk [vmem:[%s2950 + $0x78] sm:$0xff] %vm2213, %v2998
        %3031 = vst.msk [vmem:[%s2950 + $0x80] sm:$0xff] %vm2213, %v2999
        %3032 = vst.msk [vmem:[%s2950 + $0x88] sm:$0xff] %vm2213, %v3000
        %3033 = vst.msk [vmem:[%s2950 + $0x90] sm:$0xff] %vm2213, %v3001
        %3034 = vst.msk [vmem:[%s2950 + $0x98] sm:$0xff] %vm2213, %v3002
        %3035 = vst.msk [vmem:[%s2950 + $0xa0] sm:$0xff] %vm2213, %v3003
        %3036 = vst.msk [vmem:[%s2950 + $0xa8] sm:$0xff] %vm2213, %v3004
        %3037 = vst.msk [vmem:[%s2950 + $0xb0] sm:$0xff] %vm2213, %v3005
        %3038 = vst.msk [vmem:[%s2950 + $0xb8] sm:$0xff] %vm2213, %v3006
        %3039 = vst.msk [vmem:[%s2950 + $0xc0] sm:$0xff] %vm2213, %v3007
        %3040 = vst.msk [vmem:[%s2950 + $0xc8] sm:$0xff] %vm2213, %v3008
        %3041 = vst.msk [vmem:[%s2950 + $0xd0] sm:$0xff] %vm2213, %v3009
        %3042 = vst.msk [vmem:[%s2950 + $0xd8] sm:$0xff] %vm2213, %v3010
        %3043 = vst.msk [vmem:[%s2950 + $0xe0] sm:$0xff] %vm2213, %v3011
        %3044 = vst.msk [vmem:[%s2950 + $0xe8] sm:$0xff] %vm2213, %v3012
        %3045 = vst.msk [vmem:[%s2950 + $0xf0] sm:$0xff] %vm2213, %v3013
        %3046 = vst.msk [vmem:[%s2950 + $0xf8] sm:$0xff] %vm2213, %v3014
        %s3047 = smul.u32 %s1667, 256
        %s3048 = sadd.s32 %s3047, %s227
        %v3049 = vpack.c.bf16 %v2098, %v2098
        %v3050 = vpack.c.bf16 %v2100, %v2100
        %v3051 = vpack.c.bf16 %v2103, %v2103
        %v3052 = vpack.c.bf16 %v2105, %v2105
        %v3053 = vpack.c.bf16 %v2108, %v2108
        %v3054 = vpack.c.bf16 %v2110, %v2110
        %v3055 = vpack.c.bf16 %v2113, %v2113
        %v3056 = vpack.c.bf16 %v2115, %v2115
        %v3057 = vpack.c.bf16 %v2118, %v2118
        %v3058 = vpack.c.bf16 %v2120, %v2120
        %v3059 = vpack.c.bf16 %v2123, %v2123
        %v3060 = vpack.c.bf16 %v2125, %v2125
        %v3061 = vpack.c.bf16 %v2128, %v2128
        %v3062 = vpack.c.bf16 %v2130, %v2130
        %v3063 = vpack.c.bf16 %v2133, %v2133
        %v3064 = vpack.c.bf16 %v2135, %v2135
        %v3065 = vpack.c.bf16 %v2138, %v2138
        %v3066 = vpack.c.bf16 %v2140, %v2140
        %v3067 = vpack.c.bf16 %v2143, %v2143
        %v3068 = vpack.c.bf16 %v2145, %v2145
        %v3069 = vpack.c.bf16 %v2148, %v2148
        %v3070 = vpack.c.bf16 %v2150, %v2150
        %v3071 = vpack.c.bf16 %v2153, %v2153
        %v3072 = vpack.c.bf16 %v2155, %v2155
        %v3073 = vpack.c.bf16 %v2158, %v2158
        %v3074 = vpack.c.bf16 %v2160, %v2160
        %v3075 = vpack.c.bf16 %v2163, %v2163
        %v3076 = vpack.c.bf16 %v2165, %v2165
        %v3077 = vpack.c.bf16 %v2168, %v2168
        %v3078 = vpack.c.bf16 %v2170, %v2170
        %v3079 = vpack.c.bf16 %v2173, %v2173
        %v3080 = vpack.c.bf16 %v2175, %v2175
        %s3081 = sshra.s32 %s3048, 3
        %s3082 = sand.u32 %s3048, 7
        %s3083 = smul.addr %s3081, 4
        %s3084 = scalar_lea.vmem [#allocation2], %s3083
        %vm3085 = vcmask 125952
        %3086 = vst.msk [vmem:[%s3084] sm:$0xf] %vm3085, %v3049
        %3087 = vst.msk [vmem:[%s3084 + $0x4] sm:$0xf] %vm3085, %v3050
        %3088 = vst.msk [vmem:[%s3084 + $0x8] sm:$0xf] %vm3085, %v3051
        %3089 = vst.msk [vmem:[%s3084 + $0xc] sm:$0xf] %vm3085, %v3052
        %3090 = vst.msk [vmem:[%s3084 + $0x10] sm:$0xf] %vm3085, %v3053
        %3091 = vst.msk [vmem:[%s3084 + $0x14] sm:$0xf] %vm3085, %v3054
        %3092 = vst.msk [vmem:[%s3084 + $0x18] sm:$0xf] %vm3085, %v3055
        %3093 = vst.msk [vmem:[%s3084 + $0x1c] sm:$0xf] %vm3085, %v3056
        %3094 = vst.msk [vmem:[%s3084 + $0x20] sm:$0xf] %vm3085, %v3057
        %3095 = vst.msk [vmem:[%s3084 + $0x24] sm:$0xf] %vm3085, %v3058
        %3096 = vst.msk [vmem:[%s3084 + $0x28] sm:$0xf] %vm3085, %v3059
        %3097 = vst.msk [vmem:[%s3084 + $0x2c] sm:$0xf] %vm3085, %v3060
        %3098 = vst.msk [vmem:[%s3084 + $0x30] sm:$0xf] %vm3085, %v3061
        %3099 = vst.msk [vmem:[%s3084 + $0x34] sm:$0xf] %vm3085, %v3062
        %3100 = vst.msk [vmem:[%s3084 + $0x38] sm:$0xf] %vm3085, %v3063
        %3101 = vst.msk [vmem:[%s3084 + $0x3c] sm:$0xf] %vm3085, %v3064
        %3102 = vst.msk [vmem:[%s3084 + $0x40] sm:$0xf] %vm3085, %v3065
        %3103 = vst.msk [vmem:[%s3084 + $0x44] sm:$0xf] %vm3085, %v3066
        %3104 = vst.msk [vmem:[%s3084 + $0x48] sm:$0xf] %vm3085, %v3067
        %3105 = vst.msk [vmem:[%s3084 + $0x4c] sm:$0xf] %vm3085, %v3068
        %3106 = vst.msk [vmem:[%s3084 + $0x50] sm:$0xf] %vm3085, %v3069
        %3107 = vst.msk [vmem:[%s3084 + $0x54] sm:$0xf] %vm3085, %v3070
        %3108 = vst.msk [vmem:[%s3084 + $0x58] sm:$0xf] %vm3085, %v3071
        %3109 = vst.msk [vmem:[%s3084 + $0x5c] sm:$0xf] %vm3085, %v3072
        %3110 = vst.msk [vmem:[%s3084 + $0x60] sm:$0xf] %vm3085, %v3073
        %3111 = vst.msk [vmem:[%s3084 + $0x64] sm:$0xf] %vm3085, %v3074
        %3112 = vst.msk [vmem:[%s3084 + $0x68] sm:$0xf] %vm3085, %v3075
        %3113 = vst.msk [vmem:[%s3084 + $0x6c] sm:$0xf] %vm3085, %v3076
        %3114 = vst.msk [vmem:[%s3084 + $0x70] sm:$0xf] %vm3085, %v3077
        %3115 = vst.msk [vmem:[%s3084 + $0x74] sm:$0xf] %vm3085, %v3078
        %3116 = vst.msk [vmem:[%s3084 + $0x78] sm:$0xf] %vm3085, %v3079
        %3117 = vst.msk [vmem:[%s3084 + $0x7c] sm:$0xf] %vm3085, %v3080
      $region56: #{tpu_custom_call.1} parent=35 // pred_fallthru
        _
      // Predicated region
      $region57: #{tpu_custom_call.1} parent=35 // pred_check
        %p3118 = pneg %p138
      $region58: #{tpu_custom_call.1} parent=35 // pred_check_branch
        %3120 = sbr.rel (%p3118) target = $region60
      $region59: #{tpu_custom_call.1} parent=35 // pred_region
        _
      $region60: #{tpu_custom_call.1} parent=35 // pred_fallthru
        _
      // Predicated region
      $region61: #{tpu_custom_call.1} parent=35 // pred_check
        %p3121 = pneg %p138
      $region62: #{tpu_custom_call.1} parent=35 // pred_check_branch
        %3123 = sbr.rel (%p3121) target = $region64
      $region63: #{tpu_custom_call.1} parent=35 // pred_region
        _
      $region64: #{tpu_custom_call.1} parent=35 // pred_fallthru
        _
    $region36: #{tpu_custom_call.1} parent=5 // pred_fallthru
      _
    %p3124 = scmp.le.s32.totalorder 2, %s11
    // Predicated region
    $region65: #{tpu_custom_call.1} parent=5 // pred_check
      %p3125 = pneg %p3124
    $region66: #{tpu_custom_call.1} parent=5 // pred_check_branch
      %3127 = sbr.rel (%p3125) target = $region68
    $region67: #{tpu_custom_call.1} parent=5 // pred_region
      %s3128 = ssub.s32 %s11, 2
    $region68: #{tpu_custom_call.1} parent=5 // pred_fallthru
      _
  $region6: #{tpu_custom_call.1} parent=0 // loop_footer
    %s15 = sadd.s32 1, %s11
  $region7: #{tpu_custom_call.1} parent=0 // loop_footer_branch
    %10 = sbr.rel target = $region3
  $region8: #{tpu_custom_call.1} parent=0 // loop_exit
    _
  %3129 = vsyncmov [#allocation4]
  %s3130 = vpop.sfrf %3129
  %p3131 = scmp.eq.s32.totalorder %s3130, 0
  %p3132 = pneg %p3131
  %3134 = shalt.err (%p3132)

</llo_original>
